<compile_context>
chip_gen: v7x
topology: tpu7x:2x2x1
jax: 0.10.0
libtpu: 0.0.40
codegen_flags: <defaults>
</compile_context>

<pallas_src>
import jax
import jax.numpy as jnp
from jax import lax
from jax.experimental import pallas as pl
from jax.experimental.pallas import tpu as pltpu

KSIZE = 5
PAD = 2
LANE = 128
MIB = 1024 * 1024


def _round_up(x, m):
    return ((x + m - 1) // m) * m


def _vmem_capacity_bytes():
    """Physical VMEM of the local chip (generation-aware), safe fallback."""
    try:
        info = pltpu.get_tpu_info()
        cap = int(getattr(info, "vmem_capacity_bytes", 0) or 0)
        if cap > 0:
            return cap
    except Exception:
        pass
    return 64 * MIB          # conservative: v7x per-TensorCore VMEM


def _tile_vmem_bytes(tile_h, halo, wp, c_in, c_out_p, in_bytes):
    """Approx VMEM working set of one grid step: double-buffered pipeline
    blocks + accumulator scratch + in-kernel im2col temporaries, with lane
    padding of the (pixels, Cin) buffers accounted for."""
    rows = tile_h * wp
    cin_l = _round_up(max(c_in, 1), LANE)      # lane footprint of streamed input
    k_l = _round_up(KSIZE * c_in, LANE)        # lane footprint of per-kh im2col slab
    body = 2 * rows * cin_l * in_bytes
    halo_b = 2 * halo * wp * cin_l * in_bytes
    wgt = 2 * KSIZE * _round_up(KSIZE * c_in, 16) * c_out_p * in_bytes
    outb = 2 * rows * c_out_p * 4
    acc = rows * c_out_p * 4
    tmp = (rows + halo * wp) * cin_l * in_bytes + rows * k_l * in_bytes
    return body + halo_b + wgt + outb + acc + tmp


def _pick_tile_h(H, halo, wp, c_in, c_out_p, in_bytes, budget):
    """Largest halo-aligned row tile whose working set fits the VMEM budget."""
    max_h = _round_up(max(H, halo), halo)
    best = halo
    t = halo
    while t <= max_h:
        if _tile_vmem_bytes(t, halo, wp, c_in, c_out_p, in_bytes) <= budget:
            best = t
            t += halo
        else:
            break
    return best


def _make_conv_kernel(tile_h, halo, wp, c_in, c_out_p):
    rows = tile_h * wp

    def kernel(x_ref, halo_ref, w_ref, b_ref, o_ref, acc_ref):
        # x_ref:    (tile_h*Wp, Cin)   body pixel-rows of the padded image
        # halo_ref: (halo*Wp,   Cin)   bottom halo pixel-rows
        # w_ref:    (5, 5*Cin, Cout_p) BN-folded weights (resident)
        # b_ref:    (1, Cout_p)        BN-folded bias (f32, resident)
        # o_ref:    (tile_h*Wp, Cout_p)
        # acc_ref:  VMEM scratch (tile_h*Wp, Cout_p) f32 accumulator
        x = jnp.concatenate([x_ref[...], halo_ref[...]], axis=0)
        acc_ref[...] = jnp.broadcast_to(b_ref[...], (rows, c_out_p))
        for kh in range(KSIZE):
            base = kh * wp
            # im2col slab for this kh: lhs[p, kw*Cin + ci] = x[p + kh*Wp + kw, ci]
            # (contiguous sublane slices of the pixel-flat tile, concatenated
            # on the lane axis) -> one MXU dot with K = 5*Cin per kh.
            lhs = jnp.concatenate(
                [x[base + kw: base + kw + rows, :] for kw in range(KSIZE)],
                axis=1)
            acc_ref[...] += jnp.dot(lhs, w_ref[kh],
                                    preferred_element_type=jnp.float32)
        o_ref[...] = acc_ref[...].astype(o_ref.dtype)

    return kernel


def conv5x5_bn_pallas_nhwc(x_nhwc, w_oihw, b_o, gamma, beta, run_mean, run_var,
                           eps=1e-5, tile_h=None, compute_dtype=jnp.bfloat16,
                           out_dtype=jnp.float32):
    """Fused 5x5 conv (stride 1, pad 2) + eval-mode BatchNorm, NHWC in/out."""
    N, H, W, Cin = x_nhwc.shape
    Cout = w_oihw.shape[0]
    Cout_p = _round_up(Cout, LANE)               # lane-dense output channels
    in_bytes = jnp.dtype(compute_dtype).itemsize

    # --- fold BN (inference mode) into conv weight / bias (tiny JAX glue) ---
    scale = gamma / jnp.sqrt(run_var + eps)
    w_fold = w_oihw * scale[:, None, None, None]          # (Cout, Cin, 5, 5)
    b_fold = (b_o - run_mean) * scale + beta               # (Cout,)

    # Weight layout (kh, kw*Cin + ci, co): 5 dots with K = 5*Cin.
    w_k = jnp.transpose(w_fold, (2, 3, 1, 0)).reshape(KSIZE, KSIZE * Cin, Cout)
    w_k = jnp.pad(w_k, ((0, 0), (0, 0), (0, Cout_p - Cout))).astype(compute_dtype)
    b_k = jnp.pad(b_fold.reshape(1, Cout),
                  ((0, 0), (0, Cout_p - Cout))).astype(jnp.float32)

    # --- row tiling from a generation-aware VMEM budget ---------------------
    halo = 16 if in_bytes < 4 else 8             # sublane-pack-aligned halo rows
    Wp = W + 2 * PAD
    cap = _vmem_capacity_bytes()
    vmem_limit = min(max(cap - 24 * MIB, 32 * MIB), 100 * MIB)
    budget = int(vmem_limit * 0.7)
    if tile_h is None:
        tile_h = _pick_tile_h(H, halo, Wp, Cin, Cout_p, in_bytes, budget)
    tile_h = max(halo, (int(tile_h) // halo) * halo)
    tile_h = min(tile_h, _round_up(H, halo))
    n_h = pl.cdiv(H, tile_h)
    out_rows = n_h * tile_h

    # Spatial zero padding: 2 rows/cols each side plus extra bottom rows so the
    # last tile's `halo`-row bottom block stays in range; then flatten
    # (rows, cols) into one pixel axis so every conv tap is a contiguous
    # sublane slice and channels stay dense on the lane axis.
    Hp = out_rows + halo
    xp = jnp.pad(x_nhwc, ((0, 0), (PAD, Hp - H - PAD), (PAD, PAD), (0, 0)))
    xp = xp.astype(compute_dtype).reshape(N, Hp * Wp, Cin)

    kernel = _make_conv_kernel(tile_h, halo, Wp, Cin, Cout_p)
    rows = tile_h * Wp

    flops = 2 * N * out_rows * Wp * KSIZE * KSIZE * Cin * Cout_p
    bytes_accessed = int(N * Hp * Wp * Cin * in_bytes
                         + N * n_h * halo * Wp * Cin * in_bytes   # halo re-reads
                         + w_k.size * in_bytes + b_k.size * 4
                         + N * out_rows * Wp * Cout_p * jnp.dtype(out_dtype).itemsize)

    # Grid is (N, n_h), both parallel; for megacore (v7x) this gives >= 2
    # shardable steps whenever N*n_h >= 2.
    out = pl.pallas_call(
        kernel,
        out_shape=jax.ShapeDtypeStruct((N, out_rows * Wp, Cout_p), out_dtype),
        grid_spec=pltpu.PrefetchScalarGridSpec(
            num_scalar_prefetch=0,
            grid=(N, n_h),
            in_specs=[
                # body: pixel rows [i*tile_h*Wp, (i+1)*tile_h*Wp)
                pl.BlockSpec((None, rows, Cin), lambda n, i: (n, i, 0)),
                # bottom halo: pixel rows [(i+1)*tile_h*Wp, ((i+1)*tile_h+halo)*Wp)
                pl.BlockSpec((None, halo * Wp, Cin),
                             lambda n, i: (n, (i + 1) * (tile_h // halo), 0)),
                # BN-folded weights / bias, resident across the whole grid.
                # TODO(synk): pipeline_mode=pl.Buffered(1) would single-buffer
                # these constant blocks, and for Cin~512 a K grid axis
                # (pl.when-initialized accumulator) is needed to fit v7x VMEM.
                pl.BlockSpec((KSIZE, KSIZE * Cin, Cout_p), lambda n, i: (0, 0, 0)),
                pl.BlockSpec((1, Cout_p), lambda n, i: (0, 0)),
            ],
            out_specs=pl.BlockSpec((None, rows, Cout_p), lambda n, i: (n, i, 0)),
            scratch_shapes=[pltpu.VMEM((rows, Cout_p), jnp.float32)],
        ),
        compiler_params=pltpu.CompilerParams(
            dimension_semantics=("parallel", "parallel"),
            vmem_limit_bytes=int(vmem_limit)),
        cost_estimate=pl.CostEstimate(flops=flops, transcendentals=0,
                                      bytes_accessed=bytes_accessed),
    )(xp, xp, w_k, b_k)   # same padded input passed twice (body + halo views)

    # Undo pixel flattening; drop padded columns / rows / channels (NHWC out).
    # TODO(synk): for n_classes-sized heads on v5e, an unpadded / bf16 output
    # block would cut the writeback bytes further.
    out = out.reshape(N, out_rows, Wp, Cout_p)
    return out[:, :H, :W, :Cout]


def max_unpool_2x2_nhwc(x_nchw, indices, out_hw):
    """nn.MaxUnpool2d(2,2) semantics, built without scatter; emits NHWC.

    Assumes `indices` are valid MaxPool2d(2,2, return_indices=True) indices,
    i.e. each flat index lies inside its own 2x2 window of the output plane.
    """
    N, C, h, w = x_nchw.shape
    H, W = out_hw
    idt = indices.dtype
    ii = jnp.arange(h, dtype=idt)[:, None]
    jj = jnp.arange(w, dtype=idt)[None, :]
    base = (2 * ii) * W + 2 * jj                        # flat idx of window TL
    local = indices - base[None, None]                  # in {0, 1, W, W+1}
    r_h = local // W                                    # 0 or 1
    r_w = local - r_h * W                               # 0 or 1

    vals = jnp.transpose(x_nchw, (0, 2, 3, 1))          # (N,h,w,C)
    r_h = jnp.transpose(r_h, (0, 2, 3, 1))
    r_w = jnp.transpose(r_w, (0, 2, 3, 1))
    two = jnp.arange(2, dtype=idt)
    oh_h = (r_h[..., None] == two).astype(vals.dtype)   # (N,h,w,C,2)
    oh_w = (r_w[..., None] == two).astype(vals.dtype)   # (N,h,w,C,2)
    out = vals[..., None, None] * oh_h[..., :, None] * oh_w[..., None, :]
    out = jnp.transpose(out, (0, 1, 4, 2, 5, 3)).reshape(N, 2 * h, 2 * w, C)
    if (H, W) != (2 * h, 2 * w):
        out = jnp.pad(out, ((0, 0), (0, H - 2 * h), (0, W - 2 * w), (0, 0)))
    return out


class SegNetUp1Pallas:
    """JAX/Pallas port of SegNetUp1 (unpool -> conv5x5 -> BN, with_relu=False)."""

    def __init__(self, in_size, out_size, key):
        k0, k1, k2, k3, k4, k5 = jax.random.split(key, 6)
        fan_in = in_size * KSIZE * KSIZE
        bound = 1.0 / float(jnp.sqrt(fan_in))
        # Conv2d(in_size, out_size, 5, stride=1, padding=2, bias=True)
        self.w = jax.random.uniform(k0, (out_size, in_size, KSIZE, KSIZE),
                                    jnp.float32, -bound, bound)
        self.b = jax.random.uniform(k1, (out_size,), jnp.float32, -bound, bound)
        # BatchNorm2d(out_size) params + running stats (deterministic synthetic)
        self.gamma = 1.0 + 0.1 * jax.random.normal(k2, (out_size,), jnp.float32)
        self.beta = 0.1 * jax.random.normal(k3, (out_size,), jnp.float32)
        self.run_mean = 0.1 * jax.random.normal(k4, (out_size,), jnp.float32)
        self.run_var = 1.0 + 0.1 * jax.random.uniform(k5, (out_size,), jnp.float32)
        self.eps = 1e-5

    def __call__(self, inputs, indices, output_shape, skip_unpool=False,
                 tile_h=None, compute_dtype=jnp.bfloat16):
        N, C, H, W = output_shape
        if skip_unpool:
            # Matches the original module: the *pooled* tensor is fed to the conv.
            outputs = jnp.transpose(inputs, (0, 2, 3, 1))
        else:
            outputs = max_unpool_2x2_nhwc(inputs, indices, (H, W))
        # TODO(synk): BatchNorm is inference-mode only (running stats folded
        # into the conv); training-mode batch statistics are not computed.
        out_nhwc = conv5x5_bn_pallas_nhwc(outputs, self.w, self.b, self.gamma,
                                          self.beta, self.run_mean, self.run_var,
                                          self.eps, tile_h=tile_h,
                                          compute_dtype=compute_dtype)
        return jnp.transpose(out_nhwc, (0, 3, 1, 2))    # NCHW at module boundary


def _reference_segnetup1(model, inputs, indices, output_shape, compute_dtype,
                         skip_unpool=False):
    """Pure-JAX reference: scatter unpool + lax conv (BN folded)."""
    N, C, H, W = output_shape
    if skip_unpool:
        unpooled = inputs
    else:
        flat = jnp.zeros((N, C, H * W), jnp.float32)
        n_idx = jnp.arange(N)[:, None, None, None]
        c_idx = jnp.arange(C)[None, :, None, None]
        unpooled = flat.at[n_idx, c_idx, indices].set(inputs).reshape(N, C, H, W)
    scale = model.gamma / jnp.sqrt(model.run_var + model.eps)
    w_fold = (model.w * scale[:, None, None, None]).astype(compute_dtype)
    b_fold = (model.b - model.run_mean) * scale + model.beta
    out = lax.conv_general_dilated(
        unpooled.astype(compute_dtype), w_fold, window_strides=(1, 1),
        padding=((PAD, PAD), (PAD, PAD)),
        dimension_numbers=("NCHW", "OIHW", "NCHW"),
        preferred_element_type=jnp.float32,
        precision=lax.Precision.HIGHEST)
    return out + b_fold[None, :, None, None]


def _make_pool_indices(key, N, C, h, w, W):
    """Valid MaxPool2d(2,2, return_indices=True) indices (one per 2x2 window)."""
    r = jax.random.randint(key, (N, C, h, w), 0, 4)
    ii = jnp.arange(h)[:, None]
    jj = jnp.arange(w)[None, :]
    base = (2 * ii) * W + 2 * jj
    return (base[None, None] + (r // 2) * W + (r % 2)).astype(jnp.int32)


if __name__ == "__main__":
    key = jax.random.PRNGKey(0)
    k_in, k_idx, k_mod, k_in2, k_idx2 = jax.random.split(key, 5)

    N, Cin, Cout = 2, 4, 8
    model = SegNetUp1Pallas(Cin, Cout, k_mod)

    # --- Test 1: default bf16 compute path (single row tile per image) ------
    h, w = 8, 8
    H, W = 2 * h, 2 * w                       # 16 x 16 unpooled
    inputs = jax.random.normal(k_in, (N, Cin, h, w), jnp.float32)
    indices = _make_pool_indices(k_idx, N, Cin, h, w, W)

    out = model(inputs, indices, (N, Cin, H, W))
    out = jax.block_until_ready(out)
    assert out.shape == (N, Cout, H, W)
    ref = _reference_segnetup1(model, inputs, indices, (N, Cin, H, W),
                               jnp.bfloat16)
    assert jnp.allclose(out, ref, atol=2e-2, rtol=2e-2), "bf16 path mismatch"

    # --- Test 2: f32 path, multi-tile grid with H % tile_h != 0 -------------
    h2, w2 = 10, 6
    H2, W2 = 2 * h2, 2 * w2                   # 20 x 12 unpooled
    inputs2 = jax.random.normal(k_in2, (N, Cin, h2, w2), jnp.float32)
    indices2 = _make_pool_indices(k_idx2, N, Cin, h2, w2, W2)

    out2 = model(inputs2, indices2, (N, Cin, H2, W2),
                 tile_h=8, compute_dtype=jnp.float32)
    out2 = jax.block_until_ready(out2)
    assert out2.shape == (N, Cout, H2, W2)
    ref2 = _reference_segnetup1(model, inputs2, indices2, (N, Cin, H2, W2),
                                jnp.float32)
    assert jnp.allclose(out2, ref2, atol=1e-4, rtol=1e-4), "f32 path mismatch"

    print("KERNEL_OK")
</pallas_src>

<mosaic_0001>
module attributes {stable_mosaic.version = 11 : i64} {
  func.func @kernel(%arg0: i32, %arg1: i32, %arg2: memref<1x320x4xbf16, #tpu.memory_space<vmem>>, %arg3: memref<1x320x4xbf16, #tpu.memory_space<vmem>>, %arg4: memref<5x20x128xbf16, #tpu.memory_space<vmem>>, %arg5: memref<1x128xf32, #tpu.memory_space<vmem>>, %arg6: memref<1x320x128xf32, #tpu.memory_space<vmem>>, %arg7: memref<320x128xf32, #tpu.memory_space<vmem>>) attributes {dimension_semantics = [#tpu.dimension_semantics<parallel>, #tpu.dimension_semantics<parallel>], iteration_bounds = array<i64: 2, 1>, scalar_prefetch = 0 : i64, scratch_operands = 1 : i64, tpu.core_type = #tpu.core_type<tc>, window_params = [{transform_indices = @transform_0, window_bounds = array<i64: 1, 320, 4>}, {transform_indices = @transform_1, window_bounds = array<i64: 1, 320, 4>}, {pipeline_mode = #tpu.pipeline_mode<synchronous>, transform_indices = @transform_2, window_bounds = array<i64: 5, 20, 128>}, {pipeline_mode = #tpu.pipeline_mode<synchronous>, transform_indices = @transform_3, window_bounds = array<i64: 1, 128>}, {transform_indices = @transform_4, window_bounds = array<i64: 1, 320, 128>}]} {
    %c0 = arith.constant 0 : index
    %c0_0 = arith.constant 0 : index
    %c0_1 = arith.constant 0 : index
    %0 = vector.load %arg2[%c0, %c0_0, %c0_1] : memref<1x320x4xbf16, #tpu.memory_space<vmem>>, vector<1x320x4xbf16>
    %1 = vector.shape_cast %0 : vector<1x320x4xbf16> to vector<320x4xbf16>
    %c0_2 = arith.constant 0 : index
    %c0_3 = arith.constant 0 : index
    %c0_4 = arith.constant 0 : index
    %2 = vector.load %arg3[%c0_2, %c0_3, %c0_4] : memref<1x320x4xbf16, #tpu.memory_space<vmem>>, vector<1x320x4xbf16>
    %3 = vector.shape_cast %2 : vector<1x320x4xbf16> to vector<320x4xbf16>
    %4 = tpu.concatenate %1, %3 in 0 : vector<320x4xbf16>, vector<320x4xbf16> -> vector<640x4xbf16>
    %c0_5 = arith.constant 0 : index
    %c0_6 = arith.constant 0 : index
    %5 = vector.load %arg5[%c0_5, %c0_6] : memref<1x128xf32, #tpu.memory_space<vmem>>, vector<1x128xf32>
    %6 = vector.shape_cast %5 : vector<1x128xf32> to vector<1x128xf32>
    %7 = vector.broadcast %6 : vector<1x128xf32> to vector<320x128xf32>
    %c0_7 = arith.constant 0 : index
    %c0_8 = arith.constant 0 : index
    %8 = vector.load %arg7[%c0_7, %c0_8] : memref<320x128xf32, #tpu.memory_space<vmem>>, vector<320x128xf32>
    tpu.vector_store %arg7[%c0_7, %c0_8], %7 {strides = array<i32>} : memref<320x128xf32, #tpu.memory_space<vmem>>, vector<320x128xf32>,
    %9 = vector.extract_strided_slice %4 {offsets = [0, 0], sizes = [320, 4], strides = [1, 1]} : vector<640x4xbf16> to vector<320x4xbf16>
    %10 = vector.extract_strided_slice %4 {offsets = [1, 0], sizes = [320, 4], strides = [1, 1]} : vector<640x4xbf16> to vector<320x4xbf16>
    %11 = vector.extract_strided_slice %4 {offsets = [2, 0], sizes = [320, 4], strides = [1, 1]} : vector<640x4xbf16> to vector<320x4xbf16>
    %12 = vector.extract_strided_slice %4 {offsets = [3, 0], sizes = [320, 4], strides = [1, 1]} : vector<640x4xbf16> to vector<320x4xbf16>
    %13 = vector.extract_strided_slice %4 {offsets = [4, 0], sizes = [320, 4], strides = [1, 1]} : vector<640x4xbf16> to vector<320x4xbf16>
    %14 = tpu.concatenate %9, %10, %11, %12, %13 in 1 : vector<320x4xbf16>, vector<320x4xbf16>, vector<320x4xbf16>, vector<320x4xbf16>, vector<320x4xbf16> -> vector<320x20xbf16>
    %c0_9 = arith.constant 0 : index
    %c0_10 = arith.constant 0 : index
    %15 = vector.load %arg7[%c0_9, %c0_10] : memref<320x128xf32, #tpu.memory_space<vmem>>, vector<320x128xf32>
    %c0_11 = arith.constant 0 : index
    %c0_12 = arith.constant 0 : index
    %c0_13 = arith.constant 0 : index
    %16 = vector.load %arg4[%c0_11, %c0_12, %c0_13] : memref<5x20x128xbf16, #tpu.memory_space<vmem>>, vector<1x20x128xbf16>
    %17 = vector.shape_cast %16 : vector<1x20x128xbf16> to vector<20x128xbf16>
    %cst = arith.constant dense<0.000000e+00> : vector<320x128xf32>
    %18 = tpu.matmul %14, %17, %cst {dimension_numbers = #tpu.dot_dimension_numbers<[1], [0], [0], [1], [0, 0, 1, 1], [], []>} : vector<320x20xbf16>, vector<20x128xbf16>, vector<320x128xf32> -> vector<320x128xf32>
    %19 = arith.addf %15, %18 : vector<320x128xf32>
    %c0_14 = arith.constant 0 : index
    %c0_15 = arith.constant 0 : index
    %20 = vector.load %arg7[%c0_14, %c0_15] : memref<320x128xf32, #tpu.memory_space<vmem>>, vector<320x128xf32>
    tpu.vector_store %arg7[%c0_14, %c0_15], %19 {strides = array<i32>} : memref<320x128xf32, #tpu.memory_space<vmem>>, vector<320x128xf32>,
    %21 = vector.extract_strided_slice %4 {offsets = [20, 0], sizes = [320, 4], strides = [1, 1]} : vector<640x4xbf16> to vector<320x4xbf16>
    %22 = vector.extract_strided_slice %4 {offsets = [21, 0], sizes = [320, 4], strides = [1, 1]} : vector<640x4xbf16> to vector<320x4xbf16>
    %23 = vector.extract_strided_slice %4 {offsets = [22, 0], sizes = [320, 4], strides = [1, 1]} : vector<640x4xbf16> to vector<320x4xbf16>
    %24 = vector.extract_strided_slice %4 {offsets = [23, 0], sizes = [320, 4], strides = [1, 1]} : vector<640x4xbf16> to vector<320x4xbf16>
    %25 = vector.extract_strided_slice %4 {offsets = [24, 0], sizes = [320, 4], strides = [1, 1]} : vector<640x4xbf16> to vector<320x4xbf16>
    %26 = tpu.concatenate %21, %22, %23, %24, %25 in 1 : vector<320x4xbf16>, vector<320x4xbf16>, vector<320x4xbf16>, vector<320x4xbf16>, vector<320x4xbf16> -> vector<320x20xbf16>
    %c0_16 = arith.constant 0 : index
    %c0_17 = arith.constant 0 : index
    %27 = vector.load %arg7[%c0_16, %c0_17] : memref<320x128xf32, #tpu.memory_space<vmem>>, vector<320x128xf32>
    %c1 = arith.constant 1 : index
    %c0_18 = arith.constant 0 : index
    %c0_19 = arith.constant 0 : index
    %28 = vector.load %arg4[%c1, %c0_18, %c0_19] : memref<5x20x128xbf16, #tpu.memory_space<vmem>>, vector<1x20x128xbf16>
    %29 = vector.shape_cast %28 : vector<1x20x128xbf16> to vector<20x128xbf16>
    %cst_20 = arith.constant dense<0.000000e+00> : vector<320x128xf32>
    %30 = tpu.matmul %26, %29, %cst_20 {dimension_numbers = #tpu.dot_dimension_numbers<[1], [0], [0], [1], [0, 0, 1, 1], [], []>} : vector<320x20xbf16>, vector<20x128xbf16>, vector<320x128xf32> -> vector<320x128xf32>
    %31 = arith.addf %27, %30 : vector<320x128xf32>
    %c0_21 = arith.constant 0 : index
    %c0_22 = arith.constant 0 : index
    %32 = vector.load %arg7[%c0_21, %c0_22] : memref<320x128xf32, #tpu.memory_space<vmem>>, vector<320x128xf32>
    tpu.vector_store %arg7[%c0_21, %c0_22], %31 {strides = array<i32>} : memref<320x128xf32, #tpu.memory_space<vmem>>, vector<320x128xf32>,
    %33 = vector.extract_strided_slice %4 {offsets = [40, 0], sizes = [320, 4], strides = [1, 1]} : vector<640x4xbf16> to vector<320x4xbf16>
    %34 = vector.extract_strided_slice %4 {offsets = [41, 0], sizes = [320, 4], strides = [1, 1]} : vector<640x4xbf16> to vector<320x4xbf16>
    %35 = vector.extract_strided_slice %4 {offsets = [42, 0], sizes = [320, 4], strides = [1, 1]} : vector<640x4xbf16> to vector<320x4xbf16>
    %36 = vector.extract_strided_slice %4 {offsets = [43, 0], sizes = [320, 4], strides = [1, 1]} : vector<640x4xbf16> to vector<320x4xbf16>
    %37 = vector.extract_strided_slice %4 {offsets = [44, 0], sizes = [320, 4], strides = [1, 1]} : vector<640x4xbf16> to vector<320x4xbf16>
    %38 = tpu.concatenate %33, %34, %35, %36, %37 in 1 : vector<320x4xbf16>, vector<320x4xbf16>, vector<320x4xbf16>, vector<320x4xbf16>, vector<320x4xbf16> -> vector<320x20xbf16>
    %c0_23 = arith.constant 0 : index
    %c0_24 = arith.constant 0 : index
    %39 = vector.load %arg7[%c0_23, %c0_24] : memref<320x128xf32, #tpu.memory_space<vmem>>, vector<320x128xf32>
    %c2 = arith.constant 2 : index
    %c0_25 = arith.constant 0 : index
    %c0_26 = arith.constant 0 : index
    %40 = vector.load %arg4[%c2, %c0_25, %c0_26] : memref<5x20x128xbf16, #tpu.memory_space<vmem>>, vector<1x20x128xbf16>
    %41 = vector.shape_cast %40 : vector<1x20x128xbf16> to vector<20x128xbf16>
    %cst_27 = arith.constant dense<0.000000e+00> : vector<320x128xf32>
    %42 = tpu.matmul %38, %41, %cst_27 {dimension_numbers = #tpu.dot_dimension_numbers<[1], [0], [0], [1], [0, 0, 1, 1], [], []>} : vector<320x20xbf16>, vector<20x128xbf16>, vector<320x128xf32> -> vector<320x128xf32>
    %43 = arith.addf %39, %42 : vector<320x128xf32>
    %c0_28 = arith.constant 0 : index
    %c0_29 = arith.constant 0 : index
    %44 = vector.load %arg7[%c0_28, %c0_29] : memref<320x128xf32, #tpu.memory_space<vmem>>, vector<320x128xf32>
    tpu.vector_store %arg7[%c0_28, %c0_29], %43 {strides = array<i32>} : memref<320x128xf32, #tpu.memory_space<vmem>>, vector<320x128xf32>,
    %45 = vector.extract_strided_slice %4 {offsets = [60, 0], sizes = [320, 4], strides = [1, 1]} : vector<640x4xbf16> to vector<320x4xbf16>
    %46 = vector.extract_strided_slice %4 {offsets = [61, 0], sizes = [320, 4], strides = [1, 1]} : vector<640x4xbf16> to vector<320x4xbf16>
    %47 = vector.extract_strided_slice %4 {offsets = [62, 0], sizes = [320, 4], strides = [1, 1]} : vector<640x4xbf16> to vector<320x4xbf16>
    %48 = vector.extract_strided_slice %4 {offsets = [63, 0], sizes = [320, 4], strides = [1, 1]} : vector<640x4xbf16> to vector<320x4xbf16>
    %49 = vector.extract_strided_slice %4 {offsets = [64, 0], sizes = [320, 4], strides = [1, 1]} : vector<640x4xbf16> to vector<320x4xbf16>
    %50 = tpu.concatenate %45, %46, %47, %48, %49 in 1 : vector<320x4xbf16>, vector<320x4xbf16>, vector<320x4xbf16>, vector<320x4xbf16>, vector<320x4xbf16> -> vector<320x20xbf16>
    %c0_30 = arith.constant 0 : index
    %c0_31 = arith.constant 0 : index
    %51 = vector.load %arg7[%c0_30, %c0_31] : memref<320x128xf32, #tpu.memory_space<vmem>>, vector<320x128xf32>
    %c3 = arith.constant 3 : index
    %c0_32 = arith.constant 0 : index
    %c0_33 = arith.constant 0 : index
    %52 = vector.load %arg4[%c3, %c0_32, %c0_33] : memref<5x20x128xbf16, #tpu.memory_space<vmem>>, vector<1x20x128xbf16>
    %53 = vector.shape_cast %52 : vector<1x20x128xbf16> to vector<20x128xbf16>
    %cst_34 = arith.constant dense<0.000000e+00> : vector<320x128xf32>
    %54 = tpu.matmul %50, %53, %cst_34 {dimension_numbers = #tpu.dot_dimension_numbers<[1], [0], [0], [1], [0, 0, 1, 1], [], []>} : vector<320x20xbf16>, vector<20x128xbf16>, vector<320x128xf32> -> vector<320x128xf32>
    %55 = arith.addf %51, %54 : vector<320x128xf32>
    %c0_35 = arith.constant 0 : index
    %c0_36 = arith.constant 0 : index
    %56 = vector.load %arg7[%c0_35, %c0_36] : memref<320x128xf32, #tpu.memory_space<vmem>>, vector<320x128xf32>
    tpu.vector_store %arg7[%c0_35, %c0_36], %55 {strides = array<i32>} : memref<320x128xf32, #tpu.memory_space<vmem>>, vector<320x128xf32>,
    %57 = vector.extract_strided_slice %4 {offsets = [80, 0], sizes = [320, 4], strides = [1, 1]} : vector<640x4xbf16> to vector<320x4xbf16>
    %58 = vector.extract_strided_slice %4 {offsets = [81, 0], sizes = [320, 4], strides = [1, 1]} : vector<640x4xbf16> to vector<320x4xbf16>
    %59 = vector.extract_strided_slice %4 {offsets = [82, 0], sizes = [320, 4], strides = [1, 1]} : vector<640x4xbf16> to vector<320x4xbf16>
    %60 = vector.extract_strided_slice %4 {offsets = [83, 0], sizes = [320, 4], strides = [1, 1]} : vector<640x4xbf16> to vector<320x4xbf16>
    %61 = vector.extract_strided_slice %4 {offsets = [84, 0], sizes = [320, 4], strides = [1, 1]} : vector<640x4xbf16> to vector<320x4xbf16>
    %62 = tpu.concatenate %57, %58, %59, %60, %61 in 1 : vector<320x4xbf16>, vector<320x4xbf16>, vector<320x4xbf16>, vector<320x4xbf16>, vector<320x4xbf16> -> vector<320x20xbf16>
    %c0_37 = arith.constant 0 : index
    %c0_38 = arith.constant 0 : index
    %63 = vector.load %arg7[%c0_37, %c0_38] : memref<320x128xf32, #tpu.memory_space<vmem>>, vector<320x128xf32>
    %c4 = arith.constant 4 : index
    %c0_39 = arith.constant 0 : index
    %c0_40 = arith.constant 0 : index
    %64 = vector.load %arg4[%c4, %c0_39, %c0_40] : memref<5x20x128xbf16, #tpu.memory_space<vmem>>, vector<1x20x128xbf16>
    %65 = vector.shape_cast %64 : vector<1x20x128xbf16> to vector<20x128xbf16>
    %cst_41 = arith.constant dense<0.000000e+00> : vector<320x128xf32>
    %66 = tpu.matmul %62, %65, %cst_41 {dimension_numbers = #tpu.dot_dimension_numbers<[1], [0], [0], [1], [0, 0, 1, 1], [], []>} : vector<320x20xbf16>, vector<20x128xbf16>, vector<320x128xf32> -> vector<320x128xf32>
    %67 = arith.addf %63, %66 : vector<320x128xf32>
    %c0_42 = arith.constant 0 : index
    %c0_43 = arith.constant 0 : index
    %68 = vector.load %arg7[%c0_42, %c0_43] : memref<320x128xf32, #tpu.memory_space<vmem>>, vector<320x128xf32>
    tpu.vector_store %arg7[%c0_42, %c0_43], %67 {strides = array<i32>} : memref<320x128xf32, #tpu.memory_space<vmem>>, vector<320x128xf32>,
    %c0_44 = arith.constant 0 : index
    %c0_45 = arith.constant 0 : index
    %69 = vector.load %arg7[%c0_44, %c0_45] : memref<320x128xf32, #tpu.memory_space<vmem>>, vector<320x128xf32>
    %c0_46 = arith.constant 0 : index
    %c0_47 = arith.constant 0 : index
    %c0_48 = arith.constant 0 : index
    %70 = vector.load %arg6[%c0_46, %c0_47, %c0_48] : memref<1x320x128xf32, #tpu.memory_space<vmem>>, vector<1x320x128xf32>
    %71 = vector.shape_cast %70 : vector<1x320x128xf32> to vector<320x128xf32>
    %72 = vector.shape_cast %69 : vector<320x128xf32> to vector<1x320x128xf32>
    tpu.vector_store %arg6[%c0_46, %c0_47, %c0_48], %72 {strides = array<i32>} : memref<1x320x128xf32, #tpu.memory_space<vmem>>, vector<1x320x128xf32>,
    return
  }
  func.func @transform_0(%arg0: i32, %arg1: i32) -> (i32, i32, i32) {
    %c0_i32 = arith.constant 0 : i32
    %c0_i32_0 = arith.constant 0 : i32
    return %arg0, %arg1, %c0_i32 : i32, i32, i32
  }
  func.func @transform_1(%arg0: i32, %arg1: i32) -> (i32, i32, i32) {
    %c1_i32 = arith.constant 1 : i32
    %0 = arith.addi %arg1, %c1_i32 : i32
    %c1_i32_0 = arith.constant 1 : i32
    %1 = arith.muli %0, %c1_i32_0 : i32
    %c0_i32 = arith.constant 0 : i32
    %c0_i32_1 = arith.constant 0 : i32
    return %arg0, %1, %c0_i32 : i32, i32, i32
  }
  func.func @transform_2(%arg0: i32, %arg1: i32) -> (i32, i32, i32) {
    %c0_i32 = arith.constant 0 : i32
    %c0_i32_0 = arith.constant 0 : i32
    %c0_i32_1 = arith.constant 0 : i32
    %c0_i32_2 = arith.constant 0 : i32
    return %c0_i32, %c0_i32_0, %c0_i32_1 : i32, i32, i32
  }
  func.func @transform_3(%arg0: i32, %arg1: i32) -> (i32, i32) {
    %c0_i32 = arith.constant 0 : i32
    %c0_i32_0 = arith.constant 0 : i32
    %c0_i32_1 = arith.constant 0 : i32
    return %c0_i32, %c0_i32_0 : i32, i32
  }
  func.func @transform_4(%arg0: i32, %arg1: i32) -> (i32, i32, i32) {
    %c0_i32 = arith.constant 0 : i32
    %c0_i32_0 = arith.constant 0 : i32
    return %arg0, %arg1, %c0_i32 : i32, i32, i32
  }
}

</mosaic_0001>

<llo_original>
// kernel: tpu_custom_call.1
$region0: #{tpu_custom_call.1}
  #allocation0 [shape = 'u32[]', space=smem, size = 0x4, offset = 0x4, fixed_abs, tag = 'smem constant byte address 0x4 - core index']
  #allocation1 [shape = 'u32[144,128]{1,0:T(1,128)}', space=vmem, size = 0x12000, scoped, tag = 'internal scratch']
  #allocation2 [shape = 'f32[320,128]{1,0:T(8,128)}', space=vmem, size = 0x28000, scoped, tag = 'scratch operand']
  %s0 = inlined_call_operand.vmem [shape: bf16[2,640,4], index: 0, kind: input, shape index: {}]
  %s1 = inlined_call_operand.vmem [shape: bf16[2,640,4], index: 1, kind: input, shape index: {}]
  %s2 = inlined_call_operand.vmem [shape: bf16[5,20,128], index: 2, kind: input, shape index: {}]
  %s3 = inlined_call_operand.vmem [shape: f32[1,128], index: 3, kind: input, shape index: {}]
  %s4 = inlined_call_operand.hbm [shape: f32[2,320,128], index: 4, kind: output, shape index: {}]
  %s5 = sld [smem:[#allocation0]]
  $region49: #{tpu_custom_call.1} parent=0
    _
  %s7 = ssub.s32 1, %s5
  %s8 = scalar_select 0, %s7, %s5
  $region1: #{tpu_custom_call.1} parent=0
    #allocation3 [shape = 'u8[327680]{0}', space=vmem, size = 0x50000, scoped, tag = 'output window, operand 0']
    #allocation4 [shape = 's32[2]{0}', space=sflag, size = 0x8, scoped, tag = 'scoped memory for tpu_custom_call.1']
    %9 = vsyncpa [#allocation4], 0
    %s10 = scalar_lea.sflag [#allocation4], 1
    %11 = vsyncpa %s10, 0
    loop: start=0, step=1, limit=4
    $region2: #{tpu_custom_call.1} parent=1 // loop_pre_header
      _
    $region3: #{tpu_custom_call.1} parent=1 // loop_header
      %s13 = sphi 0, %s17
      %p14 = scmp.ge.s32.totalorder %s13, 4
      %s20 = sphi 0, %s32
      %s21 = sphi 0, %s28
      %s22 = sphi 0, %s20
      %s23 = sphi 0, %s21
      %s24 = sphi 0, %s22
      %s25 = sphi 0, %s23
      %s37 = sphi 0, %s39
      %s40 = sphi 0, %s37
      %s41 = sphi 0, %s40
      %s57 = sphi 0, %s41
      %s67 = sphi 0, %s69
      %s70 = sphi 0, %s67
      %s71 = sphi 0, %s70
      %s87 = sphi 0, %s71
      %s91 = sphi 0, %s91
      %s93 = sphi 0, %s91
      %s94 = sphi 0, %s93
      %s108 = sphi 0, %s94
      %s112 = sphi 0, %s112
      %s114 = sphi 0, %s112
      %s115 = sphi 0, %s114
      %s129 = sphi 0, %s115
      %s137 = sphi 0, %s139
      %s140 = sphi 0, %s137
      %s141 = sphi 0, %s140
      %s157 = sphi 0, %s141
    $region4: #{tpu_custom_call.1} parent=1 // loop_header_branch
      %16 = sbr.rel (%p14) target = $region8
    $region5: #{tpu_custom_call.1} parent=1 // loop_body
      %s18 = ssub.s32 %s13, 1
      %s19 = ssub.s32 %s13, 2
      %s26 = sadd.s32 1, %s21
      %p27 = scmp.ge.s32.totalorder %s26, 1
      %s28 = scalar_select %p27, 0, %s26
      %s29 = sadd.s32 1, %s20
      %s30 = scalar_select %p27, %s29, %s20
      %p31 = scmp.ge.s32.totalorder %s30, 2
      %s32 = scalar_select %p31, 0, %s30
      %s33 = ssub.s32 %s20, %s32
      %s34 = ssub.s32 %s21, %s28
      %s35 = sor.u32 %s33, %s34
      %p36 = scmp.eq.s32.totalorder %s35, 0
      %s38 = sadd.s32 %s37, 1
      %s39 = scalar_select %p36, %s37, %s38
      %p42 = pneg %p36
      %p43 = scmp.eq.s32.totalorder %s13, 1
      %p44 = por %p42, %p43
      %p45 = scmp.ne.s32.totalorder %s37, %s40
      %p46 = scmp.eq.s32.totalorder %s13, 0
      %p47 = por %p45, %p46
      %p48 = scmp.ne.s32.totalorder %s37, %s40
      %p49 = scmp.eq.s32.totalorder %s18, 1
      %p50 = por %p48, %p49
      %p51 = scmp.ne.s32.totalorder %s40, %s41
      %p52 = scmp.eq.s32.totalorder %s18, 0
      %p53 = por %p51, %p52
      %p54 = scmp.ne.s32.totalorder %s40, %s41
      %p55 = scmp.eq.s32.totalorder %s19, 1
      %p56 = por %p54, %p55
      %p58 = scmp.ne.s32.totalorder %s41, %s57
      %p59 = scmp.eq.s32.totalorder %s19, 0
      %p60 = por %p58, %p59
      %s61 = sadd.s32 %s21, 1
      %s62 = sadd.s32 %s28, 1
      %s63 = ssub.s32 %s20, %s32
      %s64 = ssub.s32 %s61, %s62
      %s65 = sor.u32 %s63, %s64
      %p66 = scmp.eq.s32.totalorder %s65, 0
      %s68 = sadd.s32 %s67, 1
      %s69 = scalar_select %p66, %s67, %s68
      %p72 = pneg %p66
      %p73 = scmp.eq.s32.totalorder %s13, 1
      %p74 = por %p72, %p73
      %p75 = scmp.ne.s32.totalorder %s67, %s70
      %p76 = scmp.eq.s32.totalorder %s13, 0
      %p77 = por %p75, %p76
      %p78 = scmp.ne.s32.totalorder %s67, %s70
      %p79 = scmp.eq.s32.totalorder %s18, 1
      %p80 = por %p78, %p79
      %p81 = scmp.ne.s32.totalorder %s70, %s71
      %p82 = scmp.eq.s32.totalorder %s18, 0
      %p83 = por %p81, %p82
      %p84 = scmp.ne.s32.totalorder %s70, %s71
      %p85 = scmp.eq.s32.totalorder %s19, 1
      %p86 = por %p84, %p85
      %p88 = scmp.ne.s32.totalorder %s71, %s87
      %p89 = scmp.eq.s32.totalorder %s19, 0
      %p90 = por %p88, %p89
      %s92 = sadd.s32 %s91, 1
      %p95 = scmp.eq.s32.totalorder %s13, 1
      %p96 = scmp.ne.s32.totalorder %s91, %s93
      %p97 = scmp.eq.s32.totalorder %s13, 0
      %p98 = por %p96, %p97
      %p99 = scmp.ne.s32.totalorder %s91, %s93
      %p100 = scmp.eq.s32.totalorder %s18, 1
      %p101 = por %p99, %p100
      %p102 = scmp.ne.s32.totalorder %s93, %s94
      %p103 = scmp.eq.s32.totalorder %s18, 0
      %p104 = por %p102, %p103
      %p105 = scmp.ne.s32.totalorder %s93, %s94
      %p106 = scmp.eq.s32.totalorder %s19, 1
      %p107 = por %p105, %p106
      %p109 = scmp.ne.s32.totalorder %s94, %s108
      %p110 = scmp.eq.s32.totalorder %s19, 0
      %p111 = por %p109, %p110
      %s113 = sadd.s32 %s112, 1
      %p116 = scmp.eq.s32.totalorder %s13, 1
      %p117 = scmp.ne.s32.totalorder %s112, %s114
      %p118 = scmp.eq.s32.totalorder %s13, 0
      %p119 = por %p117, %p118
      %p120 = scmp.ne.s32.totalorder %s112, %s114
      %p121 = scmp.eq.s32.totalorder %s18, 1
      %p122 = por %p120, %p121
      %p123 = scmp.ne.s32.totalorder %s114, %s115
      %p124 = scmp.eq.s32.totalorder %s18, 0
      %p125 = por %p123, %p124
      %p126 = scmp.ne.s32.totalorder %s114, %s115
      %p127 = scmp.eq.s32.totalorder %s19, 1
      %p128 = por %p126, %p127
      %p130 = scmp.ne.s32.totalorder %s115, %s129
      %p131 = scmp.eq.s32.totalorder %s19, 0
      %p132 = por %p130, %p131
      %s133 = ssub.s32 %s20, %s32
      %s134 = ssub.s32 %s21, %s28
      %s135 = sor.u32 %s133, %s134
      %p136 = scmp.eq.s32.totalorder %s135, 0
      %s138 = sadd.s32 %s137, 1
      %s139 = scalar_select %p136, %s137, %s138
      %p142 = pneg %p136
      %p143 = scmp.eq.s32.totalorder %s13, 1
      %p144 = por %p142, %p143
      %p145 = scmp.ne.s32.totalorder %s137, %s140
      %p146 = scmp.eq.s32.totalorder %s13, 0
      %p147 = por %p145, %p146
      %p148 = scmp.ne.s32.totalorder %s137, %s140
      %p149 = scmp.eq.s32.totalorder %s18, 1
      %p150 = por %p148, %p149
      %p151 = scmp.ne.s32.totalorder %s140, %s141
      %p152 = scmp.eq.s32.totalorder %s18, 0
      %p153 = por %p151, %p152
      %p154 = scmp.ne.s32.totalorder %s140, %s141
      %p155 = scmp.eq.s32.totalorder %s19, 1
      %p156 = por %p154, %p155
      %p158 = scmp.ne.s32.totalorder %s141, %s157
      %p159 = scmp.eq.s32.totalorder %s19, 0
      %p160 = por %p158, %p159
      %p161 = scmp.le.s32.totalorder 1, %s13
      %p162 = scmp.lt.s32.totalorder %s13, 3
      %p163 = pnand %p161, %p162
      %p164 = pneg %p163
      // Predicated region
      $region9: #{tpu_custom_call.1} parent=5 // pred_check
        _
      $region10: #{tpu_custom_call.1} parent=5 // pred_check_branch
        %166 = sbr.rel (%p163) target = $region12
      $region11: #{tpu_custom_call.1} parent=5 // pred_region
        %s167 = ssub.s32 %s13, 1
        // Predicated region
        $region13: #{tpu_custom_call.1} parent=11 // pred_check
          %p168 = pneg %p104
        $region14: #{tpu_custom_call.1} parent=11 // pred_check_branch
          %170 = sbr.rel (%p168) target = $region16
        $region15: #{tpu_custom_call.1} parent=11 // pred_region
          _
        $region16: #{tpu_custom_call.1} parent=11 // pred_fallthru
          _
        // Predicated region
        $region17: #{tpu_custom_call.1} parent=11 // pred_check
          %p171 = pneg %p125
        $region18: #{tpu_custom_call.1} parent=11 // pred_check_branch
          %173 = sbr.rel (%p171) target = $region20
        $region19: #{tpu_custom_call.1} parent=11 // pred_region
          _
        $region20: #{tpu_custom_call.1} parent=11 // pred_fallthru
          _
      $region12: #{tpu_custom_call.1} parent=5 // pred_fallthru
        _
      %p174 = scmp.lt.s32.totalorder %s13, 2
      // Predicated region
      $region21: #{tpu_custom_call.1} parent=5 // pred_check
        %p175 = pneg %p174
      $region22: #{tpu_custom_call.1} parent=5 // pred_check_branch
        %177 = sbr.rel (%p175) target = $region24
      $region23: #{tpu_custom_call.1} parent=5 // pred_region
        // Predicated region
        $region25: #{tpu_custom_call.1} parent=23 // pred_check
          %p178 = pneg %p47
        $region26: #{tpu_custom_call.1} parent=23 // pred_check_branch
          %180 = sbr.rel (%p178) target = $region28
        $region27: #{tpu_custom_call.1} parent=23 // pred_region
          %s181 = smul.u32 40, %s21
          %p182 = scmp.lt.s32.totalorder %s20, 1
          %s183 = scalar_select %p182, %s20, 1
          %p184 = scmp.lt.s32.totalorder %s181, 79
          %s185 = scalar_select %p184, %s181, 79
          %s186 = smul.addr %s183, 80
          %s187 = sadd.s32 %s185, %s186
          %s188 = smul.addr %s187, 4
          %s189 = scalar_lea.vmem %s0, %s188
          %s190 = smul.u32 40, %s21
        $region28: #{tpu_custom_call.1} parent=23 // pred_fallthru
          _
        // Predicated region
        $region29: #{tpu_custom_call.1} parent=23 // pred_check
          %p191 = pneg %p77
        $region30: #{tpu_custom_call.1} parent=23 // pred_check_branch
          %193 = sbr.rel (%p191) target = $region32
        $region31: #{tpu_custom_call.1} parent=23 // pred_region
          %s194 = sadd.s32 %s21, 1
          %s195 = smul.u32 40, %s194
          %p196 = scmp.lt.s32.totalorder %s20, 1
          %s197 = scalar_select %p196, %s20, 1
          %p198 = scmp.lt.s32.totalorder %s195, 79
          %s199 = scalar_select %p198, %s195, 79
          %s200 = smul.addr %s197, 80
          %s201 = sadd.s32 %s199, %s200
          %s202 = smul.addr %s201, 4
          %s203 = scalar_lea.vmem %s1, %s202
          %s204 = sadd.s32 %s21, 1
          %s205 = smul.u32 40, %s204
        $region32: #{tpu_custom_call.1} parent=23 // pred_fallthru
          _
      $region24: #{tpu_custom_call.1} parent=5 // pred_fallthru
        _
      %p206 = scmp.le.s32.totalorder 1, %s13
      %p207 = scmp.lt.s32.totalorder %s13, 3
      %p208 = pnand %p206, %p207
      %p209 = pneg %p208
      // Predicated region
      $region33: #{tpu_custom_call.1} parent=5 // pred_check
        _
      $region34: #{tpu_custom_call.1} parent=5 // pred_check_branch
        %211 = sbr.rel (%p208) target = $region36
      $region35: #{tpu_custom_call.1} parent=5 // pred_region
        %s212 = ssub.s32 %s13, 1
        %s213 = smul.u32 40, %s23
        %p214 = scmp.lt.s32.totalorder %s22, 1
        %s215 = scalar_select %p214, %s22, 1
        %p216 = scmp.lt.s32.totalorder %s213, 79
        %s217 = scalar_select %p216, %s213, 79
        %s218 = smul.addr %s215, 80
        %s219 = sadd.s32 %s217, %s218
        %s220 = smul.addr %s219, 4
        %s221 = scalar_lea.vmem %s0, %s220
        %p222 = pneg %p53
        %p223 = pneg %p50
        %s224 = sadd.s32 %s23, 1
        %s225 = smul.u32 40, %s224
        %p226 = scmp.lt.s32.totalorder %s22, 1
        %s227 = scalar_select %p226, %s22, 1
        %p228 = scmp.lt.s32.totalorder %s225, 79
        %s229 = scalar_select %p228, %s225, 79
        %s230 = smul.addr %s227, 80
        %s231 = sadd.s32 %s229, %s230
        %s232 = smul.addr %s231, 4
        %s233 = scalar_lea.vmem %s1, %s232
        %p234 = pneg %p83
        %p235 = pneg %p80
        %p236 = pneg %p104
        %p237 = pneg %p101
        %p238 = pneg %p125
        %p239 = pneg %p122
        %p240 = pneg %p153
        %p241 = pneg %p150
        %s242 = sand.u32 %s140, 1
        %s243 = scalar_lea.sflag [#allocation4], %s242
        %s244 = sand.u32 %s140, 1
        %s245 = smul.addr %s244, 320
        %s246 = scalar_lea.vmem [#allocation3], %s245
        %s247 = smul.u32 40, %s23
        %p248 = scmp.lt.s32.totalorder %s22, 1
        %s249 = scalar_select %p248, %s22, 1
        %p250 = scmp.lt.s32.totalorder %s247, 79
        %s251 = scalar_select %p250, %s247, 79
        %s252 = smul.addr %s249, 80
        %s253 = sadd.s32 %s251, %s252
        %s254 = smul.addr %s253, 4
        %s255 = scalar_lea.vmem %s0, %s254
        %s256 = smul.u32 40, %s23
        %s257 = sadd.s32 %s23, 1
        %s258 = smul.u32 40, %s257
        %p259 = scmp.lt.s32.totalorder %s22, 1
        %s260 = scalar_select %p259, %s22, 1
        %p261 = scmp.lt.s32.totalorder %s258, 79
        %s262 = scalar_select %p261, %s258, 79
        %s263 = smul.addr %s260, 80
        %s264 = sadd.s32 %s262, %s263
        %s265 = smul.addr %s264, 4
        %s266 = scalar_lea.vmem %s1, %s265
        %s267 = sadd.s32 %s23, 1
        %s268 = smul.u32 40, %s267
        %s269 = smul.u32 40, %s23
        %v271 = vld [vmem:[%s255] sm:$0xf]
        %v272 = vld [vmem:[%s255 + $0x4] sm:$0xf]
        %v273 = vld [vmem:[%s255 + $0x8] sm:$0xf]
        %v274 = vld [vmem:[%s255 + $0xc] sm:$0xf]
        %v275 = vld [vmem:[%s255 + $0x10] sm:$0xf]
        %v276 = vld [vmem:[%s255 + $0x14] sm:$0xf]
        %v277 = vld [vmem:[%s255 + $0x18] sm:$0xf]
        %v278 = vld [vmem:[%s255 + $0x1c] sm:$0xf]
        %v279 = vld [vmem:[%s255 + $0x20] sm:$0xf]
        %v280 = vld [vmem:[%s255 + $0x24] sm:$0xf]
        %v281 = vld [vmem:[%s255 + $0x28] sm:$0xf]
        %v282 = vld [vmem:[%s255 + $0x2c] sm:$0xf]
        %v283 = vld [vmem:[%s255 + $0x30] sm:$0xf]
        %v284 = vld [vmem:[%s255 + $0x34] sm:$0xf]
        %v285 = vld [vmem:[%s255 + $0x38] sm:$0xf]
        %v286 = vld [vmem:[%s255 + $0x3c] sm:$0xf]
        %v287 = vld [vmem:[%s255 + $0x40] sm:$0xf]
        %v288 = vld [vmem:[%s255 + $0x44] sm:$0xf]
        %v289 = vld [vmem:[%s255 + $0x48] sm:$0xf]
        %v290 = vld [vmem:[%s255 + $0x4c] sm:$0xf]
        %v291 = vld [vmem:[%s255 + $0x50] sm:$0xf]
        %v292 = vld [vmem:[%s255 + $0x54] sm:$0xf]
        %v293 = vld [vmem:[%s255 + $0x58] sm:$0xf]
        %v294 = vld [vmem:[%s255 + $0x5c] sm:$0xf]
        %v295 = vld [vmem:[%s255 + $0x60] sm:$0xf]
        %v296 = vld [vmem:[%s255 + $0x64] sm:$0xf]
        %v297 = vld [vmem:[%s255 + $0x68] sm:$0xf]
        %v298 = vld [vmem:[%s255 + $0x6c] sm:$0xf]
        %v299 = vld [vmem:[%s255 + $0x70] sm:$0xf]
        %v300 = vld [vmem:[%s255 + $0x74] sm:$0xf]
        %v301 = vld [vmem:[%s255 + $0x78] sm:$0xf]
        %v302 = vld [vmem:[%s255 + $0x7c] sm:$0xf]
        %v303 = vld [vmem:[%s255 + $0x80] sm:$0xf]
        %v304 = vld [vmem:[%s255 + $0x84] sm:$0xf]
        %v305 = vld [vmem:[%s255 + $0x88] sm:$0xf]
        %v306 = vld [vmem:[%s255 + $0x8c] sm:$0xf]
        %v307 = vld [vmem:[%s255 + $0x90] sm:$0xf]
        %v308 = vld [vmem:[%s255 + $0x94] sm:$0xf]
        %v309 = vld [vmem:[%s255 + $0x98] sm:$0xf]
        %v310 = vld [vmem:[%s255 + $0x9c] sm:$0xf]
        %v311 = vld [vmem:[%s266] sm:$0xf]
        %v312 = vld [vmem:[%s266 + $0x4] sm:$0xf]
        %v313 = vld [vmem:[%s266 + $0x8] sm:$0xf]
        %v314 = vld [vmem:[%s266 + $0xc] sm:$0xf]
        %v315 = vld [vmem:[%s266 + $0x10] sm:$0xf]
        %v316 = vld [vmem:[%s266 + $0x14] sm:$0xf]
        %v317 = vld [vmem:[%s266 + $0x18] sm:$0xf]
        %v318 = vld [vmem:[%s266 + $0x1c] sm:$0xf]
        %v319 = vld [vmem:[%s266 + $0x20] sm:$0xf]
        %v320 = vld [vmem:[%s266 + $0x24] sm:$0xf]
        %v321 = vld [vmem:[%s266 + $0x28] sm:$0xf]
        %v322 = vld [vmem:[%s266 + $0x2c] sm:$0xf]
        %v363 = vunpack.c.l.b16 %v271
        %v364 = vunpack.c.l.b16 %v272
        %v365 = vunpack.c.l.b16 %v273
        %v366 = vunpack.c.l.b16 %v274
        %v367 = vunpack.c.l.b16 %v275
        %v368 = vunpack.c.l.b16 %v276
        %v369 = vunpack.c.l.b16 %v277
        %v370 = vunpack.c.l.b16 %v278
        %v371 = vunpack.c.l.b16 %v279
        %v372 = vunpack.c.l.b16 %v280
        %v373 = vunpack.c.l.b16 %v281
        %v374 = vunpack.c.l.b16 %v282
        %v375 = vunpack.c.l.b16 %v283
        %v376 = vunpack.c.l.b16 %v284
        %v377 = vunpack.c.l.b16 %v285
        %v378 = vunpack.c.l.b16 %v286
        %v379 = vunpack.c.l.b16 %v287
        %v380 = vunpack.c.l.b16 %v288
        %v381 = vunpack.c.l.b16 %v289
        %v382 = vunpack.c.l.b16 %v290
        %v383 = vunpack.c.l.b16 %v291
        %v384 = vunpack.c.l.b16 %v292
        %v385 = vunpack.c.l.b16 %v293
        %v386 = vunpack.c.l.b16 %v294
        %v387 = vunpack.c.l.b16 %v295
        %v388 = vunpack.c.l.b16 %v296
        %v389 = vunpack.c.l.b16 %v297
        %v390 = vunpack.c.l.b16 %v298
        %v391 = vunpack.c.l.b16 %v299
        %v392 = vunpack.c.l.b16 %v300
        %v393 = vunpack.c.l.b16 %v301
        %v394 = vunpack.c.l.b16 %v302
        %v395 = vunpack.c.l.b16 %v303
        %v396 = vunpack.c.l.b16 %v304
        %v397 = vunpack.c.l.b16 %v305
        %v398 = vunpack.c.l.b16 %v306
        %v399 = vunpack.c.l.b16 %v307
        %v400 = vunpack.c.l.b16 %v308
        %v401 = vunpack.c.l.b16 %v309
        %v402 = vunpack.c.l.b16 %v310
        %v403 = vpack.c.b16 %v364, %v363
        %v404 = vpack.c.b16 %v366, %v365
        %v405 = vpack.c.b16 %v368, %v367
        %v406 = vpack.c.b16 %v370, %v369
        %v407 = vpack.c.b16 %v372, %v371
        %v408 = vpack.c.b16 %v374, %v373
        %v409 = vpack.c.b16 %v376, %v375
        %v410 = vpack.c.b16 %v378, %v377
        %v411 = vpack.c.b16 %v380, %v379
        %v412 = vpack.c.b16 %v382, %v381
        %v413 = vpack.c.b16 %v384, %v383
        %v414 = vpack.c.b16 %v386, %v385
        %v415 = vpack.c.b16 %v388, %v387
        %v416 = vpack.c.b16 %v390, %v389
        %v417 = vpack.c.b16 %v392, %v391
        %v418 = vpack.c.b16 %v394, %v393
        %v419 = vpack.c.b16 %v396, %v395
        %v420 = vpack.c.b16 %v398, %v397
        %v421 = vpack.c.b16 %v400, %v399
        %v422 = vpack.c.b16 %v402, %v401
        %v435 = vunpack.c.l.b16 %v311
        %v436 = vunpack.c.l.b16 %v312
        %v437 = vunpack.c.l.b16 %v313
        %v438 = vunpack.c.l.b16 %v314
        %v439 = vunpack.c.l.b16 %v315
        %v440 = vunpack.c.l.b16 %v316
        %v441 = vunpack.c.l.b16 %v317
        %v442 = vunpack.c.l.b16 %v318
        %v443 = vunpack.c.l.b16 %v319
        %v444 = vunpack.c.l.b16 %v320
        %v445 = vunpack.c.l.b16 %v321
        %v446 = vunpack.c.l.b16 %v322
        %v447 = vpack.c.b16 %v436, %v435
        %v448 = vpack.c.b16 %v438, %v437
        %v449 = vpack.c.b16 %v440, %v439
        %v450 = vpack.c.b16 %v442, %v441
        %v451 = vpack.c.b16 %v444, %v443
        %v452 = vpack.c.b16 %v446, %v445
        %v453 = vld [vmem:[%s3] sm:$0x1]
        %v455 = vlaneseq
        %v456 = vshrl.u32 %v455, 7
        %v457 = vsub.s32 0, %v456
        %v458 = vrot.slane %v453, %v457
        %460 = vst [vmem:[#allocation2] sm:$0xff] %v458
        %461 = vst [vmem:[#allocation2 + $0x8] sm:$0xff] %v458
        %462 = vst [vmem:[#allocation2 + $0x10] sm:$0xff] %v458
        %463 = vst [vmem:[#allocation2 + $0x18] sm:$0xff] %v458
        %464 = vst [vmem:[#allocation2 + $0x20] sm:$0xff] %v458
        %465 = vst [vmem:[#allocation2 + $0x28] sm:$0xff] %v458
        %466 = vst [vmem:[#allocation2 + $0x30] sm:$0xff] %v458
        %467 = vst [vmem:[#allocation2 + $0x38] sm:$0xff] %v458
        %468 = vst [vmem:[#allocation2 + $0x40] sm:$0xff] %v458
        %469 = vst [vmem:[#allocation2 + $0x48] sm:$0xff] %v458
        %470 = vst [vmem:[#allocation2 + $0x50] sm:$0xff] %v458
        %471 = vst [vmem:[#allocation2 + $0x58] sm:$0xff] %v458
        %472 = vst [vmem:[#allocation2 + $0x60] sm:$0xff] %v458
        %473 = vst [vmem:[#allocation2 + $0x68] sm:$0xff] %v458
        %474 = vst [vmem:[#allocation2 + $0x70] sm:$0xff] %v458
        %475 = vst [vmem:[#allocation2 + $0x78] sm:$0xff] %v458
        %476 = vst [vmem:[#allocation2 + $0x80] sm:$0xff] %v458
        %477 = vst [vmem:[#allocation2 + $0x88] sm:$0xff] %v458
        %478 = vst [vmem:[#allocation2 + $0x90] sm:$0xff] %v458
        %479 = vst [vmem:[#allocation2 + $0x98] sm:$0xff] %v458
        %480 = vst [vmem:[#allocation2 + $0xa0] sm:$0xff] %v458
        %481 = vst [vmem:[#allocation2 + $0xa8] sm:$0xff] %v458
        %482 = vst [vmem:[#allocation2 + $0xb0] sm:$0xff] %v458
        %483 = vst [vmem:[#allocation2 + $0xb8] sm:$0xff] %v458
        %484 = vst [vmem:[#allocation2 + $0xc0] sm:$0xff] %v458
        %485 = vst [vmem:[#allocation2 + $0xc8] sm:$0xff] %v458
        %486 = vst [vmem:[#allocation2 + $0xd0] sm:$0xff] %v458
        %487 = vst [vmem:[#allocation2 + $0xd8] sm:$0xff] %v458
        %488 = vst [vmem:[#allocation2 + $0xe0] sm:$0xff] %v458
        %489 = vst [vmem:[#allocation2 + $0xe8] sm:$0xff] %v458
        %490 = vst [vmem:[#allocation2 + $0xf0] sm:$0xff] %v458
        %491 = vst [vmem:[#allocation2 + $0xf8] sm:$0xff] %v458
        %492 = vst [vmem:[#allocation2 + $0x100] sm:$0xff] %v458
        %493 = vst [vmem:[#allocation2 + $0x108] sm:$0xff] %v458
        %494 = vst [vmem:[#allocation2 + $0x110] sm:$0xff] %v458
        %495 = vst [vmem:[#allocation2 + $0x118] sm:$0xff] %v458
        %496 = vst [vmem:[#allocation2 + $0x120] sm:$0xff] %v458
        %497 = vst [vmem:[#allocation2 + $0x128] sm:$0xff] %v458
        %498 = vst [vmem:[#allocation2 + $0x130] sm:$0xff] %v458
        %499 = vst [vmem:[#allocation2 + $0x138] sm:$0xff] %v458
        %vm500 = vsmask.f32 7424
        %v502 = vshrl.u32 %v403, 16
        %v504 = vshll.u32 %v403, 16
        %v506 = vrot.slane %v504, 1
        %v507 = vor.u32 %v502, %v506
        %v509 = vshll.u32 %v404, 16
        %v511 = vrot.slane %v509, 1
        %v512 = vsel %vm500, %v507, %v511
        %v513 = vshrl.u32 %v404, 16
        %v515 = vor.u32 %v513, %v511
        %v517 = vshll.u32 %v405, 16
        %v519 = vrot.slane %v517, 1
        %v520 = vsel %vm500, %v515, %v519
        %v521 = vshrl.u32 %v405, 16
        %v523 = vor.u32 %v521, %v519
        %v525 = vshll.u32 %v406, 16
        %v527 = vrot.slane %v525, 1
        %v528 = vsel %vm500, %v523, %v527
        %v529 = vshrl.u32 %v406, 16
        %v531 = vor.u32 %v529, %v527
        %v533 = vshll.u32 %v407, 16
        %v535 = vrot.slane %v533, 1
        %v536 = vsel %vm500, %v531, %v535
        %v537 = vshrl.u32 %v407, 16
        %v539 = vor.u32 %v537, %v535
        %v541 = vshll.u32 %v408, 16
        %v543 = vrot.slane %v541, 1
        %v544 = vsel %vm500, %v539, %v543
        %v545 = vshrl.u32 %v408, 16
        %v547 = vor.u32 %v545, %v543
        %v549 = vshll.u32 %v409, 16
        %v551 = vrot.slane %v549, 1
        %v552 = vsel %vm500, %v547, %v551
        %v553 = vshrl.u32 %v409, 16
        %v555 = vor.u32 %v553, %v551
        %v557 = vshll.u32 %v410, 16
        %v559 = vrot.slane %v557, 1
        %v560 = vsel %vm500, %v555, %v559
        %v561 = vshrl.u32 %v410, 16
        %v563 = vor.u32 %v561, %v559
        %v565 = vshll.u32 %v411, 16
        %v567 = vrot.slane %v565, 1
        %v568 = vsel %vm500, %v563, %v567
        %v569 = vshrl.u32 %v411, 16
        %v571 = vor.u32 %v569, %v567
        %v573 = vshll.u32 %v412, 16
        %v575 = vrot.slane %v573, 1
        %v576 = vsel %vm500, %v571, %v575
        %v577 = vshrl.u32 %v412, 16
        %v579 = vor.u32 %v577, %v575
        %v581 = vshll.u32 %v413, 16
        %v583 = vrot.slane %v581, 1
        %v584 = vsel %vm500, %v579, %v583
        %v585 = vshrl.u32 %v413, 16
        %v587 = vor.u32 %v585, %v583
        %v589 = vshll.u32 %v414, 16
        %v591 = vrot.slane %v589, 1
        %v592 = vsel %vm500, %v587, %v591
        %v593 = vshrl.u32 %v414, 16
        %v595 = vor.u32 %v593, %v591
        %v597 = vshll.u32 %v415, 16
        %v599 = vrot.slane %v597, 1
        %v600 = vsel %vm500, %v595, %v599
        %v601 = vshrl.u32 %v415, 16
        %v603 = vor.u32 %v601, %v599
        %v605 = vshll.u32 %v416, 16
        %v607 = vrot.slane %v605, 1
        %v608 = vsel %vm500, %v603, %v607
        %v609 = vshrl.u32 %v416, 16
        %v611 = vor.u32 %v609, %v607
        %v613 = vshll.u32 %v417, 16
        %v615 = vrot.slane %v613, 1
        %v616 = vsel %vm500, %v611, %v615
        %v617 = vshrl.u32 %v417, 16
        %v619 = vor.u32 %v617, %v615
        %v621 = vshll.u32 %v418, 16
        %v623 = vrot.slane %v621, 1
        %v624 = vsel %vm500, %v619, %v623
        %v625 = vshrl.u32 %v418, 16
        %v627 = vor.u32 %v625, %v623
        %v629 = vshll.u32 %v419, 16
        %v631 = vrot.slane %v629, 1
        %v632 = vsel %vm500, %v627, %v631
        %v633 = vshrl.u32 %v419, 16
        %v635 = vor.u32 %v633, %v631
        %v637 = vshll.u32 %v420, 16
        %v639 = vrot.slane %v637, 1
        %v640 = vsel %vm500, %v635, %v639
        %v641 = vshrl.u32 %v420, 16
        %v643 = vor.u32 %v641, %v639
        %v645 = vshll.u32 %v421, 16
        %v647 = vrot.slane %v645, 1
        %v648 = vsel %vm500, %v643, %v647
        %v649 = vshrl.u32 %v421, 16
        %v651 = vor.u32 %v649, %v647
        %v653 = vshll.u32 %v422, 16
        %v655 = vrot.slane %v653, 1
        %v656 = vsel %vm500, %v651, %v655
        %v657 = vshrl.u32 %v422, 16
        %v659 = vor.u32 %v657, %v655
        %v661 = vshll.u32 %v447, 16
        %v663 = vrot.slane %v661, 1
        %v664 = vsel %vm500, %v659, %v663
        %665 = vrot.lane.b32.xlu0 %v512, 4
        %v666 = vpop.permute.xlu0 %665
        %667 = vrot.lane.b32.xlu0 %v520, 4
        %v668 = vpop.permute.xlu0 %667
        %669 = vrot.lane.b32.xlu0 %v528, 4
        %v670 = vpop.permute.xlu0 %669
        %671 = vrot.lane.b32.xlu0 %v536, 4
        %v672 = vpop.permute.xlu0 %671
        %673 = vrot.lane.b32.xlu0 %v544, 4
        %v674 = vpop.permute.xlu0 %673
        %675 = vrot.lane.b32.xlu0 %v552, 4
        %v676 = vpop.permute.xlu0 %675
        %677 = vrot.lane.b32.xlu0 %v560, 4
        %v678 = vpop.permute.xlu0 %677
        %679 = vrot.lane.b32.xlu0 %v568, 4
        %v680 = vpop.permute.xlu0 %679
        %681 = vrot.lane.b32.xlu0 %v576, 4
        %v682 = vpop.permute.xlu0 %681
        %683 = vrot.lane.b32.xlu0 %v584, 4
        %v684 = vpop.permute.xlu0 %683
        %685 = vrot.lane.b32.xlu0 %v592, 4
        %v686 = vpop.permute.xlu0 %685
        %687 = vrot.lane.b32.xlu0 %v600, 4
        %v688 = vpop.permute.xlu0 %687
        %689 = vrot.lane.b32.xlu0 %v608, 4
        %v690 = vpop.permute.xlu0 %689
        %691 = vrot.lane.b32.xlu0 %v616, 4
        %v692 = vpop.permute.xlu0 %691
        %693 = vrot.lane.b32.xlu0 %v624, 4
        %v694 = vpop.permute.xlu0 %693
        %695 = vrot.lane.b32.xlu0 %v632, 4
        %v696 = vpop.permute.xlu0 %695
        %697 = vrot.lane.b32.xlu0 %v640, 4
        %v698 = vpop.permute.xlu0 %697
        %699 = vrot.lane.b32.xlu0 %v648, 4
        %v700 = vpop.permute.xlu0 %699
        %701 = vrot.lane.b32.xlu0 %v656, 4
        %v702 = vpop.permute.xlu0 %701
        %703 = vrot.lane.b32.xlu0 %v664, 4
        %v704 = vpop.permute.xlu0 %703
        %vm705 = vcmask 1046528
        %v706 = vrot.slane %v403, 1
        %v707 = vrot.slane %v404, 1
        %v708 = vsel %vm705, %v706, %v707
        %v709 = vrot.slane %v405, 1
        %v710 = vsel %vm705, %v707, %v709
        %v711 = vrot.slane %v406, 1
        %v712 = vsel %vm705, %v709, %v711
        %v713 = vrot.slane %v407, 1
        %v714 = vsel %vm705, %v711, %v713
        %v715 = vrot.slane %v408, 1
        %v716 = vsel %vm705, %v713, %v715
        %v717 = vrot.slane %v409, 1
        %v718 = vsel %vm705, %v715, %v717
        %v719 = vrot.slane %v410, 1
        %v720 = vsel %vm705, %v717, %v719
        %v721 = vrot.slane %v411, 1
        %v722 = vsel %vm705, %v719, %v721
        %v723 = vrot.slane %v412, 1
        %v724 = vsel %vm705, %v721, %v723
        %v725 = vrot.slane %v413, 1
        %v726 = vsel %vm705, %v723, %v725
        %v727 = vrot.slane %v414, 1
        %v728 = vsel %vm705, %v725, %v727
        %v729 = vrot.slane %v415, 1
        %v730 = vsel %vm705, %v727, %v729
        %v731 = vrot.slane %v416, 1
        %v732 = vsel %vm705, %v729, %v731
        %v733 = vrot.slane %v417, 1
        %v734 = vsel %vm705, %v731, %v733
        %v735 = vrot.slane %v418, 1
        %v736 = vsel %vm705, %v733, %v735
        %v737 = vrot.slane %v419, 1
        %v738 = vsel %vm705, %v735, %v737
        %v739 = vrot.slane %v420, 1
        %v740 = vsel %vm705, %v737, %v739
        %v741 = vrot.slane %v421, 1
        %v742 = vsel %vm705, %v739, %v741
        %v743 = vrot.slane %v422, 1
        %v744 = vsel %vm705, %v741, %v743
        %v745 = vrot.slane %v447, 1
        %v746 = vsel %vm705, %v743, %v745
        %747 = vrot.lane.b32.xlu0 %v708, 8
        %v748 = vpop.permute.xlu0 %747
        %749 = vrot.lane.b32.xlu0 %v710, 8
        %v750 = vpop.permute.xlu0 %749
        %751 = vrot.lane.b32.xlu0 %v712, 8
        %v752 = vpop.permute.xlu0 %751
        %753 = vrot.lane.b32.xlu0 %v714, 8
        %v754 = vpop.permute.xlu0 %753
        %755 = vrot.lane.b32.xlu0 %v716, 8
        %v756 = vpop.permute.xlu0 %755
        %757 = vrot.lane.b32.xlu0 %v718, 8
        %v758 = vpop.permute.xlu0 %757
        %759 = vrot.lane.b32.xlu0 %v720, 8
        %v760 = vpop.permute.xlu0 %759
        %761 = vrot.lane.b32.xlu0 %v722, 8
        %v762 = vpop.permute.xlu0 %761
        %763 = vrot.lane.b32.xlu0 %v724, 8
        %v764 = vpop.permute.xlu0 %763
        %765 = vrot.lane.b32.xlu0 %v726, 8
        %v766 = vpop.permute.xlu0 %765
        %767 = vrot.lane.b32.xlu0 %v728, 8
        %v768 = vpop.permute.xlu0 %767
        %769 = vrot.lane.b32.xlu0 %v730, 8
        %v770 = vpop.permute.xlu0 %769
        %771 = vrot.lane.b32.xlu0 %v732, 8
        %v772 = vpop.permute.xlu0 %771
        %773 = vrot.lane.b32.xlu0 %v734, 8
        %v774 = vpop.permute.xlu0 %773
        %775 = vrot.lane.b32.xlu0 %v736, 8
        %v776 = vpop.permute.xlu0 %775
        %777 = vrot.lane.b32.xlu0 %v738, 8
        %v778 = vpop.permute.xlu0 %777
        %779 = vrot.lane.b32.xlu0 %v740, 8
        %v780 = vpop.permute.xlu0 %779
        %781 = vrot.lane.b32.xlu0 %v742, 8
        %v782 = vpop.permute.xlu0 %781
        %783 = vrot.lane.b32.xlu0 %v744, 8
        %v784 = vpop.permute.xlu0 %783
        %785 = vrot.lane.b32.xlu0 %v746, 8
        %v786 = vpop.permute.xlu0 %785
        %vm787 = vsmask.f32 6400
        %v788 = vrot.slane %v502, 1
        %v789 = vrot.slane %v504, 2
        %v790 = vor.u32 %v788, %v789
        %v791 = vrot.slane %v513, 1
        %v792 = vrot.slane %v509, 2
        %v793 = vor.u32 %v791, %v792
        %v794 = vsel %vm787, %v790, %v793
        %v795 = vrot.slane %v521, 1
        %v796 = vrot.slane %v517, 2
        %v797 = vor.u32 %v795, %v796
        %v798 = vsel %vm787, %v793, %v797
        %v799 = vrot.slane %v529, 1
        %v800 = vrot.slane %v525, 2
        %v801 = vor.u32 %v799, %v800
        %v802 = vsel %vm787, %v797, %v801
        %v803 = vrot.slane %v537, 1
        %v804 = vrot.slane %v533, 2
        %v805 = vor.u32 %v803, %v804
        %v806 = vsel %vm787, %v801, %v805
        %v807 = vrot.slane %v545, 1
        %v808 = vrot.slane %v541, 2
        %v809 = vor.u32 %v807, %v808
        %v810 = vsel %vm787, %v805, %v809
        %v811 = vrot.slane %v553, 1
        %v812 = vrot.slane %v549, 2
        %v813 = vor.u32 %v811, %v812
        %v814 = vsel %vm787, %v809, %v813
        %v815 = vrot.slane %v561, 1
        %v816 = vrot.slane %v557, 2
        %v817 = vor.u32 %v815, %v816
        %v818 = vsel %vm787, %v813, %v817
        %v819 = vrot.slane %v569, 1
        %v820 = vrot.slane %v565, 2
        %v821 = vor.u32 %v819, %v820
        %v822 = vsel %vm787, %v817, %v821
        %v823 = vrot.slane %v577, 1
        %v824 = vrot.slane %v573, 2
        %v825 = vor.u32 %v823, %v824
        %v826 = vsel %vm787, %v821, %v825
        %v827 = vrot.slane %v585, 1
        %v828 = vrot.slane %v581, 2
        %v829 = vor.u32 %v827, %v828
        %v830 = vsel %vm787, %v825, %v829
        %v831 = vrot.slane %v593, 1
        %v832 = vrot.slane %v589, 2
        %v833 = vor.u32 %v831, %v832
        %v834 = vsel %vm787, %v829, %v833
        %v835 = vrot.slane %v601, 1
        %v836 = vrot.slane %v597, 2
        %v837 = vor.u32 %v835, %v836
        %v838 = vsel %vm787, %v833, %v837
        %v839 = vrot.slane %v609, 1
        %v840 = vrot.slane %v605, 2
        %v841 = vor.u32 %v839, %v840
        %v842 = vsel %vm787, %v837, %v841
        %v843 = vrot.slane %v617, 1
        %v844 = vrot.slane %v613, 2
        %v845 = vor.u32 %v843, %v844
        %v846 = vsel %vm787, %v841, %v845
        %v847 = vrot.slane %v625, 1
        %v848 = vrot.slane %v621, 2
        %v849 = vor.u32 %v847, %v848
        %v850 = vsel %vm787, %v845, %v849
        %v851 = vrot.slane %v633, 1
        %v852 = vrot.slane %v629, 2
        %v853 = vor.u32 %v851, %v852
        %v854 = vsel %vm787, %v849, %v853
        %v855 = vrot.slane %v641, 1
        %v856 = vrot.slane %v637, 2
        %v857 = vor.u32 %v855, %v856
        %v858 = vsel %vm787, %v853, %v857
        %v859 = vrot.slane %v649, 1
        %v860 = vrot.slane %v645, 2
        %v861 = vor.u32 %v859, %v860
        %v862 = vsel %vm787, %v857, %v861
        %v863 = vrot.slane %v657, 1
        %v864 = vrot.slane %v653, 2
        %v865 = vor.u32 %v863, %v864
        %v866 = vsel %vm787, %v861, %v865
        %v867 = vshrl.u32 %v447, 16
        %v869 = vrot.slane %v867, 1
        %v870 = vrot.slane %v661, 2
        %v871 = vor.u32 %v869, %v870
        %v872 = vsel %vm787, %v865, %v871
        %873 = vrot.lane.b32.xlu0 %v794, 12
        %v874 = vpop.permute.xlu0 %873
        %875 = vrot.lane.b32.xlu0 %v798, 12
        %v876 = vpop.permute.xlu0 %875
        %877 = vrot.lane.b32.xlu0 %v802, 12
        %v878 = vpop.permute.xlu0 %877
        %879 = vrot.lane.b32.xlu0 %v806, 12
        %v880 = vpop.permute.xlu0 %879
        %881 = vrot.lane.b32.xlu0 %v810, 12
        %v882 = vpop.permute.xlu0 %881
        %883 = vrot.lane.b32.xlu0 %v814, 12
        %v884 = vpop.permute.xlu0 %883
        %885 = vrot.lane.b32.xlu0 %v818, 12
        %v886 = vpop.permute.xlu0 %885
        %887 = vrot.lane.b32.xlu0 %v822, 12
        %v888 = vpop.permute.xlu0 %887
        %889 = vrot.lane.b32.xlu0 %v826, 12
        %v890 = vpop.permute.xlu0 %889
        %891 = vrot.lane.b32.xlu0 %v830, 12
        %v892 = vpop.permute.xlu0 %891
        %893 = vrot.lane.b32.xlu0 %v834, 12
        %v894 = vpop.permute.xlu0 %893
        %895 = vrot.lane.b32.xlu0 %v838, 12
        %v896 = vpop.permute.xlu0 %895
        %897 = vrot.lane.b32.xlu0 %v842, 12
        %v898 = vpop.permute.xlu0 %897
        %899 = vrot.lane.b32.xlu0 %v846, 12
        %v900 = vpop.permute.xlu0 %899
        %901 = vrot.lane.b32.xlu0 %v850, 12
        %v902 = vpop.permute.xlu0 %901
        %903 = vrot.lane.b32.xlu0 %v854, 12
        %v904 = vpop.permute.xlu0 %903
        %905 = vrot.lane.b32.xlu0 %v858, 12
        %v906 = vpop.permute.xlu0 %905
        %907 = vrot.lane.b32.xlu0 %v862, 12
        %v908 = vpop.permute.xlu0 %907
        %909 = vrot.lane.b32.xlu0 %v866, 12
        %v910 = vpop.permute.xlu0 %909
        %911 = vrot.lane.b32.xlu0 %v872, 12
        %v912 = vpop.permute.xlu0 %911
        %vm913 = vcmask 1045504
        %v914 = vrot.slane %v403, 2
        %v915 = vrot.slane %v404, 2
        %v916 = vsel %vm913, %v914, %v915
        %v917 = vrot.slane %v405, 2
        %v918 = vsel %vm913, %v915, %v917
        %v919 = vrot.slane %v406, 2
        %v920 = vsel %vm913, %v917, %v919
        %v921 = vrot.slane %v407, 2
        %v922 = vsel %vm913, %v919, %v921
        %v923 = vrot.slane %v408, 2
        %v924 = vsel %vm913, %v921, %v923
        %v925 = vrot.slane %v409, 2
        %v926 = vsel %vm913, %v923, %v925
        %v927 = vrot.slane %v410, 2
        %v928 = vsel %vm913, %v925, %v927
        %v929 = vrot.slane %v411, 2
        %v930 = vsel %vm913, %v927, %v929
        %v931 = vrot.slane %v412, 2
        %v932 = vsel %vm913, %v929, %v931
        %v933 = vrot.slane %v413, 2
        %v934 = vsel %vm913, %v931, %v933
        %v935 = vrot.slane %v414, 2
        %v936 = vsel %vm913, %v933, %v935
        %v937 = vrot.slane %v415, 2
        %v938 = vsel %vm913, %v935, %v937
        %v939 = vrot.slane %v416, 2
        %v940 = vsel %vm913, %v937, %v939
        %v941 = vrot.slane %v417, 2
        %v942 = vsel %vm913, %v939, %v941
        %v943 = vrot.slane %v418, 2
        %v944 = vsel %vm913, %v941, %v943
        %v945 = vrot.slane %v419, 2
        %v946 = vsel %vm913, %v943, %v945
        %v947 = vrot.slane %v420, 2
        %v948 = vsel %vm913, %v945, %v947
        %v949 = vrot.slane %v421, 2
        %v950 = vsel %vm913, %v947, %v949
        %v951 = vrot.slane %v422, 2
        %v952 = vsel %vm913, %v949, %v951
        %v953 = vrot.slane %v447, 2
        %v954 = vsel %vm913, %v951, %v953
        %955 = vrot.lane.b32.xlu0 %v916, 16
        %v956 = vpop.permute.xlu0 %955
        %957 = vrot.lane.b32.xlu0 %v918, 16
        %v958 = vpop.permute.xlu0 %957
        %959 = vrot.lane.b32.xlu0 %v920, 16
        %v960 = vpop.permute.xlu0 %959
        %961 = vrot.lane.b32.xlu0 %v922, 16
        %v962 = vpop.permute.xlu0 %961
        %963 = vrot.lane.b32.xlu0 %v924, 16
        %v964 = vpop.permute.xlu0 %963
        %965 = vrot.lane.b32.xlu0 %v926, 16
        %v966 = vpop.permute.xlu0 %965
        %967 = vrot.lane.b32.xlu0 %v928, 16
        %v968 = vpop.permute.xlu0 %967
        %969 = vrot.lane.b32.xlu0 %v930, 16
        %v970 = vpop.permute.xlu0 %969
        %971 = vrot.lane.b32.xlu0 %v932, 16
        %v972 = vpop.permute.xlu0 %971
        %973 = vrot.lane.b32.xlu0 %v934, 16
        %v974 = vpop.permute.xlu0 %973
        %975 = vrot.lane.b32.xlu0 %v936, 16
        %v976 = vpop.permute.xlu0 %975
        %977 = vrot.lane.b32.xlu0 %v938, 16
        %v978 = vpop.permute.xlu0 %977
        %979 = vrot.lane.b32.xlu0 %v940, 16
        %v980 = vpop.permute.xlu0 %979
        %981 = vrot.lane.b32.xlu0 %v942, 16
        %v982 = vpop.permute.xlu0 %981
        %983 = vrot.lane.b32.xlu0 %v944, 16
        %v984 = vpop.permute.xlu0 %983
        %985 = vrot.lane.b32.xlu0 %v946, 16
        %v986 = vpop.permute.xlu0 %985
        %987 = vrot.lane.b32.xlu0 %v948, 16
        %v988 = vpop.permute.xlu0 %987
        %989 = vrot.lane.b32.xlu0 %v950, 16
        %v990 = vpop.permute.xlu0 %989
        %991 = vrot.lane.b32.xlu0 %v952, 16
        %v992 = vpop.permute.xlu0 %991
        %993 = vrot.lane.b32.xlu0 %v954, 16
        %v994 = vpop.permute.xlu0 %993
        %vm995 = vcmask 31744
        %v997 = vsel %vm995, %v403, %v666
        %v999 = vsel %vm995, %v404, %v668
        %v1001 = vsel %vm995, %v405, %v670
        %v1003 = vsel %vm995, %v406, %v672
        %v1005 = vsel %vm995, %v407, %v674
        %v1007 = vsel %vm995, %v408, %v676
        %v1009 = vsel %vm995, %v409, %v678
        %v1011 = vsel %vm995, %v410, %v680
        %v1013 = vsel %vm995, %v411, %v682
        %v1015 = vsel %vm995, %v412, %v684
        %v1017 = vsel %vm995, %v413, %v686
        %v1019 = vsel %vm995, %v414, %v688
        %v1021 = vsel %vm995, %v415, %v690
        %v1023 = vsel %vm995, %v416, %v692
        %v1025 = vsel %vm995, %v417, %v694
        %v1027 = vsel %vm995, %v418, %v696
        %v1029 = vsel %vm995, %v419, %v698
        %v1031 = vsel %vm995, %v420, %v700
        %v1033 = vsel %vm995, %v421, %v702
        %v1035 = vsel %vm995, %v422, %v704
        %vm1036 = vcmask 64512
        %v1038 = vsel %vm1036, %v997, %v748
        %v1040 = vsel %vm1036, %v999, %v750
        %v1042 = vsel %vm1036, %v1001, %v752
        %v1044 = vsel %vm1036, %v1003, %v754
        %v1046 = vsel %vm1036, %v1005, %v756
        %v1048 = vsel %vm1036, %v1007, %v758
        %v1050 = vsel %vm1036, %v1009, %v760
        %v1052 = vsel %vm1036, %v1011, %v762
        %v1054 = vsel %vm1036, %v1013, %v764
        %v1056 = vsel %vm1036, %v1015, %v766
        %v1058 = vsel %vm1036, %v1017, %v768
        %v1060 = vsel %vm1036, %v1019, %v770
        %v1062 = vsel %vm1036, %v1021, %v772
        %v1064 = vsel %vm1036, %v1023, %v774
        %v1066 = vsel %vm1036, %v1025, %v776
        %v1068 = vsel %vm1036, %v1027, %v778
        %v1070 = vsel %vm1036, %v1029, %v780
        %v1072 = vsel %vm1036, %v1031, %v782
        %v1074 = vsel %vm1036, %v1033, %v784
        %v1076 = vsel %vm1036, %v1035, %v786
        %vm1077 = vcmask 97280
        %v1079 = vsel %vm1077, %v1038, %v874
        %v1081 = vsel %vm1077, %v1040, %v876
        %v1083 = vsel %vm1077, %v1042, %v878
        %v1085 = vsel %vm1077, %v1044, %v880
        %v1087 = vsel %vm1077, %v1046, %v882
        %v1089 = vsel %vm1077, %v1048, %v884
        %v1091 = vsel %vm1077, %v1050, %v886
        %v1093 = vsel %vm1077, %v1052, %v888
        %v1095 = vsel %vm1077, %v1054, %v890
        %v1097 = vsel %vm1077, %v1056, %v892
        %v1099 = vsel %vm1077, %v1058, %v894
        %v1101 = vsel %vm1077, %v1060, %v896
        %v1103 = vsel %vm1077, %v1062, %v898
        %v1105 = vsel %vm1077, %v1064, %v900
        %v1107 = vsel %vm1077, %v1066, %v902
        %v1109 = vsel %vm1077, %v1068, %v904
        %v1111 = vsel %vm1077, %v1070, %v906
        %v1113 = vsel %vm1077, %v1072, %v908
        %v1115 = vsel %vm1077, %v1074, %v910
        %v1117 = vsel %vm1077, %v1076, %v912
        %vm1118 = vcmask 130048
        %v1120 = vsel %vm1118, %v1079, %v956
        %v1122 = vsel %vm1118, %v1081, %v958
        %v1124 = vsel %vm1118, %v1083, %v960
        %v1126 = vsel %vm1118, %v1085, %v962
        %v1128 = vsel %vm1118, %v1087, %v964
        %v1130 = vsel %vm1118, %v1089, %v966
        %v1132 = vsel %vm1118, %v1091, %v968
        %v1134 = vsel %vm1118, %v1093, %v970
        %v1136 = vsel %vm1118, %v1095, %v972
        %v1138 = vsel %vm1118, %v1097, %v974
        %v1140 = vsel %vm1118, %v1099, %v976
        %v1142 = vsel %vm1118, %v1101, %v978
        %v1144 = vsel %vm1118, %v1103, %v980
        %v1146 = vsel %vm1118, %v1105, %v982
        %v1148 = vsel %vm1118, %v1107, %v984
        %v1150 = vsel %vm1118, %v1109, %v986
        %v1152 = vsel %vm1118, %v1111, %v988
        %v1154 = vsel %vm1118, %v1113, %v990
        %v1156 = vsel %vm1118, %v1115, %v992
        %v1158 = vsel %vm1118, %v1117, %v994
        %v1159 = vld [vmem:[#allocation2] sm:$0xff]
        %v1160 = vld [vmem:[#allocation2 + $0x8] sm:$0xff]
        %v1161 = vld [vmem:[#allocation2 + $0x10] sm:$0xff]
        %v1162 = vld [vmem:[#allocation2 + $0x18] sm:$0xff]
        %v1163 = vld [vmem:[#allocation2 + $0x20] sm:$0xff]
        %v1164 = vld [vmem:[#allocation2 + $0x28] sm:$0xff]
        %v1165 = vld [vmem:[#allocation2 + $0x30] sm:$0xff]
        %v1166 = vld [vmem:[#allocation2 + $0x38] sm:$0xff]
        %v1167 = vld [vmem:[#allocation2 + $0x40] sm:$0xff]
        %v1168 = vld [vmem:[#allocation2 + $0x48] sm:$0xff]
        %v1169 = vld [vmem:[#allocation2 + $0x50] sm:$0xff]
        %v1170 = vld [vmem:[#allocation2 + $0x58] sm:$0xff]
        %v1171 = vld [vmem:[#allocation2 + $0x60] sm:$0xff]
        %v1172 = vld [vmem:[#allocation2 + $0x68] sm:$0xff]
        %v1173 = vld [vmem:[#allocation2 + $0x70] sm:$0xff]
        %v1174 = vld [vmem:[#allocation2 + $0x78] sm:$0xff]
        %v1175 = vld [vmem:[#allocation2 + $0x80] sm:$0xff]
        %v1176 = vld [vmem:[#allocation2 + $0x88] sm:$0xff]
        %v1177 = vld [vmem:[#allocation2 + $0x90] sm:$0xff]
        %v1178 = vld [vmem:[#allocation2 + $0x98] sm:$0xff]
        %v1179 = vld [vmem:[#allocation2 + $0xa0] sm:$0xff]
        %v1180 = vld [vmem:[#allocation2 + $0xa8] sm:$0xff]
        %v1181 = vld [vmem:[#allocation2 + $0xb0] sm:$0xff]
        %v1182 = vld [vmem:[#allocation2 + $0xb8] sm:$0xff]
        %v1183 = vld [vmem:[#allocation2 + $0xc0] sm:$0xff]
        %v1184 = vld [vmem:[#allocation2 + $0xc8] sm:$0xff]
        %v1185 = vld [vmem:[#allocation2 + $0xd0] sm:$0xff]
        %v1186 = vld [vmem:[#allocation2 + $0xd8] sm:$0xff]
        %v1187 = vld [vmem:[#allocation2 + $0xe0] sm:$0xff]
        %v1188 = vld [vmem:[#allocation2 + $0xe8] sm:$0xff]
        %v1189 = vld [vmem:[#allocation2 + $0xf0] sm:$0xff]
        %v1190 = vld [vmem:[#allocation2 + $0xf8] sm:$0xff]
        %v1191 = vld [vmem:[#allocation2 + $0x100] sm:$0xff]
        %v1192 = vld [vmem:[#allocation2 + $0x108] sm:$0xff]
        %v1193 = vld [vmem:[#allocation2 + $0x110] sm:$0xff]
        %v1194 = vld [vmem:[#allocation2 + $0x118] sm:$0xff]
        %v1195 = vld [vmem:[#allocation2 + $0x120] sm:$0xff]
        %v1196 = vld [vmem:[#allocation2 + $0x128] sm:$0xff]
        %v1197 = vld [vmem:[#allocation2 + $0x130] sm:$0xff]
        %v1198 = vld [vmem:[#allocation2 + $0x138] sm:$0xff]
        %v1199 = vld [vmem:[%s2] sm:$0xf]
        %v1200 = vld [vmem:[%s2 + $0x4] sm:$0xf]
        %v1201 = vld [vmem:[%s2 + $0x8] sm:$0x3]
        %v1205 = vunpack.c.l.b16 %v1199
        %v1206 = vunpack.c.l.b16 %v1200
        %v1207 = vunpack.c.l.b16 %v1201
        %v1208 = vpack.c.b16 %v1206, %v1205
        %v1209 = vpack.c.b16 %v1207, %v1207
        %vm1211 = vcmask 162816
        %v1212 = vsel %vm1211, %v1120, 0
        %v1214 = vsel %vm1211, %v1122, 0
        %v1216 = vsel %vm1211, %v1124, 0
        %v1218 = vsel %vm1211, %v1126, 0
        %v1220 = vsel %vm1211, %v1128, 0
        %v1222 = vsel %vm1211, %v1130, 0
        %v1224 = vsel %vm1211, %v1132, 0
        %v1226 = vsel %vm1211, %v1134, 0
        %v1228 = vsel %vm1211, %v1136, 0
        %v1230 = vsel %vm1211, %v1138, 0
        %v1232 = vsel %vm1211, %v1140, 0
        %v1234 = vsel %vm1211, %v1142, 0
        %v1236 = vsel %vm1211, %v1144, 0
        %v1238 = vsel %vm1211, %v1146, 0
        %v1240 = vsel %vm1211, %v1148, 0
        %v1242 = vsel %vm1211, %v1150, 0
        %v1244 = vsel %vm1211, %v1152, 0
        %v1246 = vsel %vm1211, %v1154, 0
        %v1248 = vsel %vm1211, %v1156, 0
        %v1250 = vsel %vm1211, %v1158, 0
        %vm1252 = vcmask 1041408
        %v1254 = vsel %vm1252, %v1209, 0
        %1256 = vmatprep.subr.bf16.mxu0 0
        %1257 = vmatpush1.bf16.msra.mxu0 %v1208
        %1258 = vmatprep.subr.bf16.mxu0 0
        %1259 = vmatpush1.bf16.msra.mxu0 %v1254
        %1260 = vmatprep.subr.bf16.mxu0 0
        %1261 = vmatpush1.bf16.msra.mxu0 0
        %1262 = vmatprep.subr.bf16.mxu0 0
        %1263 = vmatpush1.bf16.msra.mxu0 0
        %1264 = vmatprep.subr.bf16.mxu0 0
        %1265 = vmatpush1.bf16.msra.mxu0 0
        %1266 = vmatprep.subr.bf16.mxu0 0
        %1267 = vmatpush1.bf16.msra.mxu0 0
        %1268 = vmatprep.subr.bf16.mxu0 0
        %1269 = vmatpush1.bf16.msra.mxu0 0
        %1270 = vmatprep.subr.bf16.mxu0 0
        %1271 = vmatpush1.bf16.msra.mxu0 0
        %1272 = vmatprep.subr.bf16.mxu0 0
        %1273 = vmatpush1.bf16.msra.mxu0 0
        %1274 = vmatprep.subr.bf16.mxu0 0
        %1275 = vmatpush1.bf16.msra.mxu0 0
        %1276 = vmatprep.subr.bf16.mxu0 0
        %1277 = vmatpush1.bf16.msra.mxu0 0
        %1278 = vmatprep.subr.bf16.mxu0 0
        %1279 = vmatpush1.bf16.msra.mxu0 0
        %1280 = vmatprep.subr.bf16.mxu0 0
        %1281 = vmatpush1.bf16.msra.mxu0 0
        %1282 = vmatprep.subr.bf16.mxu0 0
        %1283 = vmatpush1.bf16.msra.mxu0 0
        %1284 = vmatprep.subr.bf16.mxu0 0
        %1285 = vmatpush1.bf16.msra.mxu0 0
        %1286 = vmatprep.subr.bf16.mxu0 0
        %1287 = vmatpush1.bf16.msra.mxu0 0
        %1288 = vmatprep.mubr.bf16.mxu0 0
        %1289 = vmatmul.mubr.bf16.gmra.mrb[0].mxu0 %v1212
        %v1290 = vpop.f32.mrb[0].mxu0
        %v1291 = vadd.f32 0.0, %v1290
        %v1292 = vpop.f32.mrb[0].mxu0
        %v1293 = vpop.f32.mrb[0].mxu0
        %v1294 = vadd.f32 0.0, %v1293
        %v1295 = vpop.f32.mrb[0].mxu0
        %1296 = vmatprep.mubr.bf16.mxu0 0
        %1297 = vmatmul.mubr.bf16.gmra.mrb[0].mxu0 %v1214
        %v1298 = vpop.f32.mrb[0].mxu0
        %v1299 = vadd.f32 0.0, %v1298
        %v1300 = vpop.f32.mrb[0].mxu0
        %v1301 = vpop.f32.mrb[0].mxu0
        %v1302 = vadd.f32 0.0, %v1301
        %v1303 = vpop.f32.mrb[0].mxu0
        %1304 = vmatprep.mubr.bf16.mxu0 0
        %1305 = vmatmul.mubr.bf16.gmra.mrb[0].mxu0 %v1216
        %v1306 = vpop.f32.mrb[0].mxu0
        %v1307 = vadd.f32 0.0, %v1306
        %v1308 = vpop.f32.mrb[0].mxu0
        %v1309 = vpop.f32.mrb[0].mxu0
        %v1310 = vadd.f32 0.0, %v1309
        %v1311 = vpop.f32.mrb[0].mxu0
        %1312 = vmatprep.mubr.bf16.mxu0 0
        %1313 = vmatmul.mubr.bf16.gmra.mrb[0].mxu0 %v1218
        %v1314 = vpop.f32.mrb[0].mxu0
        %v1315 = vadd.f32 0.0, %v1314
        %v1316 = vpop.f32.mrb[0].mxu0
        %v1317 = vpop.f32.mrb[0].mxu0
        %v1318 = vadd.f32 0.0, %v1317
        %v1319 = vpop.f32.mrb[0].mxu0
        %1320 = vmatprep.mubr.bf16.mxu0 0
        %1321 = vmatmul.mubr.bf16.gmra.mrb[0].mxu0 %v1220
        %v1322 = vpop.f32.mrb[0].mxu0
        %v1323 = vadd.f32 0.0, %v1322
        %v1324 = vpop.f32.mrb[0].mxu0
        %v1325 = vpop.f32.mrb[0].mxu0
        %v1326 = vadd.f32 0.0, %v1325
        %v1327 = vpop.f32.mrb[0].mxu0
        %1328 = vmatprep.mubr.bf16.mxu0 0
        %1329 = vmatmul.mubr.bf16.gmra.mrb[0].mxu0 %v1222
        %v1330 = vpop.f32.mrb[0].mxu0
        %v1331 = vadd.f32 0.0, %v1330
        %v1332 = vpop.f32.mrb[0].mxu0
        %v1333 = vpop.f32.mrb[0].mxu0
        %v1334 = vadd.f32 0.0, %v1333
        %v1335 = vpop.f32.mrb[0].mxu0
        %1336 = vmatprep.mubr.bf16.mxu0 0
        %1337 = vmatmul.mubr.bf16.gmra.mrb[0].mxu0 %v1224
        %v1338 = vpop.f32.mrb[0].mxu0
        %v1339 = vadd.f32 0.0, %v1338
        %v1340 = vpop.f32.mrb[0].mxu0
        %v1341 = vpop.f32.mrb[0].mxu0
        %v1342 = vadd.f32 0.0, %v1341
        %v1343 = vpop.f32.mrb[0].mxu0
        %1344 = vmatprep.mubr.bf16.mxu0 0
        %1345 = vmatmul.mubr.bf16.gmra.mrb[0].mxu0 %v1226
        %v1346 = vpop.f32.mrb[0].mxu0
        %v1347 = vadd.f32 0.0, %v1346
        %v1348 = vpop.f32.mrb[0].mxu0
        %v1349 = vpop.f32.mrb[0].mxu0
        %v1350 = vadd.f32 0.0, %v1349
        %v1351 = vpop.f32.mrb[0].mxu0
        %1352 = vmatprep.mubr.bf16.mxu0 0
        %1353 = vmatmul.mubr.bf16.gmra.mrb[0].mxu0 %v1228
        %v1354 = vpop.f32.mrb[0].mxu0
        %v1355 = vadd.f32 0.0, %v1354
        %v1356 = vpop.f32.mrb[0].mxu0
        %v1357 = vpop.f32.mrb[0].mxu0
        %v1358 = vadd.f32 0.0, %v1357
        %v1359 = vpop.f32.mrb[0].mxu0
        %1360 = vmatprep.mubr.bf16.mxu0 0
        %1361 = vmatmul.mubr.bf16.gmra.mrb[0].mxu0 %v1230
        %v1362 = vpop.f32.mrb[0].mxu0
        %v1363 = vadd.f32 0.0, %v1362
        %v1364 = vpop.f32.mrb[0].mxu0
        %v1365 = vpop.f32.mrb[0].mxu0
        %v1366 = vadd.f32 0.0, %v1365
        %v1367 = vpop.f32.mrb[0].mxu0
        %1368 = vmatprep.mubr.bf16.mxu0 0
        %1369 = vmatmul.mubr.bf16.gmra.mrb[0].mxu0 %v1232
        %v1370 = vpop.f32.mrb[0].mxu0
        %v1371 = vadd.f32 0.0, %v1370
        %v1372 = vpop.f32.mrb[0].mxu0
        %v1373 = vpop.f32.mrb[0].mxu0
        %v1374 = vadd.f32 0.0, %v1373
        %v1375 = vpop.f32.mrb[0].mxu0
        %1376 = vmatprep.mubr.bf16.mxu0 0
        %1377 = vmatmul.mubr.bf16.gmra.mrb[0].mxu0 %v1234
        %v1378 = vpop.f32.mrb[0].mxu0
        %v1379 = vadd.f32 0.0, %v1378
        %v1380 = vpop.f32.mrb[0].mxu0
        %v1381 = vpop.f32.mrb[0].mxu0
        %v1382 = vadd.f32 0.0, %v1381
        %v1383 = vpop.f32.mrb[0].mxu0
        %1384 = vmatprep.mubr.bf16.mxu0 0
        %1385 = vmatmul.mubr.bf16.gmra.mrb[0].mxu0 %v1236
        %v1386 = vpop.f32.mrb[0].mxu0
        %v1387 = vadd.f32 0.0, %v1386
        %v1388 = vpop.f32.mrb[0].mxu0
        %v1389 = vpop.f32.mrb[0].mxu0
        %v1390 = vadd.f32 0.0, %v1389
        %v1391 = vpop.f32.mrb[0].mxu0
        %1392 = vmatprep.mubr.bf16.mxu0 0
        %1393 = vmatmul.mubr.bf16.gmra.mrb[0].mxu0 %v1238
        %v1394 = vpop.f32.mrb[0].mxu0
        %v1395 = vadd.f32 0.0, %v1394
        %v1396 = vpop.f32.mrb[0].mxu0
        %v1397 = vpop.f32.mrb[0].mxu0
        %v1398 = vadd.f32 0.0, %v1397
        %v1399 = vpop.f32.mrb[0].mxu0
        %1400 = vmatprep.mubr.bf16.mxu0 0
        %1401 = vmatmul.mubr.bf16.gmra.mrb[0].mxu0 %v1240
        %v1402 = vpop.f32.mrb[0].mxu0
        %v1403 = vadd.f32 0.0, %v1402
        %v1404 = vpop.f32.mrb[0].mxu0
        %v1405 = vpop.f32.mrb[0].mxu0
        %v1406 = vadd.f32 0.0, %v1405
        %v1407 = vpop.f32.mrb[0].mxu0
        %1408 = vmatprep.mubr.bf16.mxu0 0
        %1409 = vmatmul.mubr.bf16.gmra.mrb[0].mxu0 %v1242
        %v1410 = vpop.f32.mrb[0].mxu0
        %v1411 = vadd.f32 0.0, %v1410
        %v1412 = vpop.f32.mrb[0].mxu0
        %v1413 = vpop.f32.mrb[0].mxu0
        %v1414 = vadd.f32 0.0, %v1413
        %v1415 = vpop.f32.mrb[0].mxu0
        %1416 = vmatprep.mubr.bf16.mxu0 0
        %1417 = vmatmul.mubr.bf16.gmra.mrb[0].mxu0 %v1244
        %v1418 = vpop.f32.mrb[0].mxu0
        %v1419 = vadd.f32 0.0, %v1418
        %v1420 = vpop.f32.mrb[0].mxu0
        %v1421 = vpop.f32.mrb[0].mxu0
        %v1422 = vadd.f32 0.0, %v1421
        %v1423 = vpop.f32.mrb[0].mxu0
        %1424 = vmatprep.mubr.bf16.mxu0 0
        %1425 = vmatmul.mubr.bf16.gmra.mrb[0].mxu0 %v1246
        %v1426 = vpop.f32.mrb[0].mxu0
        %v1427 = vadd.f32 0.0, %v1426
        %v1428 = vpop.f32.mrb[0].mxu0
        %v1429 = vpop.f32.mrb[0].mxu0
        %v1430 = vadd.f32 0.0, %v1429
        %v1431 = vpop.f32.mrb[0].mxu0
        %1432 = vmatprep.mubr.bf16.mxu0 0
        %1433 = vmatmul.mubr.bf16.gmra.mrb[0].mxu0 %v1248
        %v1434 = vpop.f32.mrb[0].mxu0
        %v1435 = vadd.f32 0.0, %v1434
        %v1436 = vpop.f32.mrb[0].mxu0
        %v1437 = vpop.f32.mrb[0].mxu0
        %v1438 = vadd.f32 0.0, %v1437
        %v1439 = vpop.f32.mrb[0].mxu0
        %1440 = vmatprep.mubr.bf16.mxu0 0
        %1441 = vmatmul.mubr.bf16.gmra.mrb[0].mxu0 %v1250
        %v1442 = vpop.f32.mrb[0].mxu0
        %v1443 = vadd.f32 0.0, %v1442
        %v1444 = vpop.f32.mrb[0].mxu0
        %v1445 = vpop.f32.mrb[0].mxu0
        %v1446 = vadd.f32 0.0, %v1445
        %v1447 = vpop.f32.mrb[0].mxu0
        %1448 = vdwg.mxu0
        %v1449 = vadd.f32 %v1159, %v1291
        %v1450 = vadd.f32 %v1160, %v1294
        %v1451 = vadd.f32 %v1161, %v1299
        %v1452 = vadd.f32 %v1162, %v1302
        %v1453 = vadd.f32 %v1163, %v1307
        %v1454 = vadd.f32 %v1164, %v1310
        %v1455 = vadd.f32 %v1165, %v1315
        %v1456 = vadd.f32 %v1166, %v1318
        %v1457 = vadd.f32 %v1167, %v1323
        %v1458 = vadd.f32 %v1168, %v1326
        %v1459 = vadd.f32 %v1169, %v1331
        %v1460 = vadd.f32 %v1170, %v1334
        %v1461 = vadd.f32 %v1171, %v1339
        %v1462 = vadd.f32 %v1172, %v1342
        %v1463 = vadd.f32 %v1173, %v1347
        %v1464 = vadd.f32 %v1174, %v1350
        %v1465 = vadd.f32 %v1175, %v1355
        %v1466 = vadd.f32 %v1176, %v1358
        %v1467 = vadd.f32 %v1177, %v1363
        %v1468 = vadd.f32 %v1178, %v1366
        %v1469 = vadd.f32 %v1179, %v1371
        %v1470 = vadd.f32 %v1180, %v1374
        %v1471 = vadd.f32 %v1181, %v1379
        %v1472 = vadd.f32 %v1182, %v1382
        %v1473 = vadd.f32 %v1183, %v1387
        %v1474 = vadd.f32 %v1184, %v1390
        %v1475 = vadd.f32 %v1185, %v1395
        %v1476 = vadd.f32 %v1186, %v1398
        %v1477 = vadd.f32 %v1187, %v1403
        %v1478 = vadd.f32 %v1188, %v1406
        %v1479 = vadd.f32 %v1189, %v1411
        %v1480 = vadd.f32 %v1190, %v1414
        %v1481 = vadd.f32 %v1191, %v1419
        %v1482 = vadd.f32 %v1192, %v1422
        %v1483 = vadd.f32 %v1193, %v1427
        %v1484 = vadd.f32 %v1194, %v1430
        %v1485 = vadd.f32 %v1195, %v1435
        %v1486 = vadd.f32 %v1196, %v1438
        %v1487 = vadd.f32 %v1197, %v1443
        %v1488 = vadd.f32 %v1198, %v1446
        %1489 = vst [vmem:[#allocation2] sm:$0xff] %v1449
        %1490 = vst [vmem:[#allocation2 + $0x8] sm:$0xff] %v1450
        %1491 = vst [vmem:[#allocation2 + $0x10] sm:$0xff] %v1451
        %1492 = vst [vmem:[#allocation2 + $0x18] sm:$0xff] %v1452
        %1493 = vst [vmem:[#allocation2 + $0x20] sm:$0xff] %v1453
        %1494 = vst [vmem:[#allocation2 + $0x28] sm:$0xff] %v1454
        %1495 = vst [vmem:[#allocation2 + $0x30] sm:$0xff] %v1455
        %1496 = vst [vmem:[#allocation2 + $0x38] sm:$0xff] %v1456
        %1497 = vst [vmem:[#allocation2 + $0x40] sm:$0xff] %v1457
        %1498 = vst [vmem:[#allocation2 + $0x48] sm:$0xff] %v1458
        %1499 = vst [vmem:[#allocation2 + $0x50] sm:$0xff] %v1459
        %1500 = vst [vmem:[#allocation2 + $0x58] sm:$0xff] %v1460
        %1501 = vst [vmem:[#allocation2 + $0x60] sm:$0xff] %v1461
        %1502 = vst [vmem:[#allocation2 + $0x68] sm:$0xff] %v1462
        %1503 = vst [vmem:[#allocation2 + $0x70] sm:$0xff] %v1463
        %1504 = vst [vmem:[#allocation2 + $0x78] sm:$0xff] %v1464
        %1505 = vst [vmem:[#allocation2 + $0x80] sm:$0xff] %v1465
        %1506 = vst [vmem:[#allocation2 + $0x88] sm:$0xff] %v1466
        %1507 = vst [vmem:[#allocation2 + $0x90] sm:$0xff] %v1467
        %1508 = vst [vmem:[#allocation2 + $0x98] sm:$0xff] %v1468
        %1509 = vst [vmem:[#allocation2 + $0xa0] sm:$0xff] %v1469
        %1510 = vst [vmem:[#allocation2 + $0xa8] sm:$0xff] %v1470
        %1511 = vst [vmem:[#allocation2 + $0xb0] sm:$0xff] %v1471
        %1512 = vst [vmem:[#allocation2 + $0xb8] sm:$0xff] %v1472
        %1513 = vst [vmem:[#allocation2 + $0xc0] sm:$0xff] %v1473
        %1514 = vst [vmem:[#allocation2 + $0xc8] sm:$0xff] %v1474
        %1515 = vst [vmem:[#allocation2 + $0xd0] sm:$0xff] %v1475
        %1516 = vst [vmem:[#allocation2 + $0xd8] sm:$0xff] %v1476
        %1517 = vst [vmem:[#allocation2 + $0xe0] sm:$0xff] %v1477
        %1518 = vst [vmem:[#allocation2 + $0xe8] sm:$0xff] %v1478
        %1519 = vst [vmem:[#allocation2 + $0xf0] sm:$0xff] %v1479
        %1520 = vst [vmem:[#allocation2 + $0xf8] sm:$0xff] %v1480
        %1521 = vst [vmem:[#allocation2 + $0x100] sm:$0xff] %v1481
        %1522 = vst [vmem:[#allocation2 + $0x108] sm:$0xff] %v1482
        %1523 = vst [vmem:[#allocation2 + $0x110] sm:$0xff] %v1483
        %1524 = vst [vmem:[#allocation2 + $0x118] sm:$0xff] %v1484
        %1525 = vst [vmem:[#allocation2 + $0x120] sm:$0xff] %v1485
        %1526 = vst [vmem:[#allocation2 + $0x128] sm:$0xff] %v1486
        %1527 = vst [vmem:[#allocation2 + $0x130] sm:$0xff] %v1487
        %1528 = vst [vmem:[#allocation2 + $0x138] sm:$0xff] %v1488
        %v1529 = vor.u32 %v867, %v663
        %v1531 = vshll.u32 %v448, 16
        %v1533 = vrot.slane %v1531, 1
        %v1534 = vsel %vm500, %v1529, %v1533
        %v1535 = vshrl.u32 %v448, 16
        %v1537 = vor.u32 %v1535, %v1533
        %1538 = vrot.lane.b32.xlu0 %v1534, 4
        %v1539 = vpop.permute.xlu0 %1538
        %1540 = vrot.lane.b32.xlu0 %v1537, 4
        %v1541 = vpop.permute.xlu0 %1540
        %v1542 = vrot.slane %v448, 1
        %v1543 = vsel %vm705, %v745, %v1542
        %1544 = vrot.lane.b32.xlu0 %v1543, 8
        %v1545 = vpop.permute.xlu0 %1544
        %1546 = vrot.lane.b32.xlu0 %v1542, 8
        %v1547 = vpop.permute.xlu0 %1546
        %v1548 = vrot.slane %v1535, 1
        %v1549 = vrot.slane %v1531, 2
        %v1550 = vor.u32 %v1548, %v1549
        %v1551 = vsel %vm787, %v871, %v1550
        %1552 = vrot.lane.b32.xlu0 %v1551, 12
        %v1553 = vpop.permute.xlu0 %1552
        %1554 = vrot.lane.b32.xlu0 %v1550, 12
        %v1555 = vpop.permute.xlu0 %1554
        %v1556 = vrot.slane %v448, 2
        %v1557 = vsel %vm913, %v953, %v1556
        %1558 = vrot.lane.b32.xlu0 %v1557, 16
        %v1559 = vpop.permute.xlu0 %1558
        %1560 = vrot.lane.b32.xlu0 %v1556, 16
        %v1561 = vpop.permute.xlu0 %1560
        %v1563 = vsel %vm995, %v447, %v1539
        %v1565 = vsel %vm995, %v448, %v1541
        %v1567 = vsel %vm1036, %v1563, %v1545
        %v1569 = vsel %vm1036, %v1565, %v1547
        %v1571 = vsel %vm1077, %v1567, %v1553
        %v1573 = vsel %vm1077, %v1569, %v1555
        %v1575 = vsel %vm1118, %v1571, %v1559
        %v1577 = vsel %vm1118, %v1573, %v1561
        %v1578 = vld [vmem:[#allocation2] sm:$0xff]
        %v1579 = vld [vmem:[#allocation2 + $0x8] sm:$0xff]
        %v1580 = vld [vmem:[#allocation2 + $0x10] sm:$0xff]
        %v1581 = vld [vmem:[#allocation2 + $0x18] sm:$0xff]
        %v1582 = vld [vmem:[#allocation2 + $0x20] sm:$0xff]
        %v1583 = vld [vmem:[#allocation2 + $0x28] sm:$0xff]
        %v1584 = vld [vmem:[#allocation2 + $0x30] sm:$0xff]
        %v1585 = vld [vmem:[#allocation2 + $0x38] sm:$0xff]
        %v1586 = vld [vmem:[#allocation2 + $0x40] sm:$0xff]
        %v1587 = vld [vmem:[#allocation2 + $0x48] sm:$0xff]
        %v1588 = vld [vmem:[#allocation2 + $0x50] sm:$0xff]
        %v1589 = vld [vmem:[#allocation2 + $0x58] sm:$0xff]
        %v1590 = vld [vmem:[#allocation2 + $0x60] sm:$0xff]
        %v1591 = vld [vmem:[#allocation2 + $0x68] sm:$0xff]
        %v1592 = vld [vmem:[#allocation2 + $0x70] sm:$0xff]
        %v1593 = vld [vmem:[#allocation2 + $0x78] sm:$0xff]
        %v1594 = vld [vmem:[#allocation2 + $0x80] sm:$0xff]
        %v1595 = vld [vmem:[#allocation2 + $0x88] sm:$0xff]
        %v1596 = vld [vmem:[#allocation2 + $0x90] sm:$0xff]
        %v1597 = vld [vmem:[#allocation2 + $0x98] sm:$0xff]
        %v1598 = vld [vmem:[#allocation2 + $0xa0] sm:$0xff]
        %v1599 = vld [vmem:[#allocation2 + $0xa8] sm:$0xff]
        %v1600 = vld [vmem:[#allocation2 + $0xb0] sm:$0xff]
        %v1601 = vld [vmem:[#allocation2 + $0xb8] sm:$0xff]
        %v1602 = vld [vmem:[#allocation2 + $0xc0] sm:$0xff]
        %v1603 = vld [vmem:[#allocation2 + $0xc8] sm:$0xff]
        %v1604 = vld [vmem:[#allocation2 + $0xd0] sm:$0xff]
        %v1605 = vld [vmem:[#allocation2 + $0xd8] sm:$0xff]
        %v1606 = vld [vmem:[#allocation2 + $0xe0] sm:$0xff]
        %v1607 = vld [vmem:[#allocation2 + $0xe8] sm:$0xff]
        %v1608 = vld [vmem:[#allocation2 + $0xf0] sm:$0xff]
        %v1609 = vld [vmem:[#allocation2 + $0xf8] sm:$0xff]
        %v1610 = vld [vmem:[#allocation2 + $0x100] sm:$0xff]
        %v1611 = vld [vmem:[#allocation2 + $0x108] sm:$0xff]
        %v1612 = vld [vmem:[#allocation2 + $0x110] sm:$0xff]
        %v1613 = vld [vmem:[#allocation2 + $0x118] sm:$0xff]
        %v1614 = vld [vmem:[#allocation2 + $0x120] sm:$0xff]
        %v1615 = vld [vmem:[#allocation2 + $0x128] sm:$0xff]
        %v1616 = vld [vmem:[#allocation2 + $0x130] sm:$0xff]
        %v1617 = vld [vmem:[#allocation2 + $0x138] sm:$0xff]
        %s1618 = scalar_lea.vmem %s2, 12
        %v1619 = vld [vmem:[%s1618] sm:$0xf]
        %v1620 = vld [vmem:[%s1618 + $0x4] sm:$0xf]
        %v1621 = vld [vmem:[%s1618 + $0x8] sm:$0x3]
        %v1643 = vrot.slane %v1122, 2
        %v1644 = vrot.slane %v1124, 2
        %v1645 = vsel %vm913, %v1643, %v1644
        %v1646 = vrot.slane %v1126, 2
        %v1647 = vsel %vm913, %v1644, %v1646
        %v1648 = vrot.slane %v1128, 2
        %v1649 = vsel %vm913, %v1646, %v1648
        %v1650 = vrot.slane %v1130, 2
        %v1651 = vsel %vm913, %v1648, %v1650
        %v1652 = vrot.slane %v1132, 2
        %v1653 = vsel %vm913, %v1650, %v1652
        %v1654 = vrot.slane %v1134, 2
        %v1655 = vsel %vm913, %v1652, %v1654
        %v1656 = vrot.slane %v1136, 2
        %v1657 = vsel %vm913, %v1654, %v1656
        %v1658 = vrot.slane %v1138, 2
        %v1659 = vsel %vm913, %v1656, %v1658
        %v1660 = vrot.slane %v1140, 2
        %v1661 = vsel %vm913, %v1658, %v1660
        %v1662 = vrot.slane %v1142, 2
        %v1663 = vsel %vm913, %v1660, %v1662
        %v1664 = vrot.slane %v1144, 2
        %v1665 = vsel %vm913, %v1662, %v1664
        %v1666 = vrot.slane %v1146, 2
        %v1667 = vsel %vm913, %v1664, %v1666
        %v1668 = vrot.slane %v1148, 2
        %v1669 = vsel %vm913, %v1666, %v1668
        %v1670 = vrot.slane %v1150, 2
        %v1671 = vsel %vm913, %v1668, %v1670
        %v1672 = vrot.slane %v1152, 2
        %v1673 = vsel %vm913, %v1670, %v1672
        %v1674 = vrot.slane %v1154, 2
        %v1675 = vsel %vm913, %v1672, %v1674
        %v1676 = vrot.slane %v1156, 2
        %v1677 = vsel %vm913, %v1674, %v1676
        %v1678 = vrot.slane %v1158, 2
        %v1679 = vsel %vm913, %v1676, %v1678
        %v1680 = vrot.slane %v1575, 2
        %v1681 = vsel %vm913, %v1678, %v1680
        %v1682 = vrot.slane %v1577, 2
        %v1683 = vsel %vm913, %v1680, %v1682
        %v1687 = vunpack.c.l.b16 %v1619
        %v1688 = vunpack.c.l.b16 %v1620
        %v1689 = vunpack.c.l.b16 %v1621
        %v1690 = vpack.c.b16 %v1688, %v1687
        %v1691 = vpack.c.b16 %v1689, %v1689
        %v1694 = vsel %vm1211, %v1645, 0
        %v1697 = vsel %vm1211, %v1647, 0
        %v1700 = vsel %vm1211, %v1649, 0
        %v1703 = vsel %vm1211, %v1651, 0
        %v1706 = vsel %vm1211, %v1653, 0
        %v1709 = vsel %vm1211, %v1655, 0
        %v1712 = vsel %vm1211, %v1657, 0
        %v1715 = vsel %vm1211, %v1659, 0
        %v1718 = vsel %vm1211, %v1661, 0
        %v1721 = vsel %vm1211, %v1663, 0
        %v1724 = vsel %vm1211, %v1665, 0
        %v1727 = vsel %vm1211, %v1667, 0
        %v1730 = vsel %vm1211, %v1669, 0
        %v1733 = vsel %vm1211, %v1671, 0
        %v1736 = vsel %vm1211, %v1673, 0
        %v1739 = vsel %vm1211, %v1675, 0
        %v1742 = vsel %vm1211, %v1677, 0
        %v1745 = vsel %vm1211, %v1679, 0
        %v1748 = vsel %vm1211, %v1681, 0
        %v1751 = vsel %vm1211, %v1683, 0
        %v1754 = vsel %vm1252, %v1691, 0
        %1756 = vmatprep.subr.bf16.mxu0 0
        %1757 = vmatpush1.bf16.msra.mxu0 %v1690
        %1758 = vmatprep.subr.bf16.mxu0 0
        %1759 = vmatpush1.bf16.msra.mxu0 %v1754
        %1760 = vmatprep.subr.bf16.mxu0 0
        %1761 = vmatpush1.bf16.msra.mxu0 0
        %1762 = vmatprep.subr.bf16.mxu0 0
        %1763 = vmatpush1.bf16.msra.mxu0 0
        %1764 = vmatprep.subr.bf16.mxu0 0
        %1765 = vmatpush1.bf16.msra.mxu0 0
        %1766 = vmatprep.subr.bf16.mxu0 0
        %1767 = vmatpush1.bf16.msra.mxu0 0
        %1768 = vmatprep.subr.bf16.mxu0 0
        %1769 = vmatpush1.bf16.msra.mxu0 0
        %1770 = vmatprep.subr.bf16.mxu0 0
        %1771 = vmatpush1.bf16.msra.mxu0 0
        %1772 = vmatprep.subr.bf16.mxu0 0
        %1773 = vmatpush1.bf16.msra.mxu0 0
        %1774 = vmatprep.subr.bf16.mxu0 0
        %1775 = vmatpush1.bf16.msra.mxu0 0
        %1776 = vmatprep.subr.bf16.mxu0 0
        %1777 = vmatpush1.bf16.msra.mxu0 0
        %1778 = vmatprep.subr.bf16.mxu0 0
        %1779 = vmatpush1.bf16.msra.mxu0 0
        %1780 = vmatprep.subr.bf16.mxu0 0
        %1781 = vmatpush1.bf16.msra.mxu0 0
        %1782 = vmatprep.subr.bf16.mxu0 0
        %1783 = vmatpush1.bf16.msra.mxu0 0
        %1784 = vmatprep.subr.bf16.mxu0 0
        %1785 = vmatpush1.bf16.msra.mxu0 0
        %1786 = vmatprep.subr.bf16.mxu0 0
        %1787 = vmatpush1.bf16.msra.mxu0 0
        %1788 = vmatprep.mubr.bf16.mxu0 0
        %1789 = vmatmul.mubr.bf16.gmra.mrb[0].mxu0 %v1694
        %v1790 = vpop.f32.mrb[0].mxu0
        %v1791 = vadd.f32 0.0, %v1790
        %v1792 = vpop.f32.mrb[0].mxu0
        %v1793 = vpop.f32.mrb[0].mxu0
        %v1794 = vadd.f32 0.0, %v1793
        %v1795 = vpop.f32.mrb[0].mxu0
        %1796 = vmatprep.mubr.bf16.mxu0 0
        %1797 = vmatmul.mubr.bf16.gmra.mrb[0].mxu0 %v1697
        %v1798 = vpop.f32.mrb[0].mxu0
        %v1799 = vadd.f32 0.0, %v1798
        %v1800 = vpop.f32.mrb[0].mxu0
        %v1801 = vpop.f32.mrb[0].mxu0
        %v1802 = vadd.f32 0.0, %v1801
        %v1803 = vpop.f32.mrb[0].mxu0
        %1804 = vmatprep.mubr.bf16.mxu0 0
        %1805 = vmatmul.mubr.bf16.gmra.mrb[0].mxu0 %v1700
        %v1806 = vpop.f32.mrb[0].mxu0
        %v1807 = vadd.f32 0.0, %v1806
        %v1808 = vpop.f32.mrb[0].mxu0
        %v1809 = vpop.f32.mrb[0].mxu0
        %v1810 = vadd.f32 0.0, %v1809
        %v1811 = vpop.f32.mrb[0].mxu0
        %1812 = vmatprep.mubr.bf16.mxu0 0
        %1813 = vmatmul.mubr.bf16.gmra.mrb[0].mxu0 %v1703
        %v1814 = vpop.f32.mrb[0].mxu0
        %v1815 = vadd.f32 0.0, %v1814
        %v1816 = vpop.f32.mrb[0].mxu0
        %v1817 = vpop.f32.mrb[0].mxu0
        %v1818 = vadd.f32 0.0, %v1817
        %v1819 = vpop.f32.mrb[0].mxu0
        %1820 = vmatprep.mubr.bf16.mxu0 0
        %1821 = vmatmul.mubr.bf16.gmra.mrb[0].mxu0 %v1706
        %v1822 = vpop.f32.mrb[0].mxu0
        %v1823 = vadd.f32 0.0, %v1822
        %v1824 = vpop.f32.mrb[0].mxu0
        %v1825 = vpop.f32.mrb[0].mxu0
        %v1826 = vadd.f32 0.0, %v1825
        %v1827 = vpop.f32.mrb[0].mxu0
        %1828 = vmatprep.mubr.bf16.mxu0 0
        %1829 = vmatmul.mubr.bf16.gmra.mrb[0].mxu0 %v1709
        %v1830 = vpop.f32.mrb[0].mxu0
        %v1831 = vadd.f32 0.0, %v1830
        %v1832 = vpop.f32.mrb[0].mxu0
        %v1833 = vpop.f32.mrb[0].mxu0
        %v1834 = vadd.f32 0.0, %v1833
        %v1835 = vpop.f32.mrb[0].mxu0
        %1836 = vmatprep.mubr.bf16.mxu0 0
        %1837 = vmatmul.mubr.bf16.gmra.mrb[0].mxu0 %v1712
        %v1838 = vpop.f32.mrb[0].mxu0
        %v1839 = vadd.f32 0.0, %v1838
        %v1840 = vpop.f32.mrb[0].mxu0
        %v1841 = vpop.f32.mrb[0].mxu0
        %v1842 = vadd.f32 0.0, %v1841
        %v1843 = vpop.f32.mrb[0].mxu0
        %1844 = vmatprep.mubr.bf16.mxu0 0
        %1845 = vmatmul.mubr.bf16.gmra.mrb[0].mxu0 %v1715
        %v1846 = vpop.f32.mrb[0].mxu0
        %v1847 = vadd.f32 0.0, %v1846
        %v1848 = vpop.f32.mrb[0].mxu0
        %v1849 = vpop.f32.mrb[0].mxu0
        %v1850 = vadd.f32 0.0, %v1849
        %v1851 = vpop.f32.mrb[0].mxu0
        %1852 = vmatprep.mubr.bf16.mxu0 0
        %1853 = vmatmul.mubr.bf16.gmra.mrb[0].mxu0 %v1718
        %v1854 = vpop.f32.mrb[0].mxu0
        %v1855 = vadd.f32 0.0, %v1854
        %v1856 = vpop.f32.mrb[0].mxu0
        %v1857 = vpop.f32.mrb[0].mxu0
        %v1858 = vadd.f32 0.0, %v1857
        %v1859 = vpop.f32.mrb[0].mxu0
        %1860 = vmatprep.mubr.bf16.mxu0 0
        %1861 = vmatmul.mubr.bf16.gmra.mrb[0].mxu0 %v1721
        %v1862 = vpop.f32.mrb[0].mxu0
        %v1863 = vadd.f32 0.0, %v1862
        %v1864 = vpop.f32.mrb[0].mxu0
        %v1865 = vpop.f32.mrb[0].mxu0
        %v1866 = vadd.f32 0.0, %v1865
        %v1867 = vpop.f32.mrb[0].mxu0
        %1868 = vmatprep.mubr.bf16.mxu0 0
        %1869 = vmatmul.mubr.bf16.gmra.mrb[0].mxu0 %v1724
        %v1870 = vpop.f32.mrb[0].mxu0
        %v1871 = vadd.f32 0.0, %v1870
        %v1872 = vpop.f32.mrb[0].mxu0
        %v1873 = vpop.f32.mrb[0].mxu0
        %v1874 = vadd.f32 0.0, %v1873
        %v1875 = vpop.f32.mrb[0].mxu0
        %1876 = vmatprep.mubr.bf16.mxu0 0
        %1877 = vmatmul.mubr.bf16.gmra.mrb[0].mxu0 %v1727
        %v1878 = vpop.f32.mrb[0].mxu0
        %v1879 = vadd.f32 0.0, %v1878
        %v1880 = vpop.f32.mrb[0].mxu0
        %v1881 = vpop.f32.mrb[0].mxu0
        %v1882 = vadd.f32 0.0, %v1881
        %v1883 = vpop.f32.mrb[0].mxu0
        %1884 = vmatprep.mubr.bf16.mxu0 0
        %1885 = vmatmul.mubr.bf16.gmra.mrb[0].mxu0 %v1730
        %v1886 = vpop.f32.mrb[0].mxu0
        %v1887 = vadd.f32 0.0, %v1886
        %v1888 = vpop.f32.mrb[0].mxu0
        %v1889 = vpop.f32.mrb[0].mxu0
        %v1890 = vadd.f32 0.0, %v1889
        %v1891 = vpop.f32.mrb[0].mxu0
        %1892 = vmatprep.mubr.bf16.mxu0 0
        %1893 = vmatmul.mubr.bf16.gmra.mrb[0].mxu0 %v1733
        %v1894 = vpop.f32.mrb[0].mxu0
        %v1895 = vadd.f32 0.0, %v1894
        %v1896 = vpop.f32.mrb[0].mxu0
        %v1897 = vpop.f32.mrb[0].mxu0
        %v1898 = vadd.f32 0.0, %v1897
        %v1899 = vpop.f32.mrb[0].mxu0
        %1900 = vmatprep.mubr.bf16.mxu0 0
        %1901 = vmatmul.mubr.bf16.gmra.mrb[0].mxu0 %v1736
        %v1902 = vpop.f32.mrb[0].mxu0
        %v1903 = vadd.f32 0.0, %v1902
        %v1904 = vpop.f32.mrb[0].mxu0
        %v1905 = vpop.f32.mrb[0].mxu0
        %v1906 = vadd.f32 0.0, %v1905
        %v1907 = vpop.f32.mrb[0].mxu0
        %1908 = vmatprep.mubr.bf16.mxu0 0
        %1909 = vmatmul.mubr.bf16.gmra.mrb[0].mxu0 %v1739
        %v1910 = vpop.f32.mrb[0].mxu0
        %v1911 = vadd.f32 0.0, %v1910
        %v1912 = vpop.f32.mrb[0].mxu0
        %v1913 = vpop.f32.mrb[0].mxu0
        %v1914 = vadd.f32 0.0, %v1913
        %v1915 = vpop.f32.mrb[0].mxu0
        %1916 = vmatprep.mubr.bf16.mxu0 0
        %1917 = vmatmul.mubr.bf16.gmra.mrb[0].mxu0 %v1742
        %v1918 = vpop.f32.mrb[0].mxu0
        %v1919 = vadd.f32 0.0, %v1918
        %v1920 = vpop.f32.mrb[0].mxu0
        %v1921 = vpop.f32.mrb[0].mxu0
        %v1922 = vadd.f32 0.0, %v1921
        %v1923 = vpop.f32.mrb[0].mxu0
        %1924 = vmatprep.mubr.bf16.mxu0 0
        %1925 = vmatmul.mubr.bf16.gmra.mrb[0].mxu0 %v1745
        %v1926 = vpop.f32.mrb[0].mxu0
        %v1927 = vadd.f32 0.0, %v1926
        %v1928 = vpop.f32.mrb[0].mxu0
        %v1929 = vpop.f32.mrb[0].mxu0
        %v1930 = vadd.f32 0.0, %v1929
        %v1931 = vpop.f32.mrb[0].mxu0
        %1932 = vmatprep.mubr.bf16.mxu0 0
        %1933 = vmatmul.mubr.bf16.gmra.mrb[0].mxu0 %v1748
        %v1934 = vpop.f32.mrb[0].mxu0
        %v1935 = vadd.f32 0.0, %v1934
        %v1936 = vpop.f32.mrb[0].mxu0
        %v1937 = vpop.f32.mrb[0].mxu0
        %v1938 = vadd.f32 0.0, %v1937
        %v1939 = vpop.f32.mrb[0].mxu0
        %1940 = vmatprep.mubr.bf16.mxu0 0
        %1941 = vmatmul.mubr.bf16.gmra.mrb[0].mxu0 %v1751
        %v1942 = vpop.f32.mrb[0].mxu0
        %v1943 = vadd.f32 0.0, %v1942
        %v1944 = vpop.f32.mrb[0].mxu0
        %v1945 = vpop.f32.mrb[0].mxu0
        %v1946 = vadd.f32 0.0, %v1945
        %v1947 = vpop.f32.mrb[0].mxu0
        %1948 = vdwg.mxu0
        %v1949 = vadd.f32 %v1578, %v1791
        %v1950 = vadd.f32 %v1579, %v1794
        %v1951 = vadd.f32 %v1580, %v1799
        %v1952 = vadd.f32 %v1581, %v1802
        %v1953 = vadd.f32 %v1582, %v1807
        %v1954 = vadd.f32 %v1583, %v1810
        %v1955 = vadd.f32 %v1584, %v1815
        %v1956 = vadd.f32 %v1585, %v1818
        %v1957 = vadd.f32 %v1586, %v1823
        %v1958 = vadd.f32 %v1587, %v1826
        %v1959 = vadd.f32 %v1588, %v1831
        %v1960 = vadd.f32 %v1589, %v1834
        %v1961 = vadd.f32 %v1590, %v1839
        %v1962 = vadd.f32 %v1591, %v1842
        %v1963 = vadd.f32 %v1592, %v1847
        %v1964 = vadd.f32 %v1593, %v1850
        %v1965 = vadd.f32 %v1594, %v1855
        %v1966 = vadd.f32 %v1595, %v1858
        %v1967 = vadd.f32 %v1596, %v1863
        %v1968 = vadd.f32 %v1597, %v1866
        %v1969 = vadd.f32 %v1598, %v1871
        %v1970 = vadd.f32 %v1599, %v1874
        %v1971 = vadd.f32 %v1600, %v1879
        %v1972 = vadd.f32 %v1601, %v1882
        %v1973 = vadd.f32 %v1602, %v1887
        %v1974 = vadd.f32 %v1603, %v1890
        %v1975 = vadd.f32 %v1604, %v1895
        %v1976 = vadd.f32 %v1605, %v1898
        %v1977 = vadd.f32 %v1606, %v1903
        %v1978 = vadd.f32 %v1607, %v1906
        %v1979 = vadd.f32 %v1608, %v1911
        %v1980 = vadd.f32 %v1609, %v1914
        %v1981 = vadd.f32 %v1610, %v1919
        %v1982 = vadd.f32 %v1611, %v1922
        %v1983 = vadd.f32 %v1612, %v1927
        %v1984 = vadd.f32 %v1613, %v1930
        %v1985 = vadd.f32 %v1614, %v1935
        %v1986 = vadd.f32 %v1615, %v1938
        %v1987 = vadd.f32 %v1616, %v1943
        %v1988 = vadd.f32 %v1617, %v1946
        %1989 = vst [vmem:[#allocation2] sm:$0xff] %v1949
        %1990 = vst [vmem:[#allocation2 + $0x8] sm:$0xff] %v1950
        %1991 = vst [vmem:[#allocation2 + $0x10] sm:$0xff] %v1951
        %1992 = vst [vmem:[#allocation2 + $0x18] sm:$0xff] %v1952
        %1993 = vst [vmem:[#allocation2 + $0x20] sm:$0xff] %v1953
        %1994 = vst [vmem:[#allocation2 + $0x28] sm:$0xff] %v1954
        %1995 = vst [vmem:[#allocation2 + $0x30] sm:$0xff] %v1955
        %1996 = vst [vmem:[#allocation2 + $0x38] sm:$0xff] %v1956
        %1997 = vst [vmem:[#allocation2 + $0x40] sm:$0xff] %v1957
        %1998 = vst [vmem:[#allocation2 + $0x48] sm:$0xff] %v1958
        %1999 = vst [vmem:[#allocation2 + $0x50] sm:$0xff] %v1959
        %2000 = vst [vmem:[#allocation2 + $0x58] sm:$0xff] %v1960
        %2001 = vst [vmem:[#allocation2 + $0x60] sm:$0xff] %v1961
        %2002 = vst [vmem:[#allocation2 + $0x68] sm:$0xff] %v1962
        %2003 = vst [vmem:[#allocation2 + $0x70] sm:$0xff] %v1963
        %2004 = vst [vmem:[#allocation2 + $0x78] sm:$0xff] %v1964
        %2005 = vst [vmem:[#allocation2 + $0x80] sm:$0xff] %v1965
        %2006 = vst [vmem:[#allocation2 + $0x88] sm:$0xff] %v1966
        %2007 = vst [vmem:[#allocation2 + $0x90] sm:$0xff] %v1967
        %2008 = vst [vmem:[#allocation2 + $0x98] sm:$0xff] %v1968
        %2009 = vst [vmem:[#allocation2 + $0xa0] sm:$0xff] %v1969
        %2010 = vst [vmem:[#allocation2 + $0xa8] sm:$0xff] %v1970
        %2011 = vst [vmem:[#allocation2 + $0xb0] sm:$0xff] %v1971
        %2012 = vst [vmem:[#allocation2 + $0xb8] sm:$0xff] %v1972
        %2013 = vst [vmem:[#allocation2 + $0xc0] sm:$0xff] %v1973
        %2014 = vst [vmem:[#allocation2 + $0xc8] sm:$0xff] %v1974
        %2015 = vst [vmem:[#allocation2 + $0xd0] sm:$0xff] %v1975
        %2016 = vst [vmem:[#allocation2 + $0xd8] sm:$0xff] %v1976
        %2017 = vst [vmem:[#allocation2 + $0xe0] sm:$0xff] %v1977
        %2018 = vst [vmem:[#allocation2 + $0xe8] sm:$0xff] %v1978
        %2019 = vst [vmem:[#allocation2 + $0xf0] sm:$0xff] %v1979
        %2020 = vst [vmem:[#allocation2 + $0xf8] sm:$0xff] %v1980
        %2021 = vst [vmem:[#allocation2 + $0x100] sm:$0xff] %v1981
        %2022 = vst [vmem:[#allocation2 + $0x108] sm:$0xff] %v1982
        %2023 = vst [vmem:[#allocation2 + $0x110] sm:$0xff] %v1983
        %2024 = vst [vmem:[#allocation2 + $0x118] sm:$0xff] %v1984
        %2025 = vst [vmem:[#allocation2 + $0x120] sm:$0xff] %v1985
        %2026 = vst [vmem:[#allocation2 + $0x128] sm:$0xff] %v1986
        %2027 = vst [vmem:[#allocation2 + $0x130] sm:$0xff] %v1987
        %2028 = vst [vmem:[#allocation2 + $0x138] sm:$0xff] %v1988
        %v2030 = vshll.u32 %v449, 16
        %v2032 = vrot.slane %v2030, 1
        %v2033 = vsel %vm500, %v1537, %v2032
        %v2034 = vshrl.u32 %v449, 16
        %v2036 = vor.u32 %v2034, %v2032
        %2037 = vrot.lane.b32.xlu0 %v2033, 4
        %v2038 = vpop.permute.xlu0 %2037
        %2039 = vrot.lane.b32.xlu0 %v2036, 4
        %v2040 = vpop.permute.xlu0 %2039
        %v2041 = vrot.slane %v449, 1
        %v2042 = vsel %vm705, %v1542, %v2041
        %2043 = vrot.lane.b32.xlu0 %v2042, 8
        %v2044 = vpop.permute.xlu0 %2043
        %2045 = vrot.lane.b32.xlu0 %v2041, 8
        %v2046 = vpop.permute.xlu0 %2045
        %v2047 = vrot.slane %v2034, 1
        %v2048 = vrot.slane %v2030, 2
        %v2049 = vor.u32 %v2047, %v2048
        %v2050 = vsel %vm787, %v1550, %v2049
        %2051 = vrot.lane.b32.xlu0 %v2050, 12
        %v2052 = vpop.permute.xlu0 %2051
        %2053 = vrot.lane.b32.xlu0 %v2049, 12
        %v2054 = vpop.permute.xlu0 %2053
        %v2055 = vrot.slane %v449, 2
        %v2056 = vsel %vm913, %v1556, %v2055
        %2057 = vrot.lane.b32.xlu0 %v2056, 16
        %v2058 = vpop.permute.xlu0 %2057
        %2059 = vrot.lane.b32.xlu0 %v2055, 16
        %v2060 = vpop.permute.xlu0 %2059
        %v2062 = vsel %vm995, %v448, %v2038
        %v2064 = vsel %vm995, %v449, %v2040
        %v2066 = vsel %vm1036, %v2062, %v2044
        %v2068 = vsel %vm1036, %v2064, %v2046
        %v2070 = vsel %vm1077, %v2066, %v2052
        %v2072 = vsel %vm1077, %v2068, %v2054
        %v2074 = vsel %vm1118, %v2070, %v2058
        %v2076 = vsel %vm1118, %v2072, %v2060
        %v2077 = vld [vmem:[#allocation2] sm:$0xff]
        %v2078 = vld [vmem:[#allocation2 + $0x8] sm:$0xff]
        %v2079 = vld [vmem:[#allocation2 + $0x10] sm:$0xff]
        %v2080 = vld [vmem:[#allocation2 + $0x18] sm:$0xff]
        %v2081 = vld [vmem:[#allocation2 + $0x20] sm:$0xff]
        %v2082 = vld [vmem:[#allocation2 + $0x28] sm:$0xff]
        %v2083 = vld [vmem:[#allocation2 + $0x30] sm:$0xff]
        %v2084 = vld [vmem:[#allocation2 + $0x38] sm:$0xff]
        %v2085 = vld [vmem:[#allocation2 + $0x40] sm:$0xff]
        %v2086 = vld [vmem:[#allocation2 + $0x48] sm:$0xff]
        %v2087 = vld [vmem:[#allocation2 + $0x50] sm:$0xff]
        %v2088 = vld [vmem:[#allocation2 + $0x58] sm:$0xff]
        %v2089 = vld [vmem:[#allocation2 + $0x60] sm:$0xff]
        %v2090 = vld [vmem:[#allocation2 + $0x68] sm:$0xff]
        %v2091 = vld [vmem:[#allocation2 + $0x70] sm:$0xff]
        %v2092 = vld [vmem:[#allocation2 + $0x78] sm:$0xff]
        %v2093 = vld [vmem:[#allocation2 + $0x80] sm:$0xff]
        %v2094 = vld [vmem:[#allocation2 + $0x88] sm:$0xff]
        %v2095 = vld [vmem:[#allocation2 + $0x90] sm:$0xff]
        %v2096 = vld [vmem:[#allocation2 + $0x98] sm:$0xff]
        %v2097 = vld [vmem:[#allocation2 + $0xa0] sm:$0xff]
        %v2098 = vld [vmem:[#allocation2 + $0xa8] sm:$0xff]
        %v2099 = vld [vmem:[#allocation2 + $0xb0] sm:$0xff]
        %v2100 = vld [vmem:[#allocation2 + $0xb8] sm:$0xff]
        %v2101 = vld [vmem:[#allocation2 + $0xc0] sm:$0xff]
        %v2102 = vld [vmem:[#allocation2 + $0xc8] sm:$0xff]
        %v2103 = vld [vmem:[#allocation2 + $0xd0] sm:$0xff]
        %v2104 = vld [vmem:[#allocation2 + $0xd8] sm:$0xff]
        %v2105 = vld [vmem:[#allocation2 + $0xe0] sm:$0xff]
        %v2106 = vld [vmem:[#allocation2 + $0xe8] sm:$0xff]
        %v2107 = vld [vmem:[#allocation2 + $0xf0] sm:$0xff]
        %v2108 = vld [vmem:[#allocation2 + $0xf8] sm:$0xff]
        %v2109 = vld [vmem:[#allocation2 + $0x100] sm:$0xff]
        %v2110 = vld [vmem:[#allocation2 + $0x108] sm:$0xff]
        %v2111 = vld [vmem:[#allocation2 + $0x110] sm:$0xff]
        %v2112 = vld [vmem:[#allocation2 + $0x118] sm:$0xff]
        %v2113 = vld [vmem:[#allocation2 + $0x120] sm:$0xff]
        %v2114 = vld [vmem:[#allocation2 + $0x128] sm:$0xff]
        %v2115 = vld [vmem:[#allocation2 + $0x130] sm:$0xff]
        %v2116 = vld [vmem:[#allocation2 + $0x138] sm:$0xff]
        %s2117 = scalar_lea.vmem %s2, 24
        %v2118 = vld [vmem:[%s2117] sm:$0xf]
        %v2119 = vld [vmem:[%s2117 + $0x4] sm:$0xf]
        %v2120 = vld [vmem:[%s2117 + $0x8] sm:$0x3]
        %vm2123 = vcmask 1043456
        %v2124 = vrot.slane %v1124, 4
        %v2125 = vrot.slane %v1126, 4
        %v2126 = vsel %vm2123, %v2124, %v2125
        %v2127 = vrot.slane %v1128, 4
        %v2128 = vsel %vm2123, %v2125, %v2127
        %v2129 = vrot.slane %v1130, 4
        %v2130 = vsel %vm2123, %v2127, %v2129
        %v2131 = vrot.slane %v1132, 4
        %v2132 = vsel %vm2123, %v2129, %v2131
        %v2133 = vrot.slane %v1134, 4
        %v2134 = vsel %vm2123, %v2131, %v2133
        %v2135 = vrot.slane %v1136, 4
        %v2136 = vsel %vm2123, %v2133, %v2135
        %v2137 = vrot.slane %v1138, 4
        %v2138 = vsel %vm2123, %v2135, %v2137
        %v2139 = vrot.slane %v1140, 4
        %v2140 = vsel %vm2123, %v2137, %v2139
        %v2141 = vrot.slane %v1142, 4
        %v2142 = vsel %vm2123, %v2139, %v2141
        %v2143 = vrot.slane %v1144, 4
        %v2144 = vsel %vm2123, %v2141, %v2143
        %v2145 = vrot.slane %v1146, 4
        %v2146 = vsel %vm2123, %v2143, %v2145
        %v2147 = vrot.slane %v1148, 4
        %v2148 = vsel %vm2123, %v2145, %v2147
        %v2149 = vrot.slane %v1150, 4
        %v2150 = vsel %vm2123, %v2147, %v2149
        %v2151 = vrot.slane %v1152, 4
        %v2152 = vsel %vm2123, %v2149, %v2151
        %v2153 = vrot.slane %v1154, 4
        %v2154 = vsel %vm2123, %v2151, %v2153
        %v2155 = vrot.slane %v1156, 4
        %v2156 = vsel %vm2123, %v2153, %v2155
        %v2157 = vrot.slane %v1158, 4
        %v2158 = vsel %vm2123, %v2155, %v2157
        %v2159 = vrot.slane %v1575, 4
        %v2160 = vsel %vm2123, %v2157, %v2159
        %v2161 = vrot.slane %v2074, 4
        %v2162 = vsel %vm2123, %v2159, %v2161
        %v2163 = vrot.slane %v2076, 4
        %v2164 = vsel %vm2123, %v2161, %v2163
        %v2168 = vunpack.c.l.b16 %v2118
        %v2169 = vunpack.c.l.b16 %v2119
        %v2170 = vunpack.c.l.b16 %v2120
        %v2171 = vpack.c.b16 %v2169, %v2168
        %v2172 = vpack.c.b16 %v2170, %v2170
        %v2175 = vsel %vm1211, %v2126, 0
        %v2178 = vsel %vm1211, %v2128, 0
        %v2181 = vsel %vm1211, %v2130, 0
        %v2184 = vsel %vm1211, %v2132, 0
        %v2187 = vsel %vm1211, %v2134, 0
        %v2190 = vsel %vm1211, %v2136, 0
        %v2193 = vsel %vm1211, %v2138, 0
        %v2196 = vsel %vm1211, %v2140, 0
        %v2199 = vsel %vm1211, %v2142, 0
        %v2202 = vsel %vm1211, %v2144, 0
        %v2205 = vsel %vm1211, %v2146, 0
        %v2208 = vsel %vm1211, %v2148, 0
        %v2211 = vsel %vm1211, %v2150, 0
        %v2214 = vsel %vm1211, %v2152, 0
        %v2217 = vsel %vm1211, %v2154, 0
        %v2220 = vsel %vm1211, %v2156, 0
        %v2223 = vsel %vm1211, %v2158, 0
        %v2226 = vsel %vm1211, %v2160, 0
        %v2229 = vsel %vm1211, %v2162, 0
        %v2232 = vsel %vm1211, %v2164, 0
        %v2235 = vsel %vm1252, %v2172, 0
        %2237 = vmatprep.subr.bf16.mxu0 0
        %2238 = vmatpush1.bf16.msra.mxu0 %v2171
        %2239 = vmatprep.subr.bf16.mxu0 0
        %2240 = vmatpush1.bf16.msra.mxu0 %v2235
        %2241 = vmatprep.subr.bf16.mxu0 0
        %2242 = vmatpush1.bf16.msra.mxu0 0
        %2243 = vmatprep.subr.bf16.mxu0 0
        %2244 = vmatpush1.bf16.msra.mxu0 0
        %2245 = vmatprep.subr.bf16.mxu0 0
        %2246 = vmatpush1.bf16.msra.mxu0 0
        %2247 = vmatprep.subr.bf16.mxu0 0
        %2248 = vmatpush1.bf16.msra.mxu0 0
        %2249 = vmatprep.subr.bf16.mxu0 0
        %2250 = vmatpush1.bf16.msra.mxu0 0
        %2251 = vmatprep.subr.bf16.mxu0 0
        %2252 = vmatpush1.bf16.msra.mxu0 0
        %2253 = vmatprep.subr.bf16.mxu0 0
        %2254 = vmatpush1.bf16.msra.mxu0 0
        %2255 = vmatprep.subr.bf16.mxu0 0
        %2256 = vmatpush1.bf16.msra.mxu0 0
        %2257 = vmatprep.subr.bf16.mxu0 0
        %2258 = vmatpush1.bf16.msra.mxu0 0
        %2259 = vmatprep.subr.bf16.mxu0 0
        %2260 = vmatpush1.bf16.msra.mxu0 0
        %2261 = vmatprep.subr.bf16.mxu0 0
        %2262 = vmatpush1.bf16.msra.mxu0 0
        %2263 = vmatprep.subr.bf16.mxu0 0
        %2264 = vmatpush1.bf16.msra.mxu0 0
        %2265 = vmatprep.subr.bf16.mxu0 0
        %2266 = vmatpush1.bf16.msra.mxu0 0
        %2267 = vmatprep.subr.bf16.mxu0 0
        %2268 = vmatpush1.bf16.msra.mxu0 0
        %2269 = vmatprep.mubr.bf16.mxu0 0
        %2270 = vmatmul.mubr.bf16.gmra.mrb[0].mxu0 %v2175
        %v2271 = vpop.f32.mrb[0].mxu0
        %v2272 = vadd.f32 0.0, %v2271
        %v2273 = vpop.f32.mrb[0].mxu0
        %v2274 = vpop.f32.mrb[0].mxu0
        %v2275 = vadd.f32 0.0, %v2274
        %v2276 = vpop.f32.mrb[0].mxu0
        %2277 = vmatprep.mubr.bf16.mxu0 0
        %2278 = vmatmul.mubr.bf16.gmra.mrb[0].mxu0 %v2178
        %v2279 = vpop.f32.mrb[0].mxu0
        %v2280 = vadd.f32 0.0, %v2279
        %v2281 = vpop.f32.mrb[0].mxu0
        %v2282 = vpop.f32.mrb[0].mxu0
        %v2283 = vadd.f32 0.0, %v2282
        %v2284 = vpop.f32.mrb[0].mxu0
        %2285 = vmatprep.mubr.bf16.mxu0 0
        %2286 = vmatmul.mubr.bf16.gmra.mrb[0].mxu0 %v2181
        %v2287 = vpop.f32.mrb[0].mxu0
        %v2288 = vadd.f32 0.0, %v2287
        %v2289 = vpop.f32.mrb[0].mxu0
        %v2290 = vpop.f32.mrb[0].mxu0
        %v2291 = vadd.f32 0.0, %v2290
        %v2292 = vpop.f32.mrb[0].mxu0
        %2293 = vmatprep.mubr.bf16.mxu0 0
        %2294 = vmatmul.mubr.bf16.gmra.mrb[0].mxu0 %v2184
        %v2295 = vpop.f32.mrb[0].mxu0
        %v2296 = vadd.f32 0.0, %v2295
        %v2297 = vpop.f32.mrb[0].mxu0
        %v2298 = vpop.f32.mrb[0].mxu0
        %v2299 = vadd.f32 0.0, %v2298
        %v2300 = vpop.f32.mrb[0].mxu0
        %2301 = vmatprep.mubr.bf16.mxu0 0
        %2302 = vmatmul.mubr.bf16.gmra.mrb[0].mxu0 %v2187
        %v2303 = vpop.f32.mrb[0].mxu0
        %v2304 = vadd.f32 0.0, %v2303
        %v2305 = vpop.f32.mrb[0].mxu0
        %v2306 = vpop.f32.mrb[0].mxu0
        %v2307 = vadd.f32 0.0, %v2306
        %v2308 = vpop.f32.mrb[0].mxu0
        %2309 = vmatprep.mubr.bf16.mxu0 0
        %2310 = vmatmul.mubr.bf16.gmra.mrb[0].mxu0 %v2190
        %v2311 = vpop.f32.mrb[0].mxu0
        %v2312 = vadd.f32 0.0, %v2311
        %v2313 = vpop.f32.mrb[0].mxu0
        %v2314 = vpop.f32.mrb[0].mxu0
        %v2315 = vadd.f32 0.0, %v2314
        %v2316 = vpop.f32.mrb[0].mxu0
        %2317 = vmatprep.mubr.bf16.mxu0 0
        %2318 = vmatmul.mubr.bf16.gmra.mrb[0].mxu0 %v2193
        %v2319 = vpop.f32.mrb[0].mxu0
        %v2320 = vadd.f32 0.0, %v2319
        %v2321 = vpop.f32.mrb[0].mxu0
        %v2322 = vpop.f32.mrb[0].mxu0
        %v2323 = vadd.f32 0.0, %v2322
        %v2324 = vpop.f32.mrb[0].mxu0
        %2325 = vmatprep.mubr.bf16.mxu0 0
        %2326 = vmatmul.mubr.bf16.gmra.mrb[0].mxu0 %v2196
        %v2327 = vpop.f32.mrb[0].mxu0
        %v2328 = vadd.f32 0.0, %v2327
        %v2329 = vpop.f32.mrb[0].mxu0
        %v2330 = vpop.f32.mrb[0].mxu0
        %v2331 = vadd.f32 0.0, %v2330
        %v2332 = vpop.f32.mrb[0].mxu0
        %2333 = vmatprep.mubr.bf16.mxu0 0
        %2334 = vmatmul.mubr.bf16.gmra.mrb[0].mxu0 %v2199
        %v2335 = vpop.f32.mrb[0].mxu0
        %v2336 = vadd.f32 0.0, %v2335
        %v2337 = vpop.f32.mrb[0].mxu0
        %v2338 = vpop.f32.mrb[0].mxu0
        %v2339 = vadd.f32 0.0, %v2338
        %v2340 = vpop.f32.mrb[0].mxu0
        %2341 = vmatprep.mubr.bf16.mxu0 0
        %2342 = vmatmul.mubr.bf16.gmra.mrb[0].mxu0 %v2202
        %v2343 = vpop.f32.mrb[0].mxu0
        %v2344 = vadd.f32 0.0, %v2343
        %v2345 = vpop.f32.mrb[0].mxu0
        %v2346 = vpop.f32.mrb[0].mxu0
        %v2347 = vadd.f32 0.0, %v2346
        %v2348 = vpop.f32.mrb[0].mxu0
        %2349 = vmatprep.mubr.bf16.mxu0 0
        %2350 = vmatmul.mubr.bf16.gmra.mrb[0].mxu0 %v2205
        %v2351 = vpop.f32.mrb[0].mxu0
        %v2352 = vadd.f32 0.0, %v2351
        %v2353 = vpop.f32.mrb[0].mxu0
        %v2354 = vpop.f32.mrb[0].mxu0
        %v2355 = vadd.f32 0.0, %v2354
        %v2356 = vpop.f32.mrb[0].mxu0
        %2357 = vmatprep.mubr.bf16.mxu0 0
        %2358 = vmatmul.mubr.bf16.gmra.mrb[0].mxu0 %v2208
        %v2359 = vpop.f32.mrb[0].mxu0
        %v2360 = vadd.f32 0.0, %v2359
        %v2361 = vpop.f32.mrb[0].mxu0
        %v2362 = vpop.f32.mrb[0].mxu0
        %v2363 = vadd.f32 0.0, %v2362
        %v2364 = vpop.f32.mrb[0].mxu0
        %2365 = vmatprep.mubr.bf16.mxu0 0
        %2366 = vmatmul.mubr.bf16.gmra.mrb[0].mxu0 %v2211
        %v2367 = vpop.f32.mrb[0].mxu0
        %v2368 = vadd.f32 0.0, %v2367
        %v2369 = vpop.f32.mrb[0].mxu0
        %v2370 = vpop.f32.mrb[0].mxu0
        %v2371 = vadd.f32 0.0, %v2370
        %v2372 = vpop.f32.mrb[0].mxu0
        %2373 = vmatprep.mubr.bf16.mxu0 0
        %2374 = vmatmul.mubr.bf16.gmra.mrb[0].mxu0 %v2214
        %v2375 = vpop.f32.mrb[0].mxu0
        %v2376 = vadd.f32 0.0, %v2375
        %v2377 = vpop.f32.mrb[0].mxu0
        %v2378 = vpop.f32.mrb[0].mxu0
        %v2379 = vadd.f32 0.0, %v2378
        %v2380 = vpop.f32.mrb[0].mxu0
        %2381 = vmatprep.mubr.bf16.mxu0 0
        %2382 = vmatmul.mubr.bf16.gmra.mrb[0].mxu0 %v2217
        %v2383 = vpop.f32.mrb[0].mxu0
        %v2384 = vadd.f32 0.0, %v2383
        %v2385 = vpop.f32.mrb[0].mxu0
        %v2386 = vpop.f32.mrb[0].mxu0
        %v2387 = vadd.f32 0.0, %v2386
        %v2388 = vpop.f32.mrb[0].mxu0
        %2389 = vmatprep.mubr.bf16.mxu0 0
        %2390 = vmatmul.mubr.bf16.gmra.mrb[0].mxu0 %v2220
        %v2391 = vpop.f32.mrb[0].mxu0
        %v2392 = vadd.f32 0.0, %v2391
        %v2393 = vpop.f32.mrb[0].mxu0
        %v2394 = vpop.f32.mrb[0].mxu0
        %v2395 = vadd.f32 0.0, %v2394
        %v2396 = vpop.f32.mrb[0].mxu0
        %2397 = vmatprep.mubr.bf16.mxu0 0
        %2398 = vmatmul.mubr.bf16.gmra.mrb[0].mxu0 %v2223
        %v2399 = vpop.f32.mrb[0].mxu0
        %v2400 = vadd.f32 0.0, %v2399
        %v2401 = vpop.f32.mrb[0].mxu0
        %v2402 = vpop.f32.mrb[0].mxu0
        %v2403 = vadd.f32 0.0, %v2402
        %v2404 = vpop.f32.mrb[0].mxu0
        %2405 = vmatprep.mubr.bf16.mxu0 0
        %2406 = vmatmul.mubr.bf16.gmra.mrb[0].mxu0 %v2226
        %v2407 = vpop.f32.mrb[0].mxu0
        %v2408 = vadd.f32 0.0, %v2407
        %v2409 = vpop.f32.mrb[0].mxu0
        %v2410 = vpop.f32.mrb[0].mxu0
        %v2411 = vadd.f32 0.0, %v2410
        %v2412 = vpop.f32.mrb[0].mxu0
        %2413 = vmatprep.mubr.bf16.mxu0 0
        %2414 = vmatmul.mubr.bf16.gmra.mrb[0].mxu0 %v2229
        %v2415 = vpop.f32.mrb[0].mxu0
        %v2416 = vadd.f32 0.0, %v2415
        %v2417 = vpop.f32.mrb[0].mxu0
        %v2418 = vpop.f32.mrb[0].mxu0
        %v2419 = vadd.f32 0.0, %v2418
        %v2420 = vpop.f32.mrb[0].mxu0
        %2421 = vmatprep.mubr.bf16.mxu0 0
        %2422 = vmatmul.mubr.bf16.gmra.mrb[0].mxu0 %v2232
        %v2423 = vpop.f32.mrb[0].mxu0
        %v2424 = vadd.f32 0.0, %v2423
        %v2425 = vpop.f32.mrb[0].mxu0
        %v2426 = vpop.f32.mrb[0].mxu0
        %v2427 = vadd.f32 0.0, %v2426
        %v2428 = vpop.f32.mrb[0].mxu0
        %2429 = vdwg.mxu0
        %v2430 = vadd.f32 %v2077, %v2272
        %v2431 = vadd.f32 %v2078, %v2275
        %v2432 = vadd.f32 %v2079, %v2280
        %v2433 = vadd.f32 %v2080, %v2283
        %v2434 = vadd.f32 %v2081, %v2288
        %v2435 = vadd.f32 %v2082, %v2291
        %v2436 = vadd.f32 %v2083, %v2296
        %v2437 = vadd.f32 %v2084, %v2299
        %v2438 = vadd.f32 %v2085, %v2304
        %v2439 = vadd.f32 %v2086, %v2307
        %v2440 = vadd.f32 %v2087, %v2312
        %v2441 = vadd.f32 %v2088, %v2315
        %v2442 = vadd.f32 %v2089, %v2320
        %v2443 = vadd.f32 %v2090, %v2323
        %v2444 = vadd.f32 %v2091, %v2328
        %v2445 = vadd.f32 %v2092, %v2331
        %v2446 = vadd.f32 %v2093, %v2336
        %v2447 = vadd.f32 %v2094, %v2339
        %v2448 = vadd.f32 %v2095, %v2344
        %v2449 = vadd.f32 %v2096, %v2347
        %v2450 = vadd.f32 %v2097, %v2352
        %v2451 = vadd.f32 %v2098, %v2355
        %v2452 = vadd.f32 %v2099, %v2360
        %v2453 = vadd.f32 %v2100, %v2363
        %v2454 = vadd.f32 %v2101, %v2368
        %v2455 = vadd.f32 %v2102, %v2371
        %v2456 = vadd.f32 %v2103, %v2376
        %v2457 = vadd.f32 %v2104, %v2379
        %v2458 = vadd.f32 %v2105, %v2384
        %v2459 = vadd.f32 %v2106, %v2387
        %v2460 = vadd.f32 %v2107, %v2392
        %v2461 = vadd.f32 %v2108, %v2395
        %v2462 = vadd.f32 %v2109, %v2400
        %v2463 = vadd.f32 %v2110, %v2403
        %v2464 = vadd.f32 %v2111, %v2408
        %v2465 = vadd.f32 %v2112, %v2411
        %v2466 = vadd.f32 %v2113, %v2416
        %v2467 = vadd.f32 %v2114, %v2419
        %v2468 = vadd.f32 %v2115, %v2424
        %v2469 = vadd.f32 %v2116, %v2427
        %2470 = vst [vmem:[#allocation2] sm:$0xff] %v2430
        %2471 = vst [vmem:[#allocation2 + $0x8] sm:$0xff] %v2431
        %2472 = vst [vmem:[#allocation2 + $0x10] sm:$0xff] %v2432
        %2473 = vst [vmem:[#allocation2 + $0x18] sm:$0xff] %v2433
        %2474 = vst [vmem:[#allocation2 + $0x20] sm:$0xff] %v2434
        %2475 = vst [vmem:[#allocation2 + $0x28] sm:$0xff] %v2435
        %2476 = vst [vmem:[#allocation2 + $0x30] sm:$0xff] %v2436
        %2477 = vst [vmem:[#allocation2 + $0x38] sm:$0xff] %v2437
        %2478 = vst [vmem:[#allocation2 + $0x40] sm:$0xff] %v2438
        %2479 = vst [vmem:[#allocation2 + $0x48] sm:$0xff] %v2439
        %2480 = vst [vmem:[#allocation2 + $0x50] sm:$0xff] %v2440
        %2481 = vst [vmem:[#allocation2 + $0x58] sm:$0xff] %v2441
        %2482 = vst [vmem:[#allocation2 + $0x60] sm:$0xff] %v2442
        %2483 = vst [vmem:[#allocation2 + $0x68] sm:$0xff] %v2443
        %2484 = vst [vmem:[#allocation2 + $0x70] sm:$0xff] %v2444
        %2485 = vst [vmem:[#allocation2 + $0x78] sm:$0xff] %v2445
        %2486 = vst [vmem:[#allocation2 + $0x80] sm:$0xff] %v2446
        %2487 = vst [vmem:[#allocation2 + $0x88] sm:$0xff] %v2447
        %2488 = vst [vmem:[#allocation2 + $0x90] sm:$0xff] %v2448
        %2489 = vst [vmem:[#allocation2 + $0x98] sm:$0xff] %v2449
        %2490 = vst [vmem:[#allocation2 + $0xa0] sm:$0xff] %v2450
        %2491 = vst [vmem:[#allocation2 + $0xa8] sm:$0xff] %v2451
        %2492 = vst [vmem:[#allocation2 + $0xb0] sm:$0xff] %v2452
        %2493 = vst [vmem:[#allocation2 + $0xb8] sm:$0xff] %v2453
        %2494 = vst [vmem:[#allocation2 + $0xc0] sm:$0xff] %v2454
        %2495 = vst [vmem:[#allocation2 + $0xc8] sm:$0xff] %v2455
        %2496 = vst [vmem:[#allocation2 + $0xd0] sm:$0xff] %v2456
        %2497 = vst [vmem:[#allocation2 + $0xd8] sm:$0xff] %v2457
        %2498 = vst [vmem:[#allocation2 + $0xe0] sm:$0xff] %v2458
        %2499 = vst [vmem:[#allocation2 + $0xe8] sm:$0xff] %v2459
        %2500 = vst [vmem:[#allocation2 + $0xf0] sm:$0xff] %v2460
        %2501 = vst [vmem:[#allocation2 + $0xf8] sm:$0xff] %v2461
        %2502 = vst [vmem:[#allocation2 + $0x100] sm:$0xff] %v2462
        %2503 = vst [vmem:[#allocation2 + $0x108] sm:$0xff] %v2463
        %2504 = vst [vmem:[#allocation2 + $0x110] sm:$0xff] %v2464
        %2505 = vst [vmem:[#allocation2 + $0x118] sm:$0xff] %v2465
        %2506 = vst [vmem:[#allocation2 + $0x120] sm:$0xff] %v2466
        %2507 = vst [vmem:[#allocation2 + $0x128] sm:$0xff] %v2467
        %2508 = vst [vmem:[#allocation2 + $0x130] sm:$0xff] %v2468
        %2509 = vst [vmem:[#allocation2 + $0x138] sm:$0xff] %v2469
        %v2511 = vshll.u32 %v450, 16
        %v2513 = vrot.slane %v2511, 1
        %v2514 = vsel %vm500, %v2036, %v2513
        %v2515 = vshrl.u32 %v450, 16
        %v2517 = vor.u32 %v2515, %v2513
        %2518 = vrot.lane.b32.xlu0 %v2514, 4
        %v2519 = vpop.permute.xlu0 %2518
        %2520 = vrot.lane.b32.xlu0 %v2517, 4
        %v2521 = vpop.permute.xlu0 %2520
        %v2522 = vrot.slane %v450, 1
        %v2523 = vsel %vm705, %v2041, %v2522
        %2524 = vrot.lane.b32.xlu0 %v2523, 8
        %v2525 = vpop.permute.xlu0 %2524
        %2526 = vrot.lane.b32.xlu0 %v2522, 8
        %v2527 = vpop.permute.xlu0 %2526
        %v2528 = vsel %vm787, %v799, %v805
        %v2529 = vrot.slane %v2515, 1
        %v2530 = vrot.slane %v2511, 2
        %v2531 = vor.u32 %v2529, %v2530
        %v2532 = vsel %vm787, %v2049, %v2531
        %2533 = vrot.lane.b32.xlu0 %v2528, 12
        %v2534 = vpop.permute.xlu0 %2533
        %2535 = vrot.lane.b32.xlu0 %v2532, 12
        %v2536 = vpop.permute.xlu0 %2535
        %2537 = vrot.lane.b32.xlu0 %v2531, 12
        %v2538 = vpop.permute.xlu0 %2537
        %v2539 = vrot.slane %v450, 2
        %v2540 = vsel %vm913, %v2055, %v2539
        %2541 = vrot.lane.b32.xlu0 %v921, 16
        %v2542 = vpop.permute.xlu0 %2541
        %2543 = vrot.lane.b32.xlu0 %v2540, 16
        %v2544 = vpop.permute.xlu0 %2543
        %2545 = vrot.lane.b32.xlu0 %v2539, 16
        %v2546 = vpop.permute.xlu0 %2545
        %v2548 = vsel %vm995, %v449, %v2519
        %v2550 = vsel %vm995, %v450, %v2521
        %v2552 = vsel %vm1036, %v2548, %v2525
        %v2554 = vsel %vm1036, %v2550, %v2527
        %v2556 = vsel %vm1077, %v1044, %v2534
        %v2558 = vsel %vm1077, %v2552, %v2536
        %v2560 = vsel %vm1077, %v2554, %v2538
        %v2562 = vsel %vm1118, %v2556, %v2542
        %v2564 = vsel %vm1118, %v2558, %v2544
        %v2566 = vsel %vm1118, %v2560, %v2546
        %v2567 = vld [vmem:[#allocation2] sm:$0xff]
        %v2568 = vld [vmem:[#allocation2 + $0x8] sm:$0xff]
        %v2569 = vld [vmem:[#allocation2 + $0x10] sm:$0xff]
        %v2570 = vld [vmem:[#allocation2 + $0x18] sm:$0xff]
        %v2571 = vld [vmem:[#allocation2 + $0x20] sm:$0xff]
        %v2572 = vld [vmem:[#allocation2 + $0x28] sm:$0xff]
        %v2573 = vld [vmem:[#allocation2 + $0x30] sm:$0xff]
        %v2574 = vld [vmem:[#allocation2 + $0x38] sm:$0xff]
        %v2575 = vld [vmem:[#allocation2 + $0x40] sm:$0xff]
        %v2576 = vld [vmem:[#allocation2 + $0x48] sm:$0xff]
        %v2577 = vld [vmem:[#allocation2 + $0x50] sm:$0xff]
        %v2578 = vld [vmem:[#allocation2 + $0x58] sm:$0xff]
        %v2579 = vld [vmem:[#allocation2 + $0x60] sm:$0xff]
        %v2580 = vld [vmem:[#allocation2 + $0x68] sm:$0xff]
        %v2581 = vld [vmem:[#allocation2 + $0x70] sm:$0xff]
        %v2582 = vld [vmem:[#allocation2 + $0x78] sm:$0xff]
        %v2583 = vld [vmem:[#allocation2 + $0x80] sm:$0xff]
        %v2584 = vld [vmem:[#allocation2 + $0x88] sm:$0xff]
        %v2585 = vld [vmem:[#allocation2 + $0x90] sm:$0xff]
        %v2586 = vld [vmem:[#allocation2 + $0x98] sm:$0xff]
        %v2587 = vld [vmem:[#allocation2 + $0xa0] sm:$0xff]
        %v2588 = vld [vmem:[#allocation2 + $0xa8] sm:$0xff]
        %v2589 = vld [vmem:[#allocation2 + $0xb0] sm:$0xff]
        %v2590 = vld [vmem:[#allocation2 + $0xb8] sm:$0xff]
        %v2591 = vld [vmem:[#allocation2 + $0xc0] sm:$0xff]
        %v2592 = vld [vmem:[#allocation2 + $0xc8] sm:$0xff]
        %v2593 = vld [vmem:[#allocation2 + $0xd0] sm:$0xff]
        %v2594 = vld [vmem:[#allocation2 + $0xd8] sm:$0xff]
        %v2595 = vld [vmem:[#allocation2 + $0xe0] sm:$0xff]
        %v2596 = vld [vmem:[#allocation2 + $0xe8] sm:$0xff]
        %v2597 = vld [vmem:[#allocation2 + $0xf0] sm:$0xff]
        %v2598 = vld [vmem:[#allocation2 + $0xf8] sm:$0xff]
        %v2599 = vld [vmem:[#allocation2 + $0x100] sm:$0xff]
        %v2600 = vld [vmem:[#allocation2 + $0x108] sm:$0xff]
        %v2601 = vld [vmem:[#allocation2 + $0x110] sm:$0xff]
        %v2602 = vld [vmem:[#allocation2 + $0x118] sm:$0xff]
        %v2603 = vld [vmem:[#allocation2 + $0x120] sm:$0xff]
        %v2604 = vld [vmem:[#allocation2 + $0x128] sm:$0xff]
        %v2605 = vld [vmem:[#allocation2 + $0x130] sm:$0xff]
        %v2606 = vld [vmem:[#allocation2 + $0x138] sm:$0xff]
        %s2607 = scalar_lea.vmem %s2, 36
        %v2608 = vld [vmem:[%s2607] sm:$0xf]
        %v2609 = vld [vmem:[%s2607 + $0x4] sm:$0xf]
        %v2610 = vld [vmem:[%s2607 + $0x8] sm:$0x3]
        %vm2614 = vcmask 1041408
        %v2615 = vrot.slane %v2562, 6
        %v2616 = vrot.slane %v1128, 6
        %v2617 = vsel %vm2614, %v2615, %v2616
        %v2618 = vrot.slane %v1130, 6
        %v2619 = vsel %vm2614, %v2616, %v2618
        %v2620 = vrot.slane %v1132, 6
        %v2621 = vsel %vm2614, %v2618, %v2620
        %v2622 = vrot.slane %v1134, 6
        %v2623 = vsel %vm2614, %v2620, %v2622
        %v2624 = vrot.slane %v1136, 6
        %v2625 = vsel %vm2614, %v2622, %v2624
        %v2626 = vrot.slane %v1138, 6
        %v2627 = vsel %vm2614, %v2624, %v2626
        %v2628 = vrot.slane %v1140, 6
        %v2629 = vsel %vm2614, %v2626, %v2628
        %v2630 = vrot.slane %v1142, 6
        %v2631 = vsel %vm2614, %v2628, %v2630
        %v2632 = vrot.slane %v1144, 6
        %v2633 = vsel %vm2614, %v2630, %v2632
        %v2634 = vrot.slane %v1146, 6
        %v2635 = vsel %vm2614, %v2632, %v2634
        %v2636 = vrot.slane %v1148, 6
        %v2637 = vsel %vm2614, %v2634, %v2636
        %v2638 = vrot.slane %v1150, 6
        %v2639 = vsel %vm2614, %v2636, %v2638
        %v2640 = vrot.slane %v1152, 6
        %v2641 = vsel %vm2614, %v2638, %v2640
        %v2642 = vrot.slane %v1154, 6
        %v2643 = vsel %vm2614, %v2640, %v2642
        %v2644 = vrot.slane %v1156, 6
        %v2645 = vsel %vm2614, %v2642, %v2644
        %v2646 = vrot.slane %v1158, 6
        %v2647 = vsel %vm2614, %v2644, %v2646
        %v2648 = vrot.slane %v1575, 6
        %v2649 = vsel %vm2614, %v2646, %v2648
        %v2650 = vrot.slane %v2074, 6
        %v2651 = vsel %vm2614, %v2648, %v2650
        %v2652 = vrot.slane %v2564, 6
        %v2653 = vsel %vm2614, %v2650, %v2652
        %v2654 = vrot.slane %v2566, 6
        %v2655 = vsel %vm2614, %v2652, %v2654
        %v2659 = vunpack.c.l.b16 %v2608
        %v2660 = vunpack.c.l.b16 %v2609
        %v2661 = vunpack.c.l.b16 %v2610
        %v2662 = vpack.c.b16 %v2660, %v2659
        %v2663 = vpack.c.b16 %v2661, %v2661
        %v2666 = vsel %vm1211, %v2617, 0
        %v2669 = vsel %vm1211, %v2619, 0
        %v2672 = vsel %vm1211, %v2621, 0
        %v2675 = vsel %vm1211, %v2623, 0
        %v2678 = vsel %vm1211, %v2625, 0
        %v2681 = vsel %vm1211, %v2627, 0
        %v2684 = vsel %vm1211, %v2629, 0
        %v2687 = vsel %vm1211, %v2631, 0
        %v2690 = vsel %vm1211, %v2633, 0
        %v2693 = vsel %vm1211, %v2635, 0
        %v2696 = vsel %vm1211, %v2637, 0
        %v2699 = vsel %vm1211, %v2639, 0
        %v2702 = vsel %vm1211, %v2641, 0
        %v2705 = vsel %vm1211, %v2643, 0
        %v2708 = vsel %vm1211, %v2645, 0
        %v2711 = vsel %vm1211, %v2647, 0
        %v2714 = vsel %vm1211, %v2649, 0
        %v2717 = vsel %vm1211, %v2651, 0
        %v2720 = vsel %vm1211, %v2653, 0
        %v2723 = vsel %vm1211, %v2655, 0
        %v2726 = vsel %vm1252, %v2663, 0
        %2728 = vmatprep.subr.bf16.mxu0 0
        %2729 = vmatpush1.bf16.msra.mxu0 %v2662
        %2730 = vmatprep.subr.bf16.mxu0 0
        %2731 = vmatpush1.bf16.msra.mxu0 %v2726
        %2732 = vmatprep.subr.bf16.mxu0 0
        %2733 = vmatpush1.bf16.msra.mxu0 0
        %2734 = vmatprep.subr.bf16.mxu0 0
        %2735 = vmatpush1.bf16.msra.mxu0 0
        %2736 = vmatprep.subr.bf16.mxu0 0
        %2737 = vmatpush1.bf16.msra.mxu0 0
        %2738 = vmatprep.subr.bf16.mxu0 0
        %2739 = vmatpush1.bf16.msra.mxu0 0
        %2740 = vmatprep.subr.bf16.mxu0 0
        %2741 = vmatpush1.bf16.msra.mxu0 0
        %2742 = vmatprep.subr.bf16.mxu0 0
        %2743 = vmatpush1.bf16.msra.mxu0 0
        %2744 = vmatprep.subr.bf16.mxu0 0
        %2745 = vmatpush1.bf16.msra.mxu0 0
        %2746 = vmatprep.subr.bf16.mxu0 0
        %2747 = vmatpush1.bf16.msra.mxu0 0
        %2748 = vmatprep.subr.bf16.mxu0 0
        %2749 = vmatpush1.bf16.msra.mxu0 0
        %2750 = vmatprep.subr.bf16.mxu0 0
        %2751 = vmatpush1.bf16.msra.mxu0 0
        %2752 = vmatprep.subr.bf16.mxu0 0
        %2753 = vmatpush1.bf16.msra.mxu0 0
        %2754 = vmatprep.subr.bf16.mxu0 0
        %2755 = vmatpush1.bf16.msra.mxu0 0
        %2756 = vmatprep.subr.bf16.mxu0 0
        %2757 = vmatpush1.bf16.msra.mxu0 0
        %2758 = vmatprep.subr.bf16.mxu0 0
        %2759 = vmatpush1.bf16.msra.mxu0 0
        %2760 = vmatprep.mubr.bf16.mxu0 0
        %2761 = vmatmul.mubr.bf16.gmra.mrb[0].mxu0 %v2666
        %v2762 = vpop.f32.mrb[0].mxu0
        %v2763 = vadd.f32 0.0, %v2762
        %v2764 = vpop.f32.mrb[0].mxu0
        %v2765 = vpop.f32.mrb[0].mxu0
        %v2766 = vadd.f32 0.0, %v2765
        %v2767 = vpop.f32.mrb[0].mxu0
        %2768 = vmatprep.mubr.bf16.mxu0 0
        %2769 = vmatmul.mubr.bf16.gmra.mrb[0].mxu0 %v2669
        %v2770 = vpop.f32.mrb[0].mxu0
        %v2771 = vadd.f32 0.0, %v2770
        %v2772 = vpop.f32.mrb[0].mxu0
        %v2773 = vpop.f32.mrb[0].mxu0
        %v2774 = vadd.f32 0.0, %v2773
        %v2775 = vpop.f32.mrb[0].mxu0
        %2776 = vmatprep.mubr.bf16.mxu0 0
        %2777 = vmatmul.mubr.bf16.gmra.mrb[0].mxu0 %v2672
        %v2778 = vpop.f32.mrb[0].mxu0
        %v2779 = vadd.f32 0.0, %v2778
        %v2780 = vpop.f32.mrb[0].mxu0
        %v2781 = vpop.f32.mrb[0].mxu0
        %v2782 = vadd.f32 0.0, %v2781
        %v2783 = vpop.f32.mrb[0].mxu0
        %2784 = vmatprep.mubr.bf16.mxu0 0
        %2785 = vmatmul.mubr.bf16.gmra.mrb[0].mxu0 %v2675
        %v2786 = vpop.f32.mrb[0].mxu0
        %v2787 = vadd.f32 0.0, %v2786
        %v2788 = vpop.f32.mrb[0].mxu0
        %v2789 = vpop.f32.mrb[0].mxu0
        %v2790 = vadd.f32 0.0, %v2789
        %v2791 = vpop.f32.mrb[0].mxu0
        %2792 = vmatprep.mubr.bf16.mxu0 0
        %2793 = vmatmul.mubr.bf16.gmra.mrb[0].mxu0 %v2678
        %v2794 = vpop.f32.mrb[0].mxu0
        %v2795 = vadd.f32 0.0, %v2794
        %v2796 = vpop.f32.mrb[0].mxu0
        %v2797 = vpop.f32.mrb[0].mxu0
        %v2798 = vadd.f32 0.0, %v2797
        %v2799 = vpop.f32.mrb[0].mxu0
        %2800 = vmatprep.mubr.bf16.mxu0 0
        %2801 = vmatmul.mubr.bf16.gmra.mrb[0].mxu0 %v2681
        %v2802 = vpop.f32.mrb[0].mxu0
        %v2803 = vadd.f32 0.0, %v2802
        %v2804 = vpop.f32.mrb[0].mxu0
        %v2805 = vpop.f32.mrb[0].mxu0
        %v2806 = vadd.f32 0.0, %v2805
        %v2807 = vpop.f32.mrb[0].mxu0
        %2808 = vmatprep.mubr.bf16.mxu0 0
        %2809 = vmatmul.mubr.bf16.gmra.mrb[0].mxu0 %v2684
        %v2810 = vpop.f32.mrb[0].mxu0
        %v2811 = vadd.f32 0.0, %v2810
        %v2812 = vpop.f32.mrb[0].mxu0
        %v2813 = vpop.f32.mrb[0].mxu0
        %v2814 = vadd.f32 0.0, %v2813
        %v2815 = vpop.f32.mrb[0].mxu0
        %2816 = vmatprep.mubr.bf16.mxu0 0
        %2817 = vmatmul.mubr.bf16.gmra.mrb[0].mxu0 %v2687
        %v2818 = vpop.f32.mrb[0].mxu0
        %v2819 = vadd.f32 0.0, %v2818
        %v2820 = vpop.f32.mrb[0].mxu0
        %v2821 = vpop.f32.mrb[0].mxu0
        %v2822 = vadd.f32 0.0, %v2821
        %v2823 = vpop.f32.mrb[0].mxu0
        %2824 = vmatprep.mubr.bf16.mxu0 0
        %2825 = vmatmul.mubr.bf16.gmra.mrb[0].mxu0 %v2690
        %v2826 = vpop.f32.mrb[0].mxu0
        %v2827 = vadd.f32 0.0, %v2826
        %v2828 = vpop.f32.mrb[0].mxu0
        %v2829 = vpop.f32.mrb[0].mxu0
        %v2830 = vadd.f32 0.0, %v2829
        %v2831 = vpop.f32.mrb[0].mxu0
        %2832 = vmatprep.mubr.bf16.mxu0 0
        %2833 = vmatmul.mubr.bf16.gmra.mrb[0].mxu0 %v2693
        %v2834 = vpop.f32.mrb[0].mxu0
        %v2835 = vadd.f32 0.0, %v2834
        %v2836 = vpop.f32.mrb[0].mxu0
        %v2837 = vpop.f32.mrb[0].mxu0
        %v2838 = vadd.f32 0.0, %v2837
        %v2839 = vpop.f32.mrb[0].mxu0
        %2840 = vmatprep.mubr.bf16.mxu0 0
        %2841 = vmatmul.mubr.bf16.gmra.mrb[0].mxu0 %v2696
        %v2842 = vpop.f32.mrb[0].mxu0
        %v2843 = vadd.f32 0.0, %v2842
        %v2844 = vpop.f32.mrb[0].mxu0
        %v2845 = vpop.f32.mrb[0].mxu0
        %v2846 = vadd.f32 0.0, %v2845
        %v2847 = vpop.f32.mrb[0].mxu0
        %2848 = vmatprep.mubr.bf16.mxu0 0
        %2849 = vmatmul.mubr.bf16.gmra.mrb[0].mxu0 %v2699
        %v2850 = vpop.f32.mrb[0].mxu0
        %v2851 = vadd.f32 0.0, %v2850
        %v2852 = vpop.f32.mrb[0].mxu0
        %v2853 = vpop.f32.mrb[0].mxu0
        %v2854 = vadd.f32 0.0, %v2853
        %v2855 = vpop.f32.mrb[0].mxu0
        %2856 = vmatprep.mubr.bf16.mxu0 0
        %2857 = vmatmul.mubr.bf16.gmra.mrb[0].mxu0 %v2702
        %v2858 = vpop.f32.mrb[0].mxu0
        %v2859 = vadd.f32 0.0, %v2858
        %v2860 = vpop.f32.mrb[0].mxu0
        %v2861 = vpop.f32.mrb[0].mxu0
        %v2862 = vadd.f32 0.0, %v2861
        %v2863 = vpop.f32.mrb[0].mxu0
        %2864 = vmatprep.mubr.bf16.mxu0 0
        %2865 = vmatmul.mubr.bf16.gmra.mrb[0].mxu0 %v2705
        %v2866 = vpop.f32.mrb[0].mxu0
        %v2867 = vadd.f32 0.0, %v2866
        %v2868 = vpop.f32.mrb[0].mxu0
        %v2869 = vpop.f32.mrb[0].mxu0
        %v2870 = vadd.f32 0.0, %v2869
        %v2871 = vpop.f32.mrb[0].mxu0
        %2872 = vmatprep.mubr.bf16.mxu0 0
        %2873 = vmatmul.mubr.bf16.gmra.mrb[0].mxu0 %v2708
        %v2874 = vpop.f32.mrb[0].mxu0
        %v2875 = vadd.f32 0.0, %v2874
        %v2876 = vpop.f32.mrb[0].mxu0
        %v2877 = vpop.f32.mrb[0].mxu0
        %v2878 = vadd.f32 0.0, %v2877
        %v2879 = vpop.f32.mrb[0].mxu0
        %2880 = vmatprep.mubr.bf16.mxu0 0
        %2881 = vmatmul.mubr.bf16.gmra.mrb[0].mxu0 %v2711
        %v2882 = vpop.f32.mrb[0].mxu0
        %v2883 = vadd.f32 0.0, %v2882
        %v2884 = vpop.f32.mrb[0].mxu0
        %v2885 = vpop.f32.mrb[0].mxu0
        %v2886 = vadd.f32 0.0, %v2885
        %v2887 = vpop.f32.mrb[0].mxu0
        %2888 = vmatprep.mubr.bf16.mxu0 0
        %2889 = vmatmul.mubr.bf16.gmra.mrb[0].mxu0 %v2714
        %v2890 = vpop.f32.mrb[0].mxu0
        %v2891 = vadd.f32 0.0, %v2890
        %v2892 = vpop.f32.mrb[0].mxu0
        %v2893 = vpop.f32.mrb[0].mxu0
        %v2894 = vadd.f32 0.0, %v2893
        %v2895 = vpop.f32.mrb[0].mxu0
        %2896 = vmatprep.mubr.bf16.mxu0 0
        %2897 = vmatmul.mubr.bf16.gmra.mrb[0].mxu0 %v2717
        %v2898 = vpop.f32.mrb[0].mxu0
        %v2899 = vadd.f32 0.0, %v2898
        %v2900 = vpop.f32.mrb[0].mxu0
        %v2901 = vpop.f32.mrb[0].mxu0
        %v2902 = vadd.f32 0.0, %v2901
        %v2903 = vpop.f32.mrb[0].mxu0
        %2904 = vmatprep.mubr.bf16.mxu0 0
        %2905 = vmatmul.mubr.bf16.gmra.mrb[0].mxu0 %v2720
        %v2906 = vpop.f32.mrb[0].mxu0
        %v2907 = vadd.f32 0.0, %v2906
        %v2908 = vpop.f32.mrb[0].mxu0
        %v2909 = vpop.f32.mrb[0].mxu0
        %v2910 = vadd.f32 0.0, %v2909
        %v2911 = vpop.f32.mrb[0].mxu0
        %2912 = vmatprep.mubr.bf16.mxu0 0
        %2913 = vmatmul.mubr.bf16.gmra.mrb[0].mxu0 %v2723
        %v2914 = vpop.f32.mrb[0].mxu0
        %v2915 = vadd.f32 0.0, %v2914
        %v2916 = vpop.f32.mrb[0].mxu0
        %v2917 = vpop.f32.mrb[0].mxu0
        %v2918 = vadd.f32 0.0, %v2917
        %v2919 = vpop.f32.mrb[0].mxu0
        %2920 = vdwg.mxu0
        %v2921 = vadd.f32 %v2567, %v2763
        %v2922 = vadd.f32 %v2568, %v2766
        %v2923 = vadd.f32 %v2569, %v2771
        %v2924 = vadd.f32 %v2570, %v2774
        %v2925 = vadd.f32 %v2571, %v2779
        %v2926 = vadd.f32 %v2572, %v2782
        %v2927 = vadd.f32 %v2573, %v2787
        %v2928 = vadd.f32 %v2574, %v2790
        %v2929 = vadd.f32 %v2575, %v2795
        %v2930 = vadd.f32 %v2576, %v2798
        %v2931 = vadd.f32 %v2577, %v2803
        %v2932 = vadd.f32 %v2578, %v2806
        %v2933 = vadd.f32 %v2579, %v2811
        %v2934 = vadd.f32 %v2580, %v2814
        %v2935 = vadd.f32 %v2581, %v2819
        %v2936 = vadd.f32 %v2582, %v2822
        %v2937 = vadd.f32 %v2583, %v2827
        %v2938 = vadd.f32 %v2584, %v2830
        %v2939 = vadd.f32 %v2585, %v2835
        %v2940 = vadd.f32 %v2586, %v2838
        %v2941 = vadd.f32 %v2587, %v2843
        %v2942 = vadd.f32 %v2588, %v2846
        %v2943 = vadd.f32 %v2589, %v2851
        %v2944 = vadd.f32 %v2590, %v2854
        %v2945 = vadd.f32 %v2591, %v2859
        %v2946 = vadd.f32 %v2592, %v2862
        %v2947 = vadd.f32 %v2593, %v2867
        %v2948 = vadd.f32 %v2594, %v2870
        %v2949 = vadd.f32 %v2595, %v2875
        %v2950 = vadd.f32 %v2596, %v2878
        %v2951 = vadd.f32 %v2597, %v2883
        %v2952 = vadd.f32 %v2598, %v2886
        %v2953 = vadd.f32 %v2599, %v2891
        %v2954 = vadd.f32 %v2600, %v2894
        %v2955 = vadd.f32 %v2601, %v2899
        %v2956 = vadd.f32 %v2602, %v2902
        %v2957 = vadd.f32 %v2603, %v2907
        %v2958 = vadd.f32 %v2604, %v2910
        %v2959 = vadd.f32 %v2605, %v2915
        %v2960 = vadd.f32 %v2606, %v2918
        %2961 = vst [vmem:[#allocation2] sm:$0xff] %v2921
        %2962 = vst [vmem:[#allocation2 + $0x8] sm:$0xff] %v2922
        %2963 = vst [vmem:[#allocation2 + $0x10] sm:$0xff] %v2923
        %2964 = vst [vmem:[#allocation2 + $0x18] sm:$0xff] %v2924
        %2965 = vst [vmem:[#allocation2 + $0x20] sm:$0xff] %v2925
        %2966 = vst [vmem:[#allocation2 + $0x28] sm:$0xff] %v2926
        %2967 = vst [vmem:[#allocation2 + $0x30] sm:$0xff] %v2927
        %2968 = vst [vmem:[#allocation2 + $0x38] sm:$0xff] %v2928
        %2969 = vst [vmem:[#allocation2 + $0x40] sm:$0xff] %v2929
        %2970 = vst [vmem:[#allocation2 + $0x48] sm:$0xff] %v2930
        %2971 = vst [vmem:[#allocation2 + $0x50] sm:$0xff] %v2931
        %2972 = vst [vmem:[#allocation2 + $0x58] sm:$0xff] %v2932
        %2973 = vst [vmem:[#allocation2 + $0x60] sm:$0xff] %v2933
        %2974 = vst [vmem:[#allocation2 + $0x68] sm:$0xff] %v2934
        %2975 = vst [vmem:[#allocation2 + $0x70] sm:$0xff] %v2935
        %2976 = vst [vmem:[#allocation2 + $0x78] sm:$0xff] %v2936
        %2977 = vst [vmem:[#allocation2 + $0x80] sm:$0xff] %v2937
        %2978 = vst [vmem:[#allocation2 + $0x88] sm:$0xff] %v2938
        %2979 = vst [vmem:[#allocation2 + $0x90] sm:$0xff] %v2939
        %2980 = vst [vmem:[#allocation2 + $0x98] sm:$0xff] %v2940
        %2981 = vst [vmem:[#allocation2 + $0xa0] sm:$0xff] %v2941
        %2982 = vst [vmem:[#allocation2 + $0xa8] sm:$0xff] %v2942
        %2983 = vst [vmem:[#allocation2 + $0xb0] sm:$0xff] %v2943
        %2984 = vst [vmem:[#allocation2 + $0xb8] sm:$0xff] %v2944
        %2985 = vst [vmem:[#allocation2 + $0xc0] sm:$0xff] %v2945
        %2986 = vst [vmem:[#allocation2 + $0xc8] sm:$0xff] %v2946
        %2987 = vst [vmem:[#allocation2 + $0xd0] sm:$0xff] %v2947
        %2988 = vst [vmem:[#allocation2 + $0xd8] sm:$0xff] %v2948
        %2989 = vst [vmem:[#allocation2 + $0xe0] sm:$0xff] %v2949
        %2990 = vst [vmem:[#allocation2 + $0xe8] sm:$0xff] %v2950
        %2991 = vst [vmem:[#allocation2 + $0xf0] sm:$0xff] %v2951
        %2992 = vst [vmem:[#allocation2 + $0xf8] sm:$0xff] %v2952
        %2993 = vst [vmem:[#allocation2 + $0x100] sm:$0xff] %v2953
        %2994 = vst [vmem:[#allocation2 + $0x108] sm:$0xff] %v2954
        %2995 = vst [vmem:[#allocation2 + $0x110] sm:$0xff] %v2955
        %2996 = vst [vmem:[#allocation2 + $0x118] sm:$0xff] %v2956
        %2997 = vst [vmem:[#allocation2 + $0x120] sm:$0xff] %v2957
        %2998 = vst [vmem:[#allocation2 + $0x128] sm:$0xff] %v2958
        %2999 = vst [vmem:[#allocation2 + $0x130] sm:$0xff] %v2959
        %3000 = vst [vmem:[#allocation2 + $0x138] sm:$0xff] %v2960
        %v3002 = vshll.u32 %v451, 16
        %v3004 = vrot.slane %v3002, 1
        %v3005 = vsel %vm500, %v2517, %v3004
        %v3006 = vshrl.u32 %v451, 16
        %v3008 = vor.u32 %v3006, %v3004
        %v3010 = vshll.u32 %v452, 16
        %v3012 = vrot.slane %v3010, 1
        %v3013 = vsel %vm500, %v3008, %v3012
        %3014 = vrot.lane.b32.xlu0 %v3005, 4
        %v3015 = vpop.permute.xlu0 %3014
        %3016 = vrot.lane.b32.xlu0 %v3013, 4
        %v3017 = vpop.permute.xlu0 %3016
        %v3018 = vrot.slane %v451, 1
        %v3019 = vsel %vm705, %v2522, %v3018
        %v3020 = vrot.slane %v452, 1
        %v3021 = vsel %vm705, %v3018, %v3020
        %3022 = vrot.lane.b32.xlu0 %v3019, 8
        %v3023 = vpop.permute.xlu0 %3022
        %3024 = vrot.lane.b32.xlu0 %v3021, 8
        %v3025 = vpop.permute.xlu0 %3024
        %v3026 = vrot.slane %v3006, 1
        %v3027 = vrot.slane %v3002, 2
        %v3028 = vor.u32 %v3026, %v3027
        %v3029 = vsel %vm787, %v2531, %v3028
        %v3030 = vshrl.u32 %v452, 16
        %v3032 = vrot.slane %v3030, 1
        %v3033 = vrot.slane %v3010, 2
        %v3034 = vor.u32 %v3032, %v3033
        %v3035 = vsel %vm787, %v3028, %v3034
        %3036 = vrot.lane.b32.xlu0 %v3029, 12
        %v3037 = vpop.permute.xlu0 %3036
        %3038 = vrot.lane.b32.xlu0 %v3035, 12
        %v3039 = vpop.permute.xlu0 %3038
        %v3040 = vrot.slane %v451, 2
        %v3041 = vsel %vm913, %v2539, %v3040
        %v3042 = vrot.slane %v452, 2
        %v3043 = vsel %vm913, %v3040, %v3042
        %3044 = vrot.lane.b32.xlu0 %v3041, 16
        %v3045 = vpop.permute.xlu0 %3044
        %3046 = vrot.lane.b32.xlu0 %v3043, 16
        %v3047 = vpop.permute.xlu0 %3046
        %v3049 = vsel %vm995, %v450, %v3015
        %v3051 = vsel %vm995, %v451, %v3017
        %v3053 = vsel %vm1036, %v3049, %v3023
        %v3055 = vsel %vm1036, %v3051, %v3025
        %v3057 = vsel %vm1077, %v3053, %v3037
        %v3059 = vsel %vm1077, %v3055, %v3039
        %v3061 = vsel %vm1118, %v3057, %v3045
        %v3063 = vsel %vm1118, %v3059, %v3047
        %v3064 = vld [vmem:[#allocation2] sm:$0xff]
        %v3065 = vld [vmem:[#allocation2 + $0x8] sm:$0xff]
        %v3066 = vld [vmem:[#allocation2 + $0x10] sm:$0xff]
        %v3067 = vld [vmem:[#allocation2 + $0x18] sm:$0xff]
        %v3068 = vld [vmem:[#allocation2 + $0x20] sm:$0xff]
        %v3069 = vld [vmem:[#allocation2 + $0x28] sm:$0xff]
        %v3070 = vld [vmem:[#allocation2 + $0x30] sm:$0xff]
        %v3071 = vld [vmem:[#allocation2 + $0x38] sm:$0xff]
        %v3072 = vld [vmem:[#allocation2 + $0x40] sm:$0xff]
        %v3073 = vld [vmem:[#allocation2 + $0x48] sm:$0xff]
        %v3074 = vld [vmem:[#allocation2 + $0x50] sm:$0xff]
        %v3075 = vld [vmem:[#allocation2 + $0x58] sm:$0xff]
        %v3076 = vld [vmem:[#allocation2 + $0x60] sm:$0xff]
        %v3077 = vld [vmem:[#allocation2 + $0x68] sm:$0xff]
        %v3078 = vld [vmem:[#allocation2 + $0x70] sm:$0xff]
        %v3079 = vld [vmem:[#allocation2 + $0x78] sm:$0xff]
        %v3080 = vld [vmem:[#allocation2 + $0x80] sm:$0xff]
        %v3081 = vld [vmem:[#allocation2 + $0x88] sm:$0xff]
        %v3082 = vld [vmem:[#allocation2 + $0x90] sm:$0xff]
        %v3083 = vld [vmem:[#allocation2 + $0x98] sm:$0xff]
        %v3084 = vld [vmem:[#allocation2 + $0xa0] sm:$0xff]
        %v3085 = vld [vmem:[#allocation2 + $0xa8] sm:$0xff]
        %v3086 = vld [vmem:[#allocation2 + $0xb0] sm:$0xff]
        %v3087 = vld [vmem:[#allocation2 + $0xb8] sm:$0xff]
        %v3088 = vld [vmem:[#allocation2 + $0xc0] sm:$0xff]
        %v3089 = vld [vmem:[#allocation2 + $0xc8] sm:$0xff]
        %v3090 = vld [vmem:[#allocation2 + $0xd0] sm:$0xff]
        %v3091 = vld [vmem:[#allocation2 + $0xd8] sm:$0xff]
        %v3092 = vld [vmem:[#allocation2 + $0xe0] sm:$0xff]
        %v3093 = vld [vmem:[#allocation2 + $0xe8] sm:$0xff]
        %v3094 = vld [vmem:[#allocation2 + $0xf0] sm:$0xff]
        %v3095 = vld [vmem:[#allocation2 + $0xf8] sm:$0xff]
        %v3096 = vld [vmem:[#allocation2 + $0x100] sm:$0xff]
        %v3097 = vld [vmem:[#allocation2 + $0x108] sm:$0xff]
        %v3098 = vld [vmem:[#allocation2 + $0x110] sm:$0xff]
        %v3099 = vld [vmem:[#allocation2 + $0x118] sm:$0xff]
        %v3100 = vld [vmem:[#allocation2 + $0x120] sm:$0xff]
        %v3101 = vld [vmem:[#allocation2 + $0x128] sm:$0xff]
        %v3102 = vld [vmem:[#allocation2 + $0x130] sm:$0xff]
        %v3103 = vld [vmem:[#allocation2 + $0x138] sm:$0xff]
        %s3104 = scalar_lea.vmem %s2, 48
        %v3105 = vld [vmem:[%s3104] sm:$0xf]
        %v3106 = vld [vmem:[%s3104 + $0x4] sm:$0xf]
        %v3107 = vld [vmem:[%s3104 + $0x8] sm:$0x3]
        %v3111 = vunpack.c.l.b16 %v3105
        %v3112 = vunpack.c.l.b16 %v3106
        %v3113 = vunpack.c.l.b16 %v3107
        %v3114 = vpack.c.b16 %v3112, %v3111
        %v3115 = vpack.c.b16 %v3113, %v3113
        %v3117 = vsel %vm1211, %v1575, 0
        %v3119 = vsel %vm1211, %v2074, 0
        %v3121 = vsel %vm1211, %v2564, 0
        %v3123 = vsel %vm1211, %v3061, 0
        %v3125 = vsel %vm1211, %v3063, 0
        %v3128 = vsel %vm1252, %v3115, 0
        %3130 = vmatprep.subr.bf16.mxu0 0
        %3131 = vmatpush1.bf16.msra.mxu0 %v3114
        %3132 = vmatprep.subr.bf16.mxu0 0
        %3133 = vmatpush1.bf16.msra.mxu0 %v3128
        %3134 = vmatprep.subr.bf16.mxu0 0
        %3135 = vmatpush1.bf16.msra.mxu0 0
        %3136 = vmatprep.subr.bf16.mxu0 0
        %3137 = vmatpush1.bf16.msra.mxu0 0
        %3138 = vmatprep.subr.bf16.mxu0 0
        %3139 = vmatpush1.bf16.msra.mxu0 0
        %3140 = vmatprep.subr.bf16.mxu0 0
        %3141 = vmatpush1.bf16.msra.mxu0 0
        %3142 = vmatprep.subr.bf16.mxu0 0
        %3143 = vmatpush1.bf16.msra.mxu0 0
        %3144 = vmatprep.subr.bf16.mxu0 0
        %3145 = vmatpush1.bf16.msra.mxu0 0
        %3146 = vmatprep.subr.bf16.mxu0 0
        %3147 = vmatpush1.bf16.msra.mxu0 0
        %3148 = vmatprep.subr.bf16.mxu0 0
        %3149 = vmatpush1.bf16.msra.mxu0 0
        %3150 = vmatprep.subr.bf16.mxu0 0
        %3151 = vmatpush1.bf16.msra.mxu0 0
        %3152 = vmatprep.subr.bf16.mxu0 0
        %3153 = vmatpush1.bf16.msra.mxu0 0
        %3154 = vmatprep.subr.bf16.mxu0 0
        %3155 = vmatpush1.bf16.msra.mxu0 0
        %3156 = vmatprep.subr.bf16.mxu0 0
        %3157 = vmatpush1.bf16.msra.mxu0 0
        %3158 = vmatprep.subr.bf16.mxu0 0
        %3159 = vmatpush1.bf16.msra.mxu0 0
        %3160 = vmatprep.subr.bf16.mxu0 0
        %3161 = vmatpush1.bf16.msra.mxu0 0
        %3162 = vmatprep.mubr.bf16.mxu0 0
        %3163 = vmatmul.mubr.bf16.gmra.mrb[0].mxu0 %v1222
        %v3164 = vpop.f32.mrb[0].mxu0
        %v3165 = vadd.f32 0.0, %v3164
        %v3166 = vpop.f32.mrb[0].mxu0
        %v3167 = vpop.f32.mrb[0].mxu0
        %v3168 = vadd.f32 0.0, %v3167
        %v3169 = vpop.f32.mrb[0].mxu0
        %3170 = vmatprep.mubr.bf16.mxu0 0
        %3171 = vmatmul.mubr.bf16.gmra.mrb[0].mxu0 %v1224
        %v3172 = vpop.f32.mrb[0].mxu0
        %v3173 = vadd.f32 0.0, %v3172
        %v3174 = vpop.f32.mrb[0].mxu0
        %v3175 = vpop.f32.mrb[0].mxu0
        %v3176 = vadd.f32 0.0, %v3175
        %v3177 = vpop.f32.mrb[0].mxu0
        %3178 = vmatprep.mubr.bf16.mxu0 0
        %3179 = vmatmul.mubr.bf16.gmra.mrb[0].mxu0 %v1226
        %v3180 = vpop.f32.mrb[0].mxu0
        %v3181 = vadd.f32 0.0, %v3180
        %v3182 = vpop.f32.mrb[0].mxu0
        %v3183 = vpop.f32.mrb[0].mxu0
        %v3184 = vadd.f32 0.0, %v3183
        %v3185 = vpop.f32.mrb[0].mxu0
        %3186 = vmatprep.mubr.bf16.mxu0 0
        %3187 = vmatmul.mubr.bf16.gmra.mrb[0].mxu0 %v1228
        %v3188 = vpop.f32.mrb[0].mxu0
        %v3189 = vadd.f32 0.0, %v3188
        %v3190 = vpop.f32.mrb[0].mxu0
        %v3191 = vpop.f32.mrb[0].mxu0
        %v3192 = vadd.f32 0.0, %v3191
        %v3193 = vpop.f32.mrb[0].mxu0
        %3194 = vmatprep.mubr.bf16.mxu0 0
        %3195 = vmatmul.mubr.bf16.gmra.mrb[0].mxu0 %v1230
        %v3196 = vpop.f32.mrb[0].mxu0
        %v3197 = vadd.f32 0.0, %v3196
        %v3198 = vpop.f32.mrb[0].mxu0
        %v3199 = vpop.f32.mrb[0].mxu0
        %v3200 = vadd.f32 0.0, %v3199
        %v3201 = vpop.f32.mrb[0].mxu0
        %3202 = vmatprep.mubr.bf16.mxu0 0
        %3203 = vmatmul.mubr.bf16.gmra.mrb[0].mxu0 %v1232
        %v3204 = vpop.f32.mrb[0].mxu0
        %v3205 = vadd.f32 0.0, %v3204
        %v3206 = vpop.f32.mrb[0].mxu0
        %v3207 = vpop.f32.mrb[0].mxu0
        %v3208 = vadd.f32 0.0, %v3207
        %v3209 = vpop.f32.mrb[0].mxu0
        %3210 = vmatprep.mubr.bf16.mxu0 0
        %3211 = vmatmul.mubr.bf16.gmra.mrb[0].mxu0 %v1234
        %v3212 = vpop.f32.mrb[0].mxu0
        %v3213 = vadd.f32 0.0, %v3212
        %v3214 = vpop.f32.mrb[0].mxu0
        %v3215 = vpop.f32.mrb[0].mxu0
        %v3216 = vadd.f32 0.0, %v3215
        %v3217 = vpop.f32.mrb[0].mxu0
        %3218 = vmatprep.mubr.bf16.mxu0 0
        %3219 = vmatmul.mubr.bf16.gmra.mrb[0].mxu0 %v1236
        %v3220 = vpop.f32.mrb[0].mxu0
        %v3221 = vadd.f32 0.0, %v3220
        %v3222 = vpop.f32.mrb[0].mxu0
        %v3223 = vpop.f32.mrb[0].mxu0
        %v3224 = vadd.f32 0.0, %v3223
        %v3225 = vpop.f32.mrb[0].mxu0
        %3226 = vmatprep.mubr.bf16.mxu0 0
        %3227 = vmatmul.mubr.bf16.gmra.mrb[0].mxu0 %v1238
        %v3228 = vpop.f32.mrb[0].mxu0
        %v3229 = vadd.f32 0.0, %v3228
        %v3230 = vpop.f32.mrb[0].mxu0
        %v3231 = vpop.f32.mrb[0].mxu0
        %v3232 = vadd.f32 0.0, %v3231
        %v3233 = vpop.f32.mrb[0].mxu0
        %3234 = vmatprep.mubr.bf16.mxu0 0
        %3235 = vmatmul.mubr.bf16.gmra.mrb[0].mxu0 %v1240
        %v3236 = vpop.f32.mrb[0].mxu0
        %v3237 = vadd.f32 0.0, %v3236
        %v3238 = vpop.f32.mrb[0].mxu0
        %v3239 = vpop.f32.mrb[0].mxu0
        %v3240 = vadd.f32 0.0, %v3239
        %v3241 = vpop.f32.mrb[0].mxu0
        %3242 = vmatprep.mubr.bf16.mxu0 0
        %3243 = vmatmul.mubr.bf16.gmra.mrb[0].mxu0 %v1242
        %v3244 = vpop.f32.mrb[0].mxu0
        %v3245 = vadd.f32 0.0, %v3244
        %v3246 = vpop.f32.mrb[0].mxu0
        %v3247 = vpop.f32.mrb[0].mxu0
        %v3248 = vadd.f32 0.0, %v3247
        %v3249 = vpop.f32.mrb[0].mxu0
        %3250 = vmatprep.mubr.bf16.mxu0 0
        %3251 = vmatmul.mubr.bf16.gmra.mrb[0].mxu0 %v1244
        %v3252 = vpop.f32.mrb[0].mxu0
        %v3253 = vadd.f32 0.0, %v3252
        %v3254 = vpop.f32.mrb[0].mxu0
        %v3255 = vpop.f32.mrb[0].mxu0
        %v3256 = vadd.f32 0.0, %v3255
        %v3257 = vpop.f32.mrb[0].mxu0
        %3258 = vmatprep.mubr.bf16.mxu0 0
        %3259 = vmatmul.mubr.bf16.gmra.mrb[0].mxu0 %v1246
        %v3260 = vpop.f32.mrb[0].mxu0
        %v3261 = vadd.f32 0.0, %v3260
        %v3262 = vpop.f32.mrb[0].mxu0
        %v3263 = vpop.f32.mrb[0].mxu0
        %v3264 = vadd.f32 0.0, %v3263
        %v3265 = vpop.f32.mrb[0].mxu0
        %3266 = vmatprep.mubr.bf16.mxu0 0
        %3267 = vmatmul.mubr.bf16.gmra.mrb[0].mxu0 %v1248
        %v3268 = vpop.f32.mrb[0].mxu0
        %v3269 = vadd.f32 0.0, %v3268
        %v3270 = vpop.f32.mrb[0].mxu0
        %v3271 = vpop.f32.mrb[0].mxu0
        %v3272 = vadd.f32 0.0, %v3271
        %v3273 = vpop.f32.mrb[0].mxu0
        %3274 = vmatprep.mubr.bf16.mxu0 0
        %3275 = vmatmul.mubr.bf16.gmra.mrb[0].mxu0 %v1250
        %v3276 = vpop.f32.mrb[0].mxu0
        %v3277 = vadd.f32 0.0, %v3276
        %v3278 = vpop.f32.mrb[0].mxu0
        %v3279 = vpop.f32.mrb[0].mxu0
        %v3280 = vadd.f32 0.0, %v3279
        %v3281 = vpop.f32.mrb[0].mxu0
        %3282 = vmatprep.mubr.bf16.mxu0 0
        %3283 = vmatmul.mubr.bf16.gmra.mrb[0].mxu0 %v3117
        %v3284 = vpop.f32.mrb[0].mxu0
        %v3285 = vadd.f32 0.0, %v3284
        %v3286 = vpop.f32.mrb[0].mxu0
        %v3287 = vpop.f32.mrb[0].mxu0
        %v3288 = vadd.f32 0.0, %v3287
        %v3289 = vpop.f32.mrb[0].mxu0
        %3290 = vmatprep.mubr.bf16.mxu0 0
        %3291 = vmatmul.mubr.bf16.gmra.mrb[0].mxu0 %v3119
        %v3292 = vpop.f32.mrb[0].mxu0
        %v3293 = vadd.f32 0.0, %v3292
        %v3294 = vpop.f32.mrb[0].mxu0
        %v3295 = vpop.f32.mrb[0].mxu0
        %v3296 = vadd.f32 0.0, %v3295
        %v3297 = vpop.f32.mrb[0].mxu0
        %3298 = vmatprep.mubr.bf16.mxu0 0
        %3299 = vmatmul.mubr.bf16.gmra.mrb[0].mxu0 %v3121
        %v3300 = vpop.f32.mrb[0].mxu0
        %v3301 = vadd.f32 0.0, %v3300
        %v3302 = vpop.f32.mrb[0].mxu0
        %v3303 = vpop.f32.mrb[0].mxu0
        %v3304 = vadd.f32 0.0, %v3303
        %v3305 = vpop.f32.mrb[0].mxu0
        %3306 = vmatprep.mubr.bf16.mxu0 0
        %3307 = vmatmul.mubr.bf16.gmra.mrb[0].mxu0 %v3123
        %v3308 = vpop.f32.mrb[0].mxu0
        %v3309 = vadd.f32 0.0, %v3308
        %v3310 = vpop.f32.mrb[0].mxu0
        %v3311 = vpop.f32.mrb[0].mxu0
        %v3312 = vadd.f32 0.0, %v3311
        %v3313 = vpop.f32.mrb[0].mxu0
        %3314 = vmatprep.mubr.bf16.mxu0 0
        %3315 = vmatmul.mubr.bf16.gmra.mrb[0].mxu0 %v3125
        %v3316 = vpop.f32.mrb[0].mxu0
        %v3317 = vadd.f32 0.0, %v3316
        %v3318 = vpop.f32.mrb[0].mxu0
        %v3319 = vpop.f32.mrb[0].mxu0
        %v3320 = vadd.f32 0.0, %v3319
        %v3321 = vpop.f32.mrb[0].mxu0
        %3322 = vdwg.mxu0
        %v3323 = vadd.f32 %v3064, %v3165
        %v3324 = vadd.f32 %v3065, %v3168
        %v3325 = vadd.f32 %v3066, %v3173
        %v3326 = vadd.f32 %v3067, %v3176
        %v3327 = vadd.f32 %v3068, %v3181
        %v3328 = vadd.f32 %v3069, %v3184
        %v3329 = vadd.f32 %v3070, %v3189
        %v3330 = vadd.f32 %v3071, %v3192
        %v3331 = vadd.f32 %v3072, %v3197
        %v3332 = vadd.f32 %v3073, %v3200
        %v3333 = vadd.f32 %v3074, %v3205
        %v3334 = vadd.f32 %v3075, %v3208
        %v3335 = vadd.f32 %v3076, %v3213
        %v3336 = vadd.f32 %v3077, %v3216
        %v3337 = vadd.f32 %v3078, %v3221
        %v3338 = vadd.f32 %v3079, %v3224
        %v3339 = vadd.f32 %v3080, %v3229
        %v3340 = vadd.f32 %v3081, %v3232
        %v3341 = vadd.f32 %v3082, %v3237
        %v3342 = vadd.f32 %v3083, %v3240
        %v3343 = vadd.f32 %v3084, %v3245
        %v3344 = vadd.f32 %v3085, %v3248
        %v3345 = vadd.f32 %v3086, %v3253
        %v3346 = vadd.f32 %v3087, %v3256
        %v3347 = vadd.f32 %v3088, %v3261
        %v3348 = vadd.f32 %v3089, %v3264
        %v3349 = vadd.f32 %v3090, %v3269
        %v3350 = vadd.f32 %v3091, %v3272
        %v3351 = vadd.f32 %v3092, %v3277
        %v3352 = vadd.f32 %v3093, %v3280
        %v3353 = vadd.f32 %v3094, %v3285
        %v3354 = vadd.f32 %v3095, %v3288
        %v3355 = vadd.f32 %v3096, %v3293
        %v3356 = vadd.f32 %v3097, %v3296
        %v3357 = vadd.f32 %v3098, %v3301
        %v3358 = vadd.f32 %v3099, %v3304
        %v3359 = vadd.f32 %v3100, %v3309
        %v3360 = vadd.f32 %v3101, %v3312
        %v3361 = vadd.f32 %v3102, %v3317
        %v3362 = vadd.f32 %v3103, %v3320
        %3363 = vst [vmem:[#allocation2] sm:$0xff] %v3323
        %3364 = vst [vmem:[#allocation2 + $0x8] sm:$0xff] %v3324
        %3365 = vst [vmem:[#allocation2 + $0x10] sm:$0xff] %v3325
        %3366 = vst [vmem:[#allocation2 + $0x18] sm:$0xff] %v3326
        %3367 = vst [vmem:[#allocation2 + $0x20] sm:$0xff] %v3327
        %3368 = vst [vmem:[#allocation2 + $0x28] sm:$0xff] %v3328
        %3369 = vst [vmem:[#allocation2 + $0x30] sm:$0xff] %v3329
        %3370 = vst [vmem:[#allocation2 + $0x38] sm:$0xff] %v3330
        %3371 = vst [vmem:[#allocation2 + $0x40] sm:$0xff] %v3331
        %3372 = vst [vmem:[#allocation2 + $0x48] sm:$0xff] %v3332
        %3373 = vst [vmem:[#allocation2 + $0x50] sm:$0xff] %v3333
        %3374 = vst [vmem:[#allocation2 + $0x58] sm:$0xff] %v3334
        %3375 = vst [vmem:[#allocation2 + $0x60] sm:$0xff] %v3335
        %3376 = vst [vmem:[#allocation2 + $0x68] sm:$0xff] %v3336
        %3377 = vst [vmem:[#allocation2 + $0x70] sm:$0xff] %v3337
        %3378 = vst [vmem:[#allocation2 + $0x78] sm:$0xff] %v3338
        %3379 = vst [vmem:[#allocation2 + $0x80] sm:$0xff] %v3339
        %3380 = vst [vmem:[#allocation2 + $0x88] sm:$0xff] %v3340
        %3381 = vst [vmem:[#allocation2 + $0x90] sm:$0xff] %v3341
        %3382 = vst [vmem:[#allocation2 + $0x98] sm:$0xff] %v3342
        %3383 = vst [vmem:[#allocation2 + $0xa0] sm:$0xff] %v3343
        %3384 = vst [vmem:[#allocation2 + $0xa8] sm:$0xff] %v3344
        %3385 = vst [vmem:[#allocation2 + $0xb0] sm:$0xff] %v3345
        %3386 = vst [vmem:[#allocation2 + $0xb8] sm:$0xff] %v3346
        %3387 = vst [vmem:[#allocation2 + $0xc0] sm:$0xff] %v3347
        %3388 = vst [vmem:[#allocation2 + $0xc8] sm:$0xff] %v3348
        %3389 = vst [vmem:[#allocation2 + $0xd0] sm:$0xff] %v3349
        %3390 = vst [vmem:[#allocation2 + $0xd8] sm:$0xff] %v3350
        %3391 = vst [vmem:[#allocation2 + $0xe0] sm:$0xff] %v3351
        %3392 = vst [vmem:[#allocation2 + $0xe8] sm:$0xff] %v3352
        %3393 = vst [vmem:[#allocation2 + $0xf0] sm:$0xff] %v3353
        %3394 = vst [vmem:[#allocation2 + $0xf8] sm:$0xff] %v3354
        %3395 = vst [vmem:[#allocation2 + $0x100] sm:$0xff] %v3355
        %3396 = vst [vmem:[#allocation2 + $0x108] sm:$0xff] %v3356
        %3397 = vst [vmem:[#allocation2 + $0x110] sm:$0xff] %v3357
        %3398 = vst [vmem:[#allocation2 + $0x118] sm:$0xff] %v3358
        %3399 = vst [vmem:[#allocation2 + $0x120] sm:$0xff] %v3359
        %3400 = vst [vmem:[#allocation2 + $0x128] sm:$0xff] %v3360
        %3401 = vst [vmem:[#allocation2 + $0x130] sm:$0xff] %v3361
        %3402 = vst [vmem:[#allocation2 + $0x138] sm:$0xff] %v3362
        %v3403 = vld [vmem:[#allocation2] sm:$0xff]
        %v3404 = vld [vmem:[#allocation2 + $0x8] sm:$0xff]
        %v3405 = vld [vmem:[#allocation2 + $0x10] sm:$0xff]
        %v3406 = vld [vmem:[#allocation2 + $0x18] sm:$0xff]
        %v3407 = vld [vmem:[#allocation2 + $0x20] sm:$0xff]
        %v3408 = vld [vmem:[#allocation2 + $0x28] sm:$0xff]
        %v3409 = vld [vmem:[#allocation2 + $0x30] sm:$0xff]
        %v3410 = vld [vmem:[#allocation2 + $0x38] sm:$0xff]
        %v3411 = vld [vmem:[#allocation2 + $0x40] sm:$0xff]
        %v3412 = vld [vmem:[#allocation2 + $0x48] sm:$0xff]
        %v3413 = vld [vmem:[#allocation2 + $0x50] sm:$0xff]
        %v3414 = vld [vmem:[#allocation2 + $0x58] sm:$0xff]
        %v3415 = vld [vmem:[#allocation2 + $0x60] sm:$0xff]
        %v3416 = vld [vmem:[#allocation2 + $0x68] sm:$0xff]
        %v3417 = vld [vmem:[#allocation2 + $0x70] sm:$0xff]
        %v3418 = vld [vmem:[#allocation2 + $0x78] sm:$0xff]
        %v3419 = vld [vmem:[#allocation2 + $0x80] sm:$0xff]
        %v3420 = vld [vmem:[#allocation2 + $0x88] sm:$0xff]
        %v3421 = vld [vmem:[#allocation2 + $0x90] sm:$0xff]
        %v3422 = vld [vmem:[#allocation2 + $0x98] sm:$0xff]
        %v3423 = vld [vmem:[#allocation2 + $0xa0] sm:$0xff]
        %v3424 = vld [vmem:[#allocation2 + $0xa8] sm:$0xff]
        %v3425 = vld [vmem:[#allocation2 + $0xb0] sm:$0xff]
        %v3426 = vld [vmem:[#allocation2 + $0xb8] sm:$0xff]
        %v3427 = vld [vmem:[#allocation2 + $0xc0] sm:$0xff]
        %v3428 = vld [vmem:[#allocation2 + $0xc8] sm:$0xff]
        %v3429 = vld [vmem:[#allocation2 + $0xd0] sm:$0xff]
        %v3430 = vld [vmem:[#allocation2 + $0xd8] sm:$0xff]
        %v3431 = vld [vmem:[#allocation2 + $0xe0] sm:$0xff]
        %v3432 = vld [vmem:[#allocation2 + $0xe8] sm:$0xff]
        %v3433 = vld [vmem:[#allocation2 + $0xf0] sm:$0xff]
        %v3434 = vld [vmem:[#allocation2 + $0xf8] sm:$0xff]
        %v3435 = vld [vmem:[#allocation2 + $0x100] sm:$0xff]
        %v3436 = vld [vmem:[#allocation2 + $0x108] sm:$0xff]
        %v3437 = vld [vmem:[#allocation2 + $0x110] sm:$0xff]
        %v3438 = vld [vmem:[#allocation2 + $0x118] sm:$0xff]
        %v3439 = vld [vmem:[#allocation2 + $0x120] sm:$0xff]
        %v3440 = vld [vmem:[#allocation2 + $0x128] sm:$0xff]
        %v3441 = vld [vmem:[#allocation2 + $0x130] sm:$0xff]
        %v3442 = vld [vmem:[#allocation2 + $0x138] sm:$0xff]
        %3443 = vst [vmem:[%s246] sm:$0xff] %v3403
        %3444 = vst [vmem:[%s246 + $0x8] sm:$0xff] %v3404
        %3445 = vst [vmem:[%s246 + $0x10] sm:$0xff] %v3405
        %3446 = vst [vmem:[%s246 + $0x18] sm:$0xff] %v3406
        %3447 = vst [vmem:[%s246 + $0x20] sm:$0xff] %v3407
        %3448 = vst [vmem:[%s246 + $0x28] sm:$0xff] %v3408
        %3449 = vst [vmem:[%s246 + $0x30] sm:$0xff] %v3409
        %3450 = vst [vmem:[%s246 + $0x38] sm:$0xff] %v3410
        %3451 = vst [vmem:[%s246 + $0x40] sm:$0xff] %v3411
        %3452 = vst [vmem:[%s246 + $0x48] sm:$0xff] %v3412
        %3453 = vst [vmem:[%s246 + $0x50] sm:$0xff] %v3413
        %3454 = vst [vmem:[%s246 + $0x58] sm:$0xff] %v3414
        %3455 = vst [vmem:[%s246 + $0x60] sm:$0xff] %v3415
        %3456 = vst [vmem:[%s246 + $0x68] sm:$0xff] %v3416
        %3457 = vst [vmem:[%s246 + $0x70] sm:$0xff] %v3417
        %3458 = vst [vmem:[%s246 + $0x78] sm:$0xff] %v3418
        %3459 = vst [vmem:[%s246 + $0x80] sm:$0xff] %v3419
        %3460 = vst [vmem:[%s246 + $0x88] sm:$0xff] %v3420
        %3461 = vst [vmem:[%s246 + $0x90] sm:$0xff] %v3421
        %3462 = vst [vmem:[%s246 + $0x98] sm:$0xff] %v3422
        %3463 = vst [vmem:[%s246 + $0xa0] sm:$0xff] %v3423
        %3464 = vst [vmem:[%s246 + $0xa8] sm:$0xff] %v3424
        %3465 = vst [vmem:[%s246 + $0xb0] sm:$0xff] %v3425
        %3466 = vst [vmem:[%s246 + $0xb8] sm:$0xff] %v3426
        %3467 = vst [vmem:[%s246 + $0xc0] sm:$0xff] %v3427
        %3468 = vst [vmem:[%s246 + $0xc8] sm:$0xff] %v3428
        %3469 = vst [vmem:[%s246 + $0xd0] sm:$0xff] %v3429
        %3470 = vst [vmem:[%s246 + $0xd8] sm:$0xff] %v3430
        %3471 = vst [vmem:[%s246 + $0xe0] sm:$0xff] %v3431
        %3472 = vst [vmem:[%s246 + $0xe8] sm:$0xff] %v3432
        %3473 = vst [vmem:[%s246 + $0xf0] sm:$0xff] %v3433
        %3474 = vst [vmem:[%s246 + $0xf8] sm:$0xff] %v3434
        %3475 = vst [vmem:[%s246 + $0x100] sm:$0xff] %v3435
        %3476 = vst [vmem:[%s246 + $0x108] sm:$0xff] %v3436
        %3477 = vst [vmem:[%s246 + $0x110] sm:$0xff] %v3437
        %3478 = vst [vmem:[%s246 + $0x118] sm:$0xff] %v3438
        %3479 = vst [vmem:[%s246 + $0x120] sm:$0xff] %v3439
        %3480 = vst [vmem:[%s246 + $0x128] sm:$0xff] %v3440
        %3481 = vst [vmem:[%s246 + $0x130] sm:$0xff] %v3441
        %3482 = vst [vmem:[%s246 + $0x138] sm:$0xff] %v3442
        %s3483 = sand.u32 %s140, 1
        %s3484 = scalar_lea.sflag [#allocation4], %s3483
        %s3485 = sand.u32 %s140, 1
        %s3486 = smul.addr %s3485, 320
        %s3487 = scalar_lea.vmem [#allocation3], %s3486
        // Predicated region
        $region37: #{tpu_custom_call.1} parent=35 // pred_check
          %p3488 = pneg %p150
        $region38: #{tpu_custom_call.1} parent=35 // pred_check_branch
          %3490 = sbr.rel (%p3488) target = $region40
        $region39: #{tpu_custom_call.1} parent=35 // pred_region
          %s3491 = smul.u32 40, %s23
          %s3493 = ssub.s32 5120, 5120
          %3494 = vsyncadd %s3484, %s3493
          %s3495 = smul.addr %s22, 40
          %s3496 = sadd.s32 %s3491, %s3495
          %s3497 = smul.addr %s3496, 128
          %s3498 = scalar_lea.hbm %s4, %s3497
          %s3499 = sshll.u32 %s3487, 4
          %s3500 = int_to_ptr.vmem [resolvable:$true] %s3499
          %3505 = dma.vmem_to_hbm [thread:$0]  %s3500, 5120, %s3498, %s3484, 128, 128, 8
        $region40: #{tpu_custom_call.1} parent=35 // pred_fallthru
          _
      $region36: #{tpu_custom_call.1} parent=5 // pred_fallthru
        _
      %p3506 = scmp.le.s32.totalorder 2, %s13
      // Predicated region
      $region41: #{tpu_custom_call.1} parent=5 // pred_check
        %p3507 = pneg %p3506
      $region42: #{tpu_custom_call.1} parent=5 // pred_check_branch
        %3509 = sbr.rel (%p3507) target = $region44
      $region43: #{tpu_custom_call.1} parent=5 // pred_region
        %s3510 = ssub.s32 %s13, 2
        // Predicated region
        $region45: #{tpu_custom_call.1} parent=43 // pred_check
          %p3511 = pneg %p156
        $region46: #{tpu_custom_call.1} parent=43 // pred_check_branch
          %3513 = sbr.rel (%p3511) target = $region48
        $region47: #{tpu_custom_call.1} parent=43 // pred_region
          %s3514 = sand.u32 %s141, 1
          %s3515 = scalar_lea.sflag [#allocation4], %s3514
          %s3516 = sand.u32 %s141, 1
          %s3517 = smul.addr %s3516, 320
          %s3518 = scalar_lea.vmem [#allocation3], %s3517
          %3519 = dma.done %s3515, 5120
        $region48: #{tpu_custom_call.1} parent=43 // pred_fallthru
          _
      $region44: #{tpu_custom_call.1} parent=5 // pred_fallthru
        _
    $region6: #{tpu_custom_call.1} parent=1 // loop_footer
      %s17 = sadd.s32 1, %s13
    $region7: #{tpu_custom_call.1} parent=1 // loop_footer_branch
      %12 = sbr.rel target = $region3
    $region8: #{tpu_custom_call.1} parent=1 // loop_exit
      _
    %3520 = vsyncpa [#allocation4], 1
    %s3521 = scalar_lea.sflag [#allocation4], 1
    %3522 = vsyncpa %s3521, 1

</llo_original>
